<compile_context>
chip_gen: v6e
topology: v6e:2x2x1
jax: 0.10.0
libtpu: 0.0.40
codegen_flags: <defaults>
</compile_context>

<pallas_src>
import functools

import jax
import jax.numpy as jnp
from jax import lax
from jax.experimental import pallas as pl
from jax.experimental.pallas import tpu as pltpu


# ----------------------- fused LSTM stack + head kernel -----------------------

def fused_lstm_head_kernel(gates0_ref, b0_ref, wstk_ref, whh0_ref, brest_ref,
                           w1_ref, b1_ref, w2_ref, b2_ref,
                           out_ref, h_scr, c_scr, *, total_T, needs_mask):
    # gates0_ref: (Tt, B, 4H) bf16  precomputed x_t @ W_ih0 for this time block
    # b0_ref:     (1, 4H) f32       layer-0 bias
    # wstk_ref:   (L-1, 2H, 4H) bf16 stacked [W_ih; W_hh] (zero dummy if L == 1)
    # whh0_ref:   (H, 4H) bf16      layer-0 hidden-to-hidden
    # brest_ref:  (L-1, 1, 4H) f32
    # w1/b1/w2/b2: FC head params
    # out_ref:    (B, O) f32        softmax probs, written on the final grid step
    # h_scr/c_scr: (L, B, H) f32    recurrent state, persists across grid steps
    step = pl.program_id(0)
    n_steps = pl.num_programs(0)

    L, B, H = h_scr.shape
    H4 = 4 * H
    Tt = gates0_ref.shape[0]

    @pl.when(step == 0)
    def _init():
        h_scr[...] = jnp.zeros_like(h_scr)
        c_scr[...] = jnp.zeros_like(c_scr)

    # ---- hoisted grid-step-invariant reads/broadcasts (not CSE'd inside loops)
    b0_full = jnp.broadcast_to(b0_ref[...], (B, H4))
    b_up = [jnp.broadcast_to(brest_ref[l - 1], (B, H4)) for l in range(1, L)]

    def lstm_cell(gates, c_prev):
        if H4 <= 128:
            # 4H fits one vreg: a single EUP push; slices are intra-vreg selects.
            sig = jax.nn.sigmoid(gates)
            i = sig[:, 0 * H:1 * H]
            f = sig[:, 1 * H:2 * H]
            o = sig[:, 3 * H:4 * H]
        else:
            # Avoid wasting EUP work on the (tanh) g block at larger H.
            i = jax.nn.sigmoid(gates[:, 0 * H:1 * H])
            f = jax.nn.sigmoid(gates[:, 1 * H:2 * H])
            o = jax.nn.sigmoid(gates[:, 3 * H:4 * H])
        g = jnp.tanh(gates[:, 2 * H:3 * H])
        c_new = f * c_prev + i * g
        h_new = o * jnp.tanh(c_new)
        return h_new, c_new

    def timestep(tt_idx, carry):
        hs = list(carry[:L])
        cs = list(carry[L:])
        if needs_mask:
            valid = (step * Tt + tt_idx) < total_T

        # ---- layer 0: input projection hoisted to XLA; only h @ W_hh here
        gates = (gates0_ref[tt_idx].astype(jnp.float32) + b0_full
                 + jnp.dot(hs[0].astype(jnp.bfloat16), whh0_ref[...],
                           preferred_element_type=jnp.float32))
        h_new, c_new = lstm_cell(gates, cs[0])
        if needs_mask:
            h_new = jnp.where(valid, h_new, hs[0])
            c_new = jnp.where(valid, c_new, cs[0])
        hs[0], cs[0] = h_new, c_new

        # ---- layers 1..L-1: one fused matmul per layer (stacked [W_ih; W_hh])
        x_l = hs[0]
        for l in range(1, L):
            hcat = jnp.concatenate([x_l, hs[l]], axis=-1).astype(jnp.bfloat16)
            gates = jnp.dot(hcat, wstk_ref[l - 1],
                            preferred_element_type=jnp.float32) + b_up[l - 1]
            h_new, c_new = lstm_cell(gates, cs[l])
            if needs_mask:
                h_new = jnp.where(valid, h_new, hs[l])
                c_new = jnp.where(valid, c_new, cs[l])
            hs[l], cs[l] = h_new, c_new
            x_l = hs[l]
        return tuple(hs) + tuple(cs)

    # State in registers across the whole time block.
    init_carry = (tuple(h_scr[l] for l in range(L))
                  + tuple(c_scr[l] for l in range(L)))
    carry = lax.fori_loop(0, Tt, timestep, init_carry, unroll=min(Tt, 8))

    # Single state write-back per grid step.
    for l in range(L):
        h_scr[l] = carry[l]
        c_scr[l] = carry[L + l]

    # ---- FC head + softmax fused in: consumes the register-resident top-layer h
    @pl.when(step == n_steps - 1)
    def _head():
        h_top = carry[L - 1]                                      # (B, H) f32
        z1 = jnp.dot(h_top.astype(jnp.bfloat16), w1_ref[...],
                     preferred_element_type=jnp.float32) + b1_ref[...]
        z1 = jnp.maximum(z1, 0.0)
        z2 = jnp.dot(z1.astype(jnp.bfloat16), w2_ref[...],
                     preferred_element_type=jnp.float32) + b2_ref[...]
        z2 = z2 - jnp.max(z2, axis=-1, keepdims=True)
        e = jnp.exp(z2)
        out_ref[...] = e / jnp.sum(e, axis=-1, keepdims=True)


def run_fused_lstm(gates0, b0, w_stacked, whh0, b_rest, w1, b1, w2, b2,
                   *, num_layers, time_block=32):
    T, B, H4 = gates0.shape
    H = H4 // 4
    L = num_layers
    lm1 = w_stacked.shape[0]
    out_dim = w2.shape[1]

    # Time block: pad + mask instead of degrading to tt=1 for awkward T.
    tt = min(T, time_block)
    n_steps = pl.cdiv(T, tt)
    T_pad = n_steps * tt
    needs_mask = (T_pad != T)
    if needs_mask:
        gates0 = jnp.concatenate(
            [gates0, jnp.zeros((T_pad - T, B, H4), gates0.dtype)], axis=0)

    # Rough VMEM footprint; raise the scoped limit only when actually needed.
    nbytes = lambda a: a.size * a.dtype.itemsize
    weight_bytes = sum(nbytes(a) for a in (b0, w_stacked, whh0, b_rest, w1, b1, w2, b2))
    est = (2 * tt * B * H4 * gates0.dtype.itemsize    # double-buffered gates0 stream
           + 2 * weight_bytes                         # grid-invariant blocks (dbl-buffered)
           + 2 * L * B * H * 4                        # h/c scratch
           + 2 * B * out_dim * 4)
    vmem_limit = int(min(est * 5 // 4, 100 << 20)) if est > (16 << 20) else None

    kernel = functools.partial(fused_lstm_head_kernel,
                               total_T=T, needs_mask=needs_mask)

    c2 = lambda s: (0, 0)
    c3 = lambda s: (0, 0, 0)

    return pl.pallas_call(
        kernel,
        out_shape=jax.ShapeDtypeStruct((B, out_dim), jnp.float32),
        grid_spec=pltpu.PrefetchScalarGridSpec(
            num_scalar_prefetch=0,
            grid=(n_steps,),
            in_specs=[
                pl.BlockSpec((tt, B, H4), lambda s: (s, 0, 0)),   # gates0 time block
                pl.BlockSpec((1, H4), c2),                        # b0
                pl.BlockSpec((lm1, 2 * H, H4), c3),               # stacked [W_ih;W_hh]
                pl.BlockSpec((H, H4), c2),                        # layer-0 W_hh
                pl.BlockSpec((lm1, 1, H4), c3),                   # bias layers 1..
                pl.BlockSpec((H, w1.shape[1]), c2),               # head W1
                pl.BlockSpec((1, w1.shape[1]), c2),               # head b1
                pl.BlockSpec((w1.shape[1], out_dim), c2),         # head W2
                pl.BlockSpec((1, out_dim), c2),                   # head b2
            ],
            out_specs=pl.BlockSpec((B, out_dim), c2),
            scratch_shapes=[
                pltpu.VMEM((L, B, H), jnp.float32),               # h state
                pltpu.VMEM((L, B, H), jnp.float32),               # c state
            ],
        ),
        compiler_params=pltpu.CompilerParams(
            dimension_semantics=("arbitrary",),    # time recurrence is sequential
            vmem_limit_bytes=vmem_limit,
        ),
    )(gates0, b0, w_stacked, whh0, b_rest, w1, b1, w2, b2)


# --------------------------------- model glue ---------------------------------

def init_params(key, vocab_size, input_dim, output_dim, hidden_dim, num_layers):
    keys = iter(jax.random.split(key, 1 + 4 * num_layers + 4))

    def uniform(shape, scale):
        return jax.random.uniform(next(keys), shape, jnp.float32, -scale, scale)

    H = hidden_dim
    emb = jax.random.normal(next(keys), (vocab_size, input_dim), jnp.float32)

    s = 1.0 / float(hidden_dim) ** 0.5
    w_ih, w_hh, bias = [], [], []
    for layer in range(num_layers):
        in_dim = input_dim if layer == 0 else hidden_dim
        w_ih.append(uniform((in_dim, 4 * H), s))          # stored transposed vs PyTorch
        w_hh.append(uniform((hidden_dim, 4 * H), s))
        bias.append(uniform((1, 4 * H), s) + uniform((1, 4 * H), s))   # b_ih + b_hh

    if num_layers > 1:
        w_stacked = jnp.stack(
            [jnp.concatenate([w_ih[l], w_hh[l]], axis=0)
             for l in range(1, num_layers)]).astype(jnp.bfloat16)      # (L-1, 2H, 4H)
        b_rest = jnp.stack(bias[1:])                                   # (L-1, 1, 4H)
    else:
        w_stacked = jnp.zeros((1, 2 * H, 4 * H), jnp.bfloat16)         # unused dummy
        b_rest = jnp.zeros((1, 1, 4 * H), jnp.float32)

    s2 = 1.0 / float(128) ** 0.5
    return {
        "embedding": emb,
        "w_ih0": w_ih[0].astype(jnp.bfloat16),                         # (D, 4H)
        "b0": bias[0],                                                 # (1, 4H)
        "whh0": w_hh[0].astype(jnp.bfloat16),                          # (H, 4H)
        "w_stacked": w_stacked,
        "b_rest": b_rest,
        "fc": {
            "w1": uniform((H, 128), s).astype(jnp.bfloat16),
            "b1": uniform((1, 128), s),
            "w2": uniform((128, output_dim), s2).astype(jnp.bfloat16),
            "b2": uniform((1, output_dim), s2),
        },
    }


def lstm_model_forward(tokens, params, num_layers):
    # TODO(synk): embedding gather (data-dependent row gather) stays in plain JAX.
    emb = jnp.take(params["embedding"], tokens, axis=0)          # (B, T, D)
    x = jnp.transpose(emb, (1, 0, 2)).astype(jnp.float32)        # time-major (T, B, D)
    T, B, D = x.shape
    H4 = params["w_ih0"].shape[1]
    # Hoisted, time-independent layer-0 input projection as one big matmul,
    # streamed to the kernel as bf16 (halves the only per-step HBM traffic).
    gates0 = jnp.dot(x.reshape(T * B, D).astype(jnp.bfloat16), params["w_ih0"],
                     preferred_element_type=jnp.float32).astype(jnp.bfloat16)
    gates0 = gates0.reshape(T, B, H4)
    fc = params["fc"]
    return run_fused_lstm(gates0, params["b0"], params["w_stacked"], params["whh0"],
                          params["b_rest"], fc["w1"], fc["b1"], fc["w2"], fc["b2"],
                          num_layers=num_layers)


def reference_forward(tokens, params, num_layers):
    """Pure-JAX reference mirroring the kernel math (for correctness check)."""
    emb = jnp.take(params["embedding"], tokens, axis=0)
    x = jnp.transpose(emb, (1, 0, 2)).astype(jnp.float32)
    T, B, D = x.shape
    H = params["whh0"].shape[0]
    L = num_layers
    g0 = jnp.dot(x.reshape(T * B, D).astype(jnp.bfloat16), params["w_ih0"],
                 preferred_element_type=jnp.float32).astype(jnp.bfloat16)
    g0 = g0.reshape(T, B, 4 * H)

    h = [jnp.zeros((B, H), jnp.float32) for _ in range(L)]
    c = [jnp.zeros((B, H), jnp.float32) for _ in range(L)]

    def cell(gates, c_prev):
        i = jax.nn.sigmoid(gates[:, 0 * H:1 * H])
        f = jax.nn.sigmoid(gates[:, 1 * H:2 * H])
        g = jnp.tanh(gates[:, 2 * H:3 * H])
        o = jax.nn.sigmoid(gates[:, 3 * H:4 * H])
        c_new = f * c_prev + i * g
        return o * jnp.tanh(c_new), c_new

    for t in range(T):
        gates = (g0[t].astype(jnp.float32) + params["b0"]
                 + jnp.dot(h[0].astype(jnp.bfloat16), params["whh0"],
                           preferred_element_type=jnp.float32))
        h[0], c[0] = cell(gates, c[0])
        x_l = h[0]
        for l in range(1, L):
            hcat = jnp.concatenate([x_l, h[l]], axis=-1).astype(jnp.bfloat16)
            gates = (jnp.dot(hcat, params["w_stacked"][l - 1],
                             preferred_element_type=jnp.float32)
                     + params["b_rest"][l - 1])
            h[l], c[l] = cell(gates, c[l])
            x_l = h[l]

    fc = params["fc"]
    z1 = jnp.maximum(jnp.dot(h[L - 1].astype(jnp.bfloat16), fc["w1"],
                             preferred_element_type=jnp.float32) + fc["b1"], 0.0)
    z2 = jnp.dot(z1.astype(jnp.bfloat16), fc["w2"],
                 preferred_element_type=jnp.float32) + fc["b2"]
    return jax.nn.softmax(z2, axis=-1)


if __name__ == "__main__":
    vocab_size, input_dim, output_dim, hidden_dim, num_layers = 16, 32, 8, 32, 3
    B, T = 2, 8

    key = jax.random.PRNGKey(0)
    k_params, k_tokens = jax.random.split(key)
    params = init_params(k_params, vocab_size, input_dim, output_dim,
                         hidden_dim, num_layers)
    tokens = jax.random.randint(k_tokens, (B, T), 0, vocab_size, dtype=jnp.int32)

    fwd = jax.jit(lstm_model_forward, static_argnums=2)
    out = jax.block_until_ready(fwd(tokens, params, num_layers))

    assert out.shape == (B, output_dim)
    assert jnp.allclose(jnp.sum(out, axis=-1), 1.0, atol=1e-5)

    ref_fn = jax.jit(reference_forward, static_argnums=2)
    ref = jax.block_until_ready(ref_fn(tokens, params, num_layers))
    assert jnp.allclose(out, ref, atol=1e-2), float(jnp.max(jnp.abs(out - ref)))

    print("KERNEL_OK")
</pallas_src>

<mosaic_0001>
module attributes {stable_mosaic.version = 11 : i64} {
  func.func @fused_lstm_head_kernel(%arg0: i32, %arg1: memref<8x2x128xbf16, #tpu.memory_space<vmem>>, %arg2: memref<1x128xf32, #tpu.memory_space<vmem>>, %arg3: memref<2x64x128xbf16, #tpu.memory_space<vmem>>, %arg4: memref<32x128xbf16, #tpu.memory_space<vmem>>, %arg5: memref<2x1x128xf32, #tpu.memory_space<vmem>>, %arg6: memref<32x128xbf16, #tpu.memory_space<vmem>>, %arg7: memref<1x128xf32, #tpu.memory_space<vmem>>, %arg8: memref<128x8xbf16, #tpu.memory_space<vmem>>, %arg9: memref<1x8xf32, #tpu.memory_space<vmem>>, %arg10: memref<2x8xf32, #tpu.memory_space<vmem>>, %arg11: memref<3x2x32xf32, #tpu.memory_space<vmem>>, %arg12: memref<3x2x32xf32, #tpu.memory_space<vmem>>) attributes {dimension_semantics = [#tpu.dimension_semantics<arbitrary>], iteration_bounds = array<i64: 1>, scalar_prefetch = 0 : i64, scratch_operands = 2 : i64, tpu.core_type = #tpu.core_type<tc>, window_params = [{transform_indices = @transform_0, window_bounds = array<i64: 8, 2, 128>}, {pipeline_mode = #tpu.pipeline_mode<synchronous>, transform_indices = @transform_1, window_bounds = array<i64: 1, 128>}, {pipeline_mode = #tpu.pipeline_mode<synchronous>, transform_indices = @transform_2, window_bounds = array<i64: 2, 64, 128>}, {pipeline_mode = #tpu.pipeline_mode<synchronous>, transform_indices = @transform_3, window_bounds = array<i64: 32, 128>}, {pipeline_mode = #tpu.pipeline_mode<synchronous>, transform_indices = @transform_4, window_bounds = array<i64: 2, 1, 128>}, {pipeline_mode = #tpu.pipeline_mode<synchronous>, transform_indices = @transform_5, window_bounds = array<i64: 32, 128>}, {pipeline_mode = #tpu.pipeline_mode<synchronous>, transform_indices = @transform_6, window_bounds = array<i64: 1, 128>}, {pipeline_mode = #tpu.pipeline_mode<synchronous>, transform_indices = @transform_7, window_bounds = array<i64: 128, 8>}, {pipeline_mode = #tpu.pipeline_mode<synchronous>, transform_indices = @transform_8, window_bounds = array<i64: 1, 8>}, {pipeline_mode = #tpu.pipeline_mode<synchronous>, transform_indices = @transform_9, window_bounds = array<i64: 2, 8>}]} {
    %c0_i32 = arith.constant 0 : i32
    %0 = arith.cmpi eq, %arg0, %c0_i32 : i32
    %1 = arith.extui %0 : i1 to i32
    %c0_i32_0 = arith.constant 0 : i32
    %2 = arith.cmpi ne, %1, %c0_i32_0 : i32
    scf.if %2 {
      %cst_172 = arith.constant 0.000000e+00 : f32
      %575 = vector.broadcast %cst_172 : f32 to vector<3x2x32xf32>
      %c0_173 = arith.constant 0 : index
      %c0_174 = arith.constant 0 : index
      %c0_175 = arith.constant 0 : index
      %576 = vector.load %arg11[%c0_173, %c0_174, %c0_175] : memref<3x2x32xf32, #tpu.memory_space<vmem>>, vector<3x2x32xf32>
      tpu.vector_store %arg11[%c0_173, %c0_174, %c0_175], %575 {strides = array<i32>} : memref<3x2x32xf32, #tpu.memory_space<vmem>>, vector<3x2x32xf32>,
      %cst_176 = arith.constant 0.000000e+00 : f32
      %577 = vector.broadcast %cst_176 : f32 to vector<3x2x32xf32>
      %c0_177 = arith.constant 0 : index
      %c0_178 = arith.constant 0 : index
      %c0_179 = arith.constant 0 : index
      %578 = vector.load %arg12[%c0_177, %c0_178, %c0_179] : memref<3x2x32xf32, #tpu.memory_space<vmem>>, vector<3x2x32xf32>
      tpu.vector_store %arg12[%c0_177, %c0_178, %c0_179], %577 {strides = array<i32>} : memref<3x2x32xf32, #tpu.memory_space<vmem>>, vector<3x2x32xf32>,
    } else {
    }
    %c0 = arith.constant 0 : index
    %c0_1 = arith.constant 0 : index
    %3 = vector.load %arg2[%c0, %c0_1] : memref<1x128xf32, #tpu.memory_space<vmem>>, vector<1x128xf32>
    %4 = vector.shape_cast %3 : vector<1x128xf32> to vector<1x128xf32>
    %5 = vector.broadcast %4 : vector<1x128xf32> to vector<2x128xf32>
    %c0_2 = arith.constant 0 : index
    %c0_3 = arith.constant 0 : index
    %c0_4 = arith.constant 0 : index
    %6 = vector.load %arg5[%c0_2, %c0_3, %c0_4] : memref<2x1x128xf32, #tpu.memory_space<vmem>>, vector<1x1x128xf32>
    %7 = vector.shape_cast %6 : vector<1x1x128xf32> to vector<1x128xf32>
    %8 = vector.shape_cast %7 : vector<1x128xf32> to vector<1x128xf32>
    %9 = vector.broadcast %8 : vector<1x128xf32> to vector<2x128xf32>
    %c1 = arith.constant 1 : index
    %c0_5 = arith.constant 0 : index
    %c0_6 = arith.constant 0 : index
    %10 = vector.load %arg5[%c1, %c0_5, %c0_6] : memref<2x1x128xf32, #tpu.memory_space<vmem>>, vector<1x1x128xf32>
    %11 = vector.shape_cast %10 : vector<1x1x128xf32> to vector<1x128xf32>
    %12 = vector.shape_cast %11 : vector<1x128xf32> to vector<1x128xf32>
    %13 = vector.broadcast %12 : vector<1x128xf32> to vector<2x128xf32>
    %c0_7 = arith.constant 0 : index
    %c0_8 = arith.constant 0 : index
    %c0_9 = arith.constant 0 : index
    %14 = vector.load %arg11[%c0_7, %c0_8, %c0_9] : memref<3x2x32xf32, #tpu.memory_space<vmem>>, vector<1x2x32xf32>
    %15 = vector.shape_cast %14 : vector<1x2x32xf32> to vector<2x32xf32>
    %c1_10 = arith.constant 1 : index
    %c0_11 = arith.constant 0 : index
    %c0_12 = arith.constant 0 : index
    %16 = vector.load %arg11[%c1_10, %c0_11, %c0_12] : memref<3x2x32xf32, #tpu.memory_space<vmem>>, vector<1x2x32xf32>
    %17 = vector.shape_cast %16 : vector<1x2x32xf32> to vector<2x32xf32>
    %c2 = arith.constant 2 : index
    %c0_13 = arith.constant 0 : index
    %c0_14 = arith.constant 0 : index
    %18 = vector.load %arg11[%c2, %c0_13, %c0_14] : memref<3x2x32xf32, #tpu.memory_space<vmem>>, vector<1x2x32xf32>
    %19 = vector.shape_cast %18 : vector<1x2x32xf32> to vector<2x32xf32>
    %c0_15 = arith.constant 0 : index
    %c0_16 = arith.constant 0 : index
    %c0_17 = arith.constant 0 : index
    %20 = vector.load %arg12[%c0_15, %c0_16, %c0_17] : memref<3x2x32xf32, #tpu.memory_space<vmem>>, vector<1x2x32xf32>
    %21 = vector.shape_cast %20 : vector<1x2x32xf32> to vector<2x32xf32>
    %c1_18 = arith.constant 1 : index
    %c0_19 = arith.constant 0 : index
    %c0_20 = arith.constant 0 : index
    %22 = vector.load %arg12[%c1_18, %c0_19, %c0_20] : memref<3x2x32xf32, #tpu.memory_space<vmem>>, vector<1x2x32xf32>
    %23 = vector.shape_cast %22 : vector<1x2x32xf32> to vector<2x32xf32>
    %c2_21 = arith.constant 2 : index
    %c0_22 = arith.constant 0 : index
    %c0_23 = arith.constant 0 : index
    %24 = vector.load %arg12[%c2_21, %c0_22, %c0_23] : memref<3x2x32xf32, #tpu.memory_space<vmem>>, vector<1x2x32xf32>
    %25 = vector.shape_cast %24 : vector<1x2x32xf32> to vector<2x32xf32>
    %c0_i32_24 = arith.constant 0 : i32
    %26 = arith.index_cast %c0_i32_24 : i32 to index
    %c0_25 = arith.constant 0 : index
    %c0_26 = arith.constant 0 : index
    %27 = vector.load %arg1[%26, %c0_25, %c0_26] : memref<8x2x128xbf16, #tpu.memory_space<vmem>>, vector<1x2x128xbf16>
    %28 = vector.shape_cast %27 : vector<1x2x128xbf16> to vector<2x128xbf16>
    %29 = arith.extf %28 : vector<2x128xbf16> to vector<2x128xf32>
    %30 = arith.addf %29, %5 : vector<2x128xf32>
    %31 = arith.truncf %15 : vector<2x32xf32> to vector<2x32xbf16>
    %c0_27 = arith.constant 0 : index
    %c0_28 = arith.constant 0 : index
    %32 = vector.load %arg4[%c0_27, %c0_28] : memref<32x128xbf16, #tpu.memory_space<vmem>>, vector<32x128xbf16>
    %cst = arith.constant dense<0.000000e+00> : vector<2x128xf32>
    %33 = tpu.matmul %31, %32, %cst {dimension_numbers = #tpu.dot_dimension_numbers<[1], [0], [0], [1], [0, 0, 1, 1], [], []>} : vector<2x32xbf16>, vector<32x128xbf16>, vector<2x128xf32> -> vector<2x128xf32>
    %34 = arith.addf %30, %33 : vector<2x128xf32>
    %35 = arith.negf %34 : vector<2x128xf32>
    %36 = math.exp %35 : vector<2x128xf32>
    %cst_29 = arith.constant 1.000000e+00 : f32
    %37 = vector.broadcast %cst_29 : f32 to vector<2x128xf32>
    %38 = arith.addf %37, %36 : vector<2x128xf32>
    %39 = arith.divf %37, %38 : vector<2x128xf32>
    %40 = vector.extract_strided_slice %39 {offsets = [0, 0], sizes = [2, 32], strides = [1, 1]} : vector<2x128xf32> to vector<2x32xf32>
    %41 = vector.extract_strided_slice %39 {offsets = [0, 32], sizes = [2, 32], strides = [1, 1]} : vector<2x128xf32> to vector<2x32xf32>
    %42 = vector.extract_strided_slice %39 {offsets = [0, 96], sizes = [2, 32], strides = [1, 1]} : vector<2x128xf32> to vector<2x32xf32>
    %43 = vector.extract_strided_slice %34 {offsets = [0, 64], sizes = [2, 32], strides = [1, 1]} : vector<2x128xf32> to vector<2x32xf32>
    %44 = math.tanh %43 : vector<2x32xf32>
    %45 = arith.mulf %41, %21 : vector<2x32xf32>
    %46 = arith.mulf %40, %44 : vector<2x32xf32>
    %47 = arith.addf %45, %46 : vector<2x32xf32>
    %48 = math.tanh %47 : vector<2x32xf32>
    %49 = arith.mulf %42, %48 : vector<2x32xf32>
    %50 = tpu.concatenate %49, %17 in 1 : vector<2x32xf32>, vector<2x32xf32> -> vector<2x64xf32>
    %51 = arith.truncf %50 : vector<2x64xf32> to vector<2x64xbf16>
    %c0_30 = arith.constant 0 : index
    %c0_31 = arith.constant 0 : index
    %c0_32 = arith.constant 0 : index
    %52 = vector.load %arg3[%c0_30, %c0_31, %c0_32] : memref<2x64x128xbf16, #tpu.memory_space<vmem>>, vector<1x64x128xbf16>
    %53 = vector.shape_cast %52 : vector<1x64x128xbf16> to vector<64x128xbf16>
    %cst_33 = arith.constant dense<0.000000e+00> : vector<2x128xf32>
    %54 = tpu.matmul %51, %53, %cst_33 {dimension_numbers = #tpu.dot_dimension_numbers<[1], [0], [0], [1], [0, 0, 1, 1], [], []>} : vector<2x64xbf16>, vector<64x128xbf16>, vector<2x128xf32> -> vector<2x128xf32>
    %55 = arith.addf %54, %9 : vector<2x128xf32>
    %56 = arith.negf %55 : vector<2x128xf32>
    %57 = math.exp %56 : vector<2x128xf32>
    %cst_34 = arith.constant 1.000000e+00 : f32
    %58 = vector.broadcast %cst_34 : f32 to vector<2x128xf32>
    %59 = arith.addf %58, %57 : vector<2x128xf32>
    %60 = arith.divf %58, %59 : vector<2x128xf32>
    %61 = vector.extract_strided_slice %60 {offsets = [0, 0], sizes = [2, 32], strides = [1, 1]} : vector<2x128xf32> to vector<2x32xf32>
    %62 = vector.extract_strided_slice %60 {offsets = [0, 32], sizes = [2, 32], strides = [1, 1]} : vector<2x128xf32> to vector<2x32xf32>
    %63 = vector.extract_strided_slice %60 {offsets = [0, 96], sizes = [2, 32], strides = [1, 1]} : vector<2x128xf32> to vector<2x32xf32>
    %64 = vector.extract_strided_slice %55 {offsets = [0, 64], sizes = [2, 32], strides = [1, 1]} : vector<2x128xf32> to vector<2x32xf32>
    %65 = math.tanh %64 : vector<2x32xf32>
    %66 = arith.mulf %62, %23 : vector<2x32xf32>
    %67 = arith.mulf %61, %65 : vector<2x32xf32>
    %68 = arith.addf %66, %67 : vector<2x32xf32>
    %69 = math.tanh %68 : vector<2x32xf32>
    %70 = arith.mulf %63, %69 : vector<2x32xf32>
    %71 = tpu.concatenate %70, %19 in 1 : vector<2x32xf32>, vector<2x32xf32> -> vector<2x64xf32>
    %72 = arith.truncf %71 : vector<2x64xf32> to vector<2x64xbf16>
    %c1_35 = arith.constant 1 : index
    %c0_36 = arith.constant 0 : index
    %c0_37 = arith.constant 0 : index
    %73 = vector.load %arg3[%c1_35, %c0_36, %c0_37] : memref<2x64x128xbf16, #tpu.memory_space<vmem>>, vector<1x64x128xbf16>
    %74 = vector.shape_cast %73 : vector<1x64x128xbf16> to vector<64x128xbf16>
    %cst_38 = arith.constant dense<0.000000e+00> : vector<2x128xf32>
    %75 = tpu.matmul %72, %74, %cst_38 {dimension_numbers = #tpu.dot_dimension_numbers<[1], [0], [0], [1], [0, 0, 1, 1], [], []>} : vector<2x64xbf16>, vector<64x128xbf16>, vector<2x128xf32> -> vector<2x128xf32>
    %76 = arith.addf %75, %13 : vector<2x128xf32>
    %77 = arith.negf %76 : vector<2x128xf32>
    %78 = math.exp %77 : vector<2x128xf32>
    %cst_39 = arith.constant 1.000000e+00 : f32
    %79 = vector.broadcast %cst_39 : f32 to vector<2x128xf32>
    %80 = arith.addf %79, %78 : vector<2x128xf32>
    %81 = arith.divf %79, %80 : vector<2x128xf32>
    %82 = vector.extract_strided_slice %81 {offsets = [0, 0], sizes = [2, 32], strides = [1, 1]} : vector<2x128xf32> to vector<2x32xf32>
    %83 = vector.extract_strided_slice %81 {offsets = [0, 32], sizes = [2, 32], strides = [1, 1]} : vector<2x128xf32> to vector<2x32xf32>
    %84 = vector.extract_strided_slice %81 {offsets = [0, 96], sizes = [2, 32], strides = [1, 1]} : vector<2x128xf32> to vector<2x32xf32>
    %85 = vector.extract_strided_slice %76 {offsets = [0, 64], sizes = [2, 32], strides = [1, 1]} : vector<2x128xf32> to vector<2x32xf32>
    %86 = math.tanh %85 : vector<2x32xf32>
    %87 = arith.mulf %83, %25 : vector<2x32xf32>
    %88 = arith.mulf %82, %86 : vector<2x32xf32>
    %89 = arith.addf %87, %88 : vector<2x32xf32>
    %90 = math.tanh %89 : vector<2x32xf32>
    %91 = arith.mulf %84, %90 : vector<2x32xf32>
    %c1_i32 = arith.constant 1 : i32
    %92 = arith.index_cast %c1_i32 : i32 to index
    %c0_40 = arith.constant 0 : index
    %c0_41 = arith.constant 0 : index
    %93 = vector.load %arg1[%92, %c0_40, %c0_41] : memref<8x2x128xbf16, #tpu.memory_space<vmem>>, vector<1x2x128xbf16>
    %94 = vector.shape_cast %93 : vector<1x2x128xbf16> to vector<2x128xbf16>
    %95 = arith.extf %94 : vector<2x128xbf16> to vector<2x128xf32>
    %96 = arith.addf %95, %5 : vector<2x128xf32>
    %97 = arith.truncf %49 : vector<2x32xf32> to vector<2x32xbf16>
    %c0_42 = arith.constant 0 : index
    %c0_43 = arith.constant 0 : index
    %98 = vector.load %arg4[%c0_42, %c0_43] : memref<32x128xbf16, #tpu.memory_space<vmem>>, vector<32x128xbf16>
    %cst_44 = arith.constant dense<0.000000e+00> : vector<2x128xf32>
    %99 = tpu.matmul %97, %98, %cst_44 {dimension_numbers = #tpu.dot_dimension_numbers<[1], [0], [0], [1], [0, 0, 1, 1], [], []>} : vector<2x32xbf16>, vector<32x128xbf16>, vector<2x128xf32> -> vector<2x128xf32>
    %100 = arith.addf %96, %99 : vector<2x128xf32>
    %101 = arith.negf %100 : vector<2x128xf32>
    %102 = math.exp %101 : vector<2x128xf32>
    %cst_45 = arith.constant 1.000000e+00 : f32
    %103 = vector.broadcast %cst_45 : f32 to vector<2x128xf32>
    %104 = arith.addf %103, %102 : vector<2x128xf32>
    %105 = arith.divf %103, %104 : vector<2x128xf32>
    %106 = vector.extract_strided_slice %105 {offsets = [0, 0], sizes = [2, 32], strides = [1, 1]} : vector<2x128xf32> to vector<2x32xf32>
    %107 = vector.extract_strided_slice %105 {offsets = [0, 32], sizes = [2, 32], strides = [1, 1]} : vector<2x128xf32> to vector<2x32xf32>
    %108 = vector.extract_strided_slice %105 {offsets = [0, 96], sizes = [2, 32], strides = [1, 1]} : vector<2x128xf32> to vector<2x32xf32>
    %109 = vector.extract_strided_slice %100 {offsets = [0, 64], sizes = [2, 32], strides = [1, 1]} : vector<2x128xf32> to vector<2x32xf32>
    %110 = math.tanh %109 : vector<2x32xf32>
    %111 = arith.mulf %107, %47 : vector<2x32xf32>
    %112 = arith.mulf %106, %110 : vector<2x32xf32>
    %113 = arith.addf %111, %112 : vector<2x32xf32>
    %114 = math.tanh %113 : vector<2x32xf32>
    %115 = arith.mulf %108, %114 : vector<2x32xf32>
    %116 = tpu.concatenate %115, %70 in 1 : vector<2x32xf32>, vector<2x32xf32> -> vector<2x64xf32>
    %117 = arith.truncf %116 : vector<2x64xf32> to vector<2x64xbf16>
    %c0_46 = arith.constant 0 : index
    %c0_47 = arith.constant 0 : index
    %c0_48 = arith.constant 0 : index
    %118 = vector.load %arg3[%c0_46, %c0_47, %c0_48] : memref<2x64x128xbf16, #tpu.memory_space<vmem>>, vector<1x64x128xbf16>
    %119 = vector.shape_cast %118 : vector<1x64x128xbf16> to vector<64x128xbf16>
    %cst_49 = arith.constant dense<0.000000e+00> : vector<2x128xf32>
    %120 = tpu.matmul %117, %119, %cst_49 {dimension_numbers = #tpu.dot_dimension_numbers<[1], [0], [0], [1], [0, 0, 1, 1], [], []>} : vector<2x64xbf16>, vector<64x128xbf16>, vector<2x128xf32> -> vector<2x128xf32>
    %121 = arith.addf %120, %9 : vector<2x128xf32>
    %122 = arith.negf %121 : vector<2x128xf32>
    %123 = math.exp %122 : vector<2x128xf32>
    %cst_50 = arith.constant 1.000000e+00 : f32
    %124 = vector.broadcast %cst_50 : f32 to vector<2x128xf32>
    %125 = arith.addf %124, %123 : vector<2x128xf32>
    %126 = arith.divf %124, %125 : vector<2x128xf32>
    %127 = vector.extract_strided_slice %126 {offsets = [0, 0], sizes = [2, 32], strides = [1, 1]} : vector<2x128xf32> to vector<2x32xf32>
    %128 = vector.extract_strided_slice %126 {offsets = [0, 32], sizes = [2, 32], strides = [1, 1]} : vector<2x128xf32> to vector<2x32xf32>
    %129 = vector.extract_strided_slice %126 {offsets = [0, 96], sizes = [2, 32], strides = [1, 1]} : vector<2x128xf32> to vector<2x32xf32>
    %130 = vector.extract_strided_slice %121 {offsets = [0, 64], sizes = [2, 32], strides = [1, 1]} : vector<2x128xf32> to vector<2x32xf32>
    %131 = math.tanh %130 : vector<2x32xf32>
    %132 = arith.mulf %128, %68 : vector<2x32xf32>
    %133 = arith.mulf %127, %131 : vector<2x32xf32>
    %134 = arith.addf %132, %133 : vector<2x32xf32>
    %135 = math.tanh %134 : vector<2x32xf32>
    %136 = arith.mulf %129, %135 : vector<2x32xf32>
    %137 = tpu.concatenate %136, %91 in 1 : vector<2x32xf32>, vector<2x32xf32> -> vector<2x64xf32>
    %138 = arith.truncf %137 : vector<2x64xf32> to vector<2x64xbf16>
    %c1_51 = arith.constant 1 : index
    %c0_52 = arith.constant 0 : index
    %c0_53 = arith.constant 0 : index
    %139 = vector.load %arg3[%c1_51, %c0_52, %c0_53] : memref<2x64x128xbf16, #tpu.memory_space<vmem>>, vector<1x64x128xbf16>
    %140 = vector.shape_cast %139 : vector<1x64x128xbf16> to vector<64x128xbf16>
    %cst_54 = arith.constant dense<0.000000e+00> : vector<2x128xf32>
    %141 = tpu.matmul %138, %140, %cst_54 {dimension_numbers = #tpu.dot_dimension_numbers<[1], [0], [0], [1], [0, 0, 1, 1], [], []>} : vector<2x64xbf16>, vector<64x128xbf16>, vector<2x128xf32> -> vector<2x128xf32>
    %142 = arith.addf %141, %13 : vector<2x128xf32>
    %143 = arith.negf %142 : vector<2x128xf32>
    %144 = math.exp %143 : vector<2x128xf32>
    %cst_55 = arith.constant 1.000000e+00 : f32
    %145 = vector.broadcast %cst_55 : f32 to vector<2x128xf32>
    %146 = arith.addf %145, %144 : vector<2x128xf32>
    %147 = arith.divf %145, %146 : vector<2x128xf32>
    %148 = vector.extract_strided_slice %147 {offsets = [0, 0], sizes = [2, 32], strides = [1, 1]} : vector<2x128xf32> to vector<2x32xf32>
    %149 = vector.extract_strided_slice %147 {offsets = [0, 32], sizes = [2, 32], strides = [1, 1]} : vector<2x128xf32> to vector<2x32xf32>
    %150 = vector.extract_strided_slice %147 {offsets = [0, 96], sizes = [2, 32], strides = [1, 1]} : vector<2x128xf32> to vector<2x32xf32>
    %151 = vector.extract_strided_slice %142 {offsets = [0, 64], sizes = [2, 32], strides = [1, 1]} : vector<2x128xf32> to vector<2x32xf32>
    %152 = math.tanh %151 : vector<2x32xf32>
    %153 = arith.mulf %149, %89 : vector<2x32xf32>
    %154 = arith.mulf %148, %152 : vector<2x32xf32>
    %155 = arith.addf %153, %154 : vector<2x32xf32>
    %156 = math.tanh %155 : vector<2x32xf32>
    %157 = arith.mulf %150, %156 : vector<2x32xf32>
    %c2_i32 = arith.constant 2 : i32
    %158 = arith.index_cast %c2_i32 : i32 to index
    %c0_56 = arith.constant 0 : index
    %c0_57 = arith.constant 0 : index
    %159 = vector.load %arg1[%158, %c0_56, %c0_57] : memref<8x2x128xbf16, #tpu.memory_space<vmem>>, vector<1x2x128xbf16>
    %160 = vector.shape_cast %159 : vector<1x2x128xbf16> to vector<2x128xbf16>
    %161 = arith.extf %160 : vector<2x128xbf16> to vector<2x128xf32>
    %162 = arith.addf %161, %5 : vector<2x128xf32>
    %163 = arith.truncf %115 : vector<2x32xf32> to vector<2x32xbf16>
    %c0_58 = arith.constant 0 : index
    %c0_59 = arith.constant 0 : index
    %164 = vector.load %arg4[%c0_58, %c0_59] : memref<32x128xbf16, #tpu.memory_space<vmem>>, vector<32x128xbf16>
    %cst_60 = arith.constant dense<0.000000e+00> : vector<2x128xf32>
    %165 = tpu.matmul %163, %164, %cst_60 {dimension_numbers = #tpu.dot_dimension_numbers<[1], [0], [0], [1], [0, 0, 1, 1], [], []>} : vector<2x32xbf16>, vector<32x128xbf16>, vector<2x128xf32> -> vector<2x128xf32>
    %166 = arith.addf %162, %165 : vector<2x128xf32>
    %167 = arith.negf %166 : vector<2x128xf32>
    %168 = math.exp %167 : vector<2x128xf32>
    %cst_61 = arith.constant 1.000000e+00 : f32
    %169 = vector.broadcast %cst_61 : f32 to vector<2x128xf32>
    %170 = arith.addf %169, %168 : vector<2x128xf32>
    %171 = arith.divf %169, %170 : vector<2x128xf32>
    %172 = vector.extract_strided_slice %171 {offsets = [0, 0], sizes = [2, 32], strides = [1, 1]} : vector<2x128xf32> to vector<2x32xf32>
    %173 = vector.extract_strided_slice %171 {offsets = [0, 32], sizes = [2, 32], strides = [1, 1]} : vector<2x128xf32> to vector<2x32xf32>
    %174 = vector.extract_strided_slice %171 {offsets = [0, 96], sizes = [2, 32], strides = [1, 1]} : vector<2x128xf32> to vector<2x32xf32>
    %175 = vector.extract_strided_slice %166 {offsets = [0, 64], sizes = [2, 32], strides = [1, 1]} : vector<2x128xf32> to vector<2x32xf32>
    %176 = math.tanh %175 : vector<2x32xf32>
    %177 = arith.mulf %173, %113 : vector<2x32xf32>
    %178 = arith.mulf %172, %176 : vector<2x32xf32>
    %179 = arith.addf %177, %178 : vector<2x32xf32>
    %180 = math.tanh %179 : vector<2x32xf32>
    %181 = arith.mulf %174, %180 : vector<2x32xf32>
    %182 = tpu.concatenate %181, %136 in 1 : vector<2x32xf32>, vector<2x32xf32> -> vector<2x64xf32>
    %183 = arith.truncf %182 : vector<2x64xf32> to vector<2x64xbf16>
    %c0_62 = arith.constant 0 : index
    %c0_63 = arith.constant 0 : index
    %c0_64 = arith.constant 0 : index
    %184 = vector.load %arg3[%c0_62, %c0_63, %c0_64] : memref<2x64x128xbf16, #tpu.memory_space<vmem>>, vector<1x64x128xbf16>
    %185 = vector.shape_cast %184 : vector<1x64x128xbf16> to vector<64x128xbf16>
    %cst_65 = arith.constant dense<0.000000e+00> : vector<2x128xf32>
    %186 = tpu.matmul %183, %185, %cst_65 {dimension_numbers = #tpu.dot_dimension_numbers<[1], [0], [0], [1], [0, 0, 1, 1], [], []>} : vector<2x64xbf16>, vector<64x128xbf16>, vector<2x128xf32> -> vector<2x128xf32>
    %187 = arith.addf %186, %9 : vector<2x128xf32>
    %188 = arith.negf %187 : vector<2x128xf32>
    %189 = math.exp %188 : vector<2x128xf32>
    %cst_66 = arith.constant 1.000000e+00 : f32
    %190 = vector.broadcast %cst_66 : f32 to vector<2x128xf32>
    %191 = arith.addf %190, %189 : vector<2x128xf32>
    %192 = arith.divf %190, %191 : vector<2x128xf32>
    %193 = vector.extract_strided_slice %192 {offsets = [0, 0], sizes = [2, 32], strides = [1, 1]} : vector<2x128xf32> to vector<2x32xf32>
    %194 = vector.extract_strided_slice %192 {offsets = [0, 32], sizes = [2, 32], strides = [1, 1]} : vector<2x128xf32> to vector<2x32xf32>
    %195 = vector.extract_strided_slice %192 {offsets = [0, 96], sizes = [2, 32], strides = [1, 1]} : vector<2x128xf32> to vector<2x32xf32>
    %196 = vector.extract_strided_slice %187 {offsets = [0, 64], sizes = [2, 32], strides = [1, 1]} : vector<2x128xf32> to vector<2x32xf32>
    %197 = math.tanh %196 : vector<2x32xf32>
    %198 = arith.mulf %194, %134 : vector<2x32xf32>
    %199 = arith.mulf %193, %197 : vector<2x32xf32>
    %200 = arith.addf %198, %199 : vector<2x32xf32>
    %201 = math.tanh %200 : vector<2x32xf32>
    %202 = arith.mulf %195, %201 : vector<2x32xf32>
    %203 = tpu.concatenate %202, %157 in 1 : vector<2x32xf32>, vector<2x32xf32> -> vector<2x64xf32>
    %204 = arith.truncf %203 : vector<2x64xf32> to vector<2x64xbf16>
    %c1_67 = arith.constant 1 : index
    %c0_68 = arith.constant 0 : index
    %c0_69 = arith.constant 0 : index
    %205 = vector.load %arg3[%c1_67, %c0_68, %c0_69] : memref<2x64x128xbf16, #tpu.memory_space<vmem>>, vector<1x64x128xbf16>
    %206 = vector.shape_cast %205 : vector<1x64x128xbf16> to vector<64x128xbf16>
    %cst_70 = arith.constant dense<0.000000e+00> : vector<2x128xf32>
    %207 = tpu.matmul %204, %206, %cst_70 {dimension_numbers = #tpu.dot_dimension_numbers<[1], [0], [0], [1], [0, 0, 1, 1], [], []>} : vector<2x64xbf16>, vector<64x128xbf16>, vector<2x128xf32> -> vector<2x128xf32>
    %208 = arith.addf %207, %13 : vector<2x128xf32>
    %209 = arith.negf %208 : vector<2x128xf32>
    %210 = math.exp %209 : vector<2x128xf32>
    %cst_71 = arith.constant 1.000000e+00 : f32
    %211 = vector.broadcast %cst_71 : f32 to vector<2x128xf32>
    %212 = arith.addf %211, %210 : vector<2x128xf32>
    %213 = arith.divf %211, %212 : vector<2x128xf32>
    %214 = vector.extract_strided_slice %213 {offsets = [0, 0], sizes = [2, 32], strides = [1, 1]} : vector<2x128xf32> to vector<2x32xf32>
    %215 = vector.extract_strided_slice %213 {offsets = [0, 32], sizes = [2, 32], strides = [1, 1]} : vector<2x128xf32> to vector<2x32xf32>
    %216 = vector.extract_strided_slice %213 {offsets = [0, 96], sizes = [2, 32], strides = [1, 1]} : vector<2x128xf32> to vector<2x32xf32>
    %217 = vector.extract_strided_slice %208 {offsets = [0, 64], sizes = [2, 32], strides = [1, 1]} : vector<2x128xf32> to vector<2x32xf32>
    %218 = math.tanh %217 : vector<2x32xf32>
    %219 = arith.mulf %215, %155 : vector<2x32xf32>
    %220 = arith.mulf %214, %218 : vector<2x32xf32>
    %221 = arith.addf %219, %220 : vector<2x32xf32>
    %222 = math.tanh %221 : vector<2x32xf32>
    %223 = arith.mulf %216, %222 : vector<2x32xf32>
    %c3_i32 = arith.constant 3 : i32
    %224 = arith.index_cast %c3_i32 : i32 to index
    %c0_72 = arith.constant 0 : index
    %c0_73 = arith.constant 0 : index
    %225 = vector.load %arg1[%224, %c0_72, %c0_73] : memref<8x2x128xbf16, #tpu.memory_space<vmem>>, vector<1x2x128xbf16>
    %226 = vector.shape_cast %225 : vector<1x2x128xbf16> to vector<2x128xbf16>
    %227 = arith.extf %226 : vector<2x128xbf16> to vector<2x128xf32>
    %228 = arith.addf %227, %5 : vector<2x128xf32>
    %229 = arith.truncf %181 : vector<2x32xf32> to vector<2x32xbf16>
    %c0_74 = arith.constant 0 : index
    %c0_75 = arith.constant 0 : index
    %230 = vector.load %arg4[%c0_74, %c0_75] : memref<32x128xbf16, #tpu.memory_space<vmem>>, vector<32x128xbf16>
    %cst_76 = arith.constant dense<0.000000e+00> : vector<2x128xf32>
    %231 = tpu.matmul %229, %230, %cst_76 {dimension_numbers = #tpu.dot_dimension_numbers<[1], [0], [0], [1], [0, 0, 1, 1], [], []>} : vector<2x32xbf16>, vector<32x128xbf16>, vector<2x128xf32> -> vector<2x128xf32>
    %232 = arith.addf %228, %231 : vector<2x128xf32>
    %233 = arith.negf %232 : vector<2x128xf32>
    %234 = math.exp %233 : vector<2x128xf32>
    %cst_77 = arith.constant 1.000000e+00 : f32
    %235 = vector.broadcast %cst_77 : f32 to vector<2x128xf32>
    %236 = arith.addf %235, %234 : vector<2x128xf32>
    %237 = arith.divf %235, %236 : vector<2x128xf32>
    %238 = vector.extract_strided_slice %237 {offsets = [0, 0], sizes = [2, 32], strides = [1, 1]} : vector<2x128xf32> to vector<2x32xf32>
    %239 = vector.extract_strided_slice %237 {offsets = [0, 32], sizes = [2, 32], strides = [1, 1]} : vector<2x128xf32> to vector<2x32xf32>
    %240 = vector.extract_strided_slice %237 {offsets = [0, 96], sizes = [2, 32], strides = [1, 1]} : vector<2x128xf32> to vector<2x32xf32>
    %241 = vector.extract_strided_slice %232 {offsets = [0, 64], sizes = [2, 32], strides = [1, 1]} : vector<2x128xf32> to vector<2x32xf32>
    %242 = math.tanh %241 : vector<2x32xf32>
    %243 = arith.mulf %239, %179 : vector<2x32xf32>
    %244 = arith.mulf %238, %242 : vector<2x32xf32>
    %245 = arith.addf %243, %244 : vector<2x32xf32>
    %246 = math.tanh %245 : vector<2x32xf32>
    %247 = arith.mulf %240, %246 : vector<2x32xf32>
    %248 = tpu.concatenate %247, %202 in 1 : vector<2x32xf32>, vector<2x32xf32> -> vector<2x64xf32>
    %249 = arith.truncf %248 : vector<2x64xf32> to vector<2x64xbf16>
    %c0_78 = arith.constant 0 : index
    %c0_79 = arith.constant 0 : index
    %c0_80 = arith.constant 0 : index
    %250 = vector.load %arg3[%c0_78, %c0_79, %c0_80] : memref<2x64x128xbf16, #tpu.memory_space<vmem>>, vector<1x64x128xbf16>
    %251 = vector.shape_cast %250 : vector<1x64x128xbf16> to vector<64x128xbf16>
    %cst_81 = arith.constant dense<0.000000e+00> : vector<2x128xf32>
    %252 = tpu.matmul %249, %251, %cst_81 {dimension_numbers = #tpu.dot_dimension_numbers<[1], [0], [0], [1], [0, 0, 1, 1], [], []>} : vector<2x64xbf16>, vector<64x128xbf16>, vector<2x128xf32> -> vector<2x128xf32>
    %253 = arith.addf %252, %9 : vector<2x128xf32>
    %254 = arith.negf %253 : vector<2x128xf32>
    %255 = math.exp %254 : vector<2x128xf32>
    %cst_82 = arith.constant 1.000000e+00 : f32
    %256 = vector.broadcast %cst_82 : f32 to vector<2x128xf32>
    %257 = arith.addf %256, %255 : vector<2x128xf32>
    %258 = arith.divf %256, %257 : vector<2x128xf32>
    %259 = vector.extract_strided_slice %258 {offsets = [0, 0], sizes = [2, 32], strides = [1, 1]} : vector<2x128xf32> to vector<2x32xf32>
    %260 = vector.extract_strided_slice %258 {offsets = [0, 32], sizes = [2, 32], strides = [1, 1]} : vector<2x128xf32> to vector<2x32xf32>
    %261 = vector.extract_strided_slice %258 {offsets = [0, 96], sizes = [2, 32], strides = [1, 1]} : vector<2x128xf32> to vector<2x32xf32>
    %262 = vector.extract_strided_slice %253 {offsets = [0, 64], sizes = [2, 32], strides = [1, 1]} : vector<2x128xf32> to vector<2x32xf32>
    %263 = math.tanh %262 : vector<2x32xf32>
    %264 = arith.mulf %260, %200 : vector<2x32xf32>
    %265 = arith.mulf %259, %263 : vector<2x32xf32>
    %266 = arith.addf %264, %265 : vector<2x32xf32>
    %267 = math.tanh %266 : vector<2x32xf32>
    %268 = arith.mulf %261, %267 : vector<2x32xf32>
    %269 = tpu.concatenate %268, %223 in 1 : vector<2x32xf32>, vector<2x32xf32> -> vector<2x64xf32>
    %270 = arith.truncf %269 : vector<2x64xf32> to vector<2x64xbf16>
    %c1_83 = arith.constant 1 : index
    %c0_84 = arith.constant 0 : index
    %c0_85 = arith.constant 0 : index
    %271 = vector.load %arg3[%c1_83, %c0_84, %c0_85] : memref<2x64x128xbf16, #tpu.memory_space<vmem>>, vector<1x64x128xbf16>
    %272 = vector.shape_cast %271 : vector<1x64x128xbf16> to vector<64x128xbf16>
    %cst_86 = arith.constant dense<0.000000e+00> : vector<2x128xf32>
    %273 = tpu.matmul %270, %272, %cst_86 {dimension_numbers = #tpu.dot_dimension_numbers<[1], [0], [0], [1], [0, 0, 1, 1], [], []>} : vector<2x64xbf16>, vector<64x128xbf16>, vector<2x128xf32> -> vector<2x128xf32>
    %274 = arith.addf %273, %13 : vector<2x128xf32>
    %275 = arith.negf %274 : vector<2x128xf32>
    %276 = math.exp %275 : vector<2x128xf32>
    %cst_87 = arith.constant 1.000000e+00 : f32
    %277 = vector.broadcast %cst_87 : f32 to vector<2x128xf32>
    %278 = arith.addf %277, %276 : vector<2x128xf32>
    %279 = arith.divf %277, %278 : vector<2x128xf32>
    %280 = vector.extract_strided_slice %279 {offsets = [0, 0], sizes = [2, 32], strides = [1, 1]} : vector<2x128xf32> to vector<2x32xf32>
    %281 = vector.extract_strided_slice %279 {offsets = [0, 32], sizes = [2, 32], strides = [1, 1]} : vector<2x128xf32> to vector<2x32xf32>
    %282 = vector.extract_strided_slice %279 {offsets = [0, 96], sizes = [2, 32], strides = [1, 1]} : vector<2x128xf32> to vector<2x32xf32>
    %283 = vector.extract_strided_slice %274 {offsets = [0, 64], sizes = [2, 32], strides = [1, 1]} : vector<2x128xf32> to vector<2x32xf32>
    %284 = math.tanh %283 : vector<2x32xf32>
    %285 = arith.mulf %281, %221 : vector<2x32xf32>
    %286 = arith.mulf %280, %284 : vector<2x32xf32>
    %287 = arith.addf %285, %286 : vector<2x32xf32>
    %288 = math.tanh %287 : vector<2x32xf32>
    %289 = arith.mulf %282, %288 : vector<2x32xf32>
    %c4_i32 = arith.constant 4 : i32
    %290 = arith.index_cast %c4_i32 : i32 to index
    %c0_88 = arith.constant 0 : index
    %c0_89 = arith.constant 0 : index
    %291 = vector.load %arg1[%290, %c0_88, %c0_89] : memref<8x2x128xbf16, #tpu.memory_space<vmem>>, vector<1x2x128xbf16>
    %292 = vector.shape_cast %291 : vector<1x2x128xbf16> to vector<2x128xbf16>
    %293 = arith.extf %292 : vector<2x128xbf16> to vector<2x128xf32>
    %294 = arith.addf %293, %5 : vector<2x128xf32>
    %295 = arith.truncf %247 : vector<2x32xf32> to vector<2x32xbf16>
    %c0_90 = arith.constant 0 : index
    %c0_91 = arith.constant 0 : index
    %296 = vector.load %arg4[%c0_90, %c0_91] : memref<32x128xbf16, #tpu.memory_space<vmem>>, vector<32x128xbf16>
    %cst_92 = arith.constant dense<0.000000e+00> : vector<2x128xf32>
    %297 = tpu.matmul %295, %296, %cst_92 {dimension_numbers = #tpu.dot_dimension_numbers<[1], [0], [0], [1], [0, 0, 1, 1], [], []>} : vector<2x32xbf16>, vector<32x128xbf16>, vector<2x128xf32> -> vector<2x128xf32>
    %298 = arith.addf %294, %297 : vector<2x128xf32>
    %299 = arith.negf %298 : vector<2x128xf32>
    %300 = math.exp %299 : vector<2x128xf32>
    %cst_93 = arith.constant 1.000000e+00 : f32
    %301 = vector.broadcast %cst_93 : f32 to vector<2x128xf32>
    %302 = arith.addf %301, %300 : vector<2x128xf32>
    %303 = arith.divf %301, %302 : vector<2x128xf32>
    %304 = vector.extract_strided_slice %303 {offsets = [0, 0], sizes = [2, 32], strides = [1, 1]} : vector<2x128xf32> to vector<2x32xf32>
    %305 = vector.extract_strided_slice %303 {offsets = [0, 32], sizes = [2, 32], strides = [1, 1]} : vector<2x128xf32> to vector<2x32xf32>
    %306 = vector.extract_strided_slice %303 {offsets = [0, 96], sizes = [2, 32], strides = [1, 1]} : vector<2x128xf32> to vector<2x32xf32>
    %307 = vector.extract_strided_slice %298 {offsets = [0, 64], sizes = [2, 32], strides = [1, 1]} : vector<2x128xf32> to vector<2x32xf32>
    %308 = math.tanh %307 : vector<2x32xf32>
    %309 = arith.mulf %305, %245 : vector<2x32xf32>
    %310 = arith.mulf %304, %308 : vector<2x32xf32>
    %311 = arith.addf %309, %310 : vector<2x32xf32>
    %312 = math.tanh %311 : vector<2x32xf32>
    %313 = arith.mulf %306, %312 : vector<2x32xf32>
    %314 = tpu.concatenate %313, %268 in 1 : vector<2x32xf32>, vector<2x32xf32> -> vector<2x64xf32>
    %315 = arith.truncf %314 : vector<2x64xf32> to vector<2x64xbf16>
    %c0_94 = arith.constant 0 : index
    %c0_95 = arith.constant 0 : index
    %c0_96 = arith.constant 0 : index
    %316 = vector.load %arg3[%c0_94, %c0_95, %c0_96] : memref<2x64x128xbf16, #tpu.memory_space<vmem>>, vector<1x64x128xbf16>
    %317 = vector.shape_cast %316 : vector<1x64x128xbf16> to vector<64x128xbf16>
    %cst_97 = arith.constant dense<0.000000e+00> : vector<2x128xf32>
    %318 = tpu.matmul %315, %317, %cst_97 {dimension_numbers = #tpu.dot_dimension_numbers<[1], [0], [0], [1], [0, 0, 1, 1], [], []>} : vector<2x64xbf16>, vector<64x128xbf16>, vector<2x128xf32> -> vector<2x128xf32>
    %319 = arith.addf %318, %9 : vector<2x128xf32>
    %320 = arith.negf %319 : vector<2x128xf32>
    %321 = math.exp %320 : vector<2x128xf32>
    %cst_98 = arith.constant 1.000000e+00 : f32
    %322 = vector.broadcast %cst_98 : f32 to vector<2x128xf32>
    %323 = arith.addf %322, %321 : vector<2x128xf32>
    %324 = arith.divf %322, %323 : vector<2x128xf32>
    %325 = vector.extract_strided_slice %324 {offsets = [0, 0], sizes = [2, 32], strides = [1, 1]} : vector<2x128xf32> to vector<2x32xf32>
    %326 = vector.extract_strided_slice %324 {offsets = [0, 32], sizes = [2, 32], strides = [1, 1]} : vector<2x128xf32> to vector<2x32xf32>
    %327 = vector.extract_strided_slice %324 {offsets = [0, 96], sizes = [2, 32], strides = [1, 1]} : vector<2x128xf32> to vector<2x32xf32>
    %328 = vector.extract_strided_slice %319 {offsets = [0, 64], sizes = [2, 32], strides = [1, 1]} : vector<2x128xf32> to vector<2x32xf32>
    %329 = math.tanh %328 : vector<2x32xf32>
    %330 = arith.mulf %326, %266 : vector<2x32xf32>
    %331 = arith.mulf %325, %329 : vector<2x32xf32>
    %332 = arith.addf %330, %331 : vector<2x32xf32>
    %333 = math.tanh %332 : vector<2x32xf32>
    %334 = arith.mulf %327, %333 : vector<2x32xf32>
    %335 = tpu.concatenate %334, %289 in 1 : vector<2x32xf32>, vector<2x32xf32> -> vector<2x64xf32>
    %336 = arith.truncf %335 : vector<2x64xf32> to vector<2x64xbf16>
    %c1_99 = arith.constant 1 : index
    %c0_100 = arith.constant 0 : index
    %c0_101 = arith.constant 0 : index
    %337 = vector.load %arg3[%c1_99, %c0_100, %c0_101] : memref<2x64x128xbf16, #tpu.memory_space<vmem>>, vector<1x64x128xbf16>
    %338 = vector.shape_cast %337 : vector<1x64x128xbf16> to vector<64x128xbf16>
    %cst_102 = arith.constant dense<0.000000e+00> : vector<2x128xf32>
    %339 = tpu.matmul %336, %338, %cst_102 {dimension_numbers = #tpu.dot_dimension_numbers<[1], [0], [0], [1], [0, 0, 1, 1], [], []>} : vector<2x64xbf16>, vector<64x128xbf16>, vector<2x128xf32> -> vector<2x128xf32>
    %340 = arith.addf %339, %13 : vector<2x128xf32>
    %341 = arith.negf %340 : vector<2x128xf32>
    %342 = math.exp %341 : vector<2x128xf32>
    %cst_103 = arith.constant 1.000000e+00 : f32
    %343 = vector.broadcast %cst_103 : f32 to vector<2x128xf32>
    %344 = arith.addf %343, %342 : vector<2x128xf32>
    %345 = arith.divf %343, %344 : vector<2x128xf32>
    %346 = vector.extract_strided_slice %345 {offsets = [0, 0], sizes = [2, 32], strides = [1, 1]} : vector<2x128xf32> to vector<2x32xf32>
    %347 = vector.extract_strided_slice %345 {offsets = [0, 32], sizes = [2, 32], strides = [1, 1]} : vector<2x128xf32> to vector<2x32xf32>
    %348 = vector.extract_strided_slice %345 {offsets = [0, 96], sizes = [2, 32], strides = [1, 1]} : vector<2x128xf32> to vector<2x32xf32>
    %349 = vector.extract_strided_slice %340 {offsets = [0, 64], sizes = [2, 32], strides = [1, 1]} : vector<2x128xf32> to vector<2x32xf32>
    %350 = math.tanh %349 : vector<2x32xf32>
    %351 = arith.mulf %347, %287 : vector<2x32xf32>
    %352 = arith.mulf %346, %350 : vector<2x32xf32>
    %353 = arith.addf %351, %352 : vector<2x32xf32>
    %354 = math.tanh %353 : vector<2x32xf32>
    %355 = arith.mulf %348, %354 : vector<2x32xf32>
    %c5_i32 = arith.constant 5 : i32
    %356 = arith.index_cast %c5_i32 : i32 to index
    %c0_104 = arith.constant 0 : index
    %c0_105 = arith.constant 0 : index
    %357 = vector.load %arg1[%356, %c0_104, %c0_105] : memref<8x2x128xbf16, #tpu.memory_space<vmem>>, vector<1x2x128xbf16>
    %358 = vector.shape_cast %357 : vector<1x2x128xbf16> to vector<2x128xbf16>
    %359 = arith.extf %358 : vector<2x128xbf16> to vector<2x128xf32>
    %360 = arith.addf %359, %5 : vector<2x128xf32>
    %361 = arith.truncf %313 : vector<2x32xf32> to vector<2x32xbf16>
    %c0_106 = arith.constant 0 : index
    %c0_107 = arith.constant 0 : index
    %362 = vector.load %arg4[%c0_106, %c0_107] : memref<32x128xbf16, #tpu.memory_space<vmem>>, vector<32x128xbf16>
    %cst_108 = arith.constant dense<0.000000e+00> : vector<2x128xf32>
    %363 = tpu.matmul %361, %362, %cst_108 {dimension_numbers = #tpu.dot_dimension_numbers<[1], [0], [0], [1], [0, 0, 1, 1], [], []>} : vector<2x32xbf16>, vector<32x128xbf16>, vector<2x128xf32> -> vector<2x128xf32>
    %364 = arith.addf %360, %363 : vector<2x128xf32>
    %365 = arith.negf %364 : vector<2x128xf32>
    %366 = math.exp %365 : vector<2x128xf32>
    %cst_109 = arith.constant 1.000000e+00 : f32
    %367 = vector.broadcast %cst_109 : f32 to vector<2x128xf32>
    %368 = arith.addf %367, %366 : vector<2x128xf32>
    %369 = arith.divf %367, %368 : vector<2x128xf32>
    %370 = vector.extract_strided_slice %369 {offsets = [0, 0], sizes = [2, 32], strides = [1, 1]} : vector<2x128xf32> to vector<2x32xf32>
    %371 = vector.extract_strided_slice %369 {offsets = [0, 32], sizes = [2, 32], strides = [1, 1]} : vector<2x128xf32> to vector<2x32xf32>
    %372 = vector.extract_strided_slice %369 {offsets = [0, 96], sizes = [2, 32], strides = [1, 1]} : vector<2x128xf32> to vector<2x32xf32>
    %373 = vector.extract_strided_slice %364 {offsets = [0, 64], sizes = [2, 32], strides = [1, 1]} : vector<2x128xf32> to vector<2x32xf32>
    %374 = math.tanh %373 : vector<2x32xf32>
    %375 = arith.mulf %371, %311 : vector<2x32xf32>
    %376 = arith.mulf %370, %374 : vector<2x32xf32>
    %377 = arith.addf %375, %376 : vector<2x32xf32>
    %378 = math.tanh %377 : vector<2x32xf32>
    %379 = arith.mulf %372, %378 : vector<2x32xf32>
    %380 = tpu.concatenate %379, %334 in 1 : vector<2x32xf32>, vector<2x32xf32> -> vector<2x64xf32>
    %381 = arith.truncf %380 : vector<2x64xf32> to vector<2x64xbf16>
    %c0_110 = arith.constant 0 : index
    %c0_111 = arith.constant 0 : index
    %c0_112 = arith.constant 0 : index
    %382 = vector.load %arg3[%c0_110, %c0_111, %c0_112] : memref<2x64x128xbf16, #tpu.memory_space<vmem>>, vector<1x64x128xbf16>
    %383 = vector.shape_cast %382 : vector<1x64x128xbf16> to vector<64x128xbf16>
    %cst_113 = arith.constant dense<0.000000e+00> : vector<2x128xf32>
    %384 = tpu.matmul %381, %383, %cst_113 {dimension_numbers = #tpu.dot_dimension_numbers<[1], [0], [0], [1], [0, 0, 1, 1], [], []>} : vector<2x64xbf16>, vector<64x128xbf16>, vector<2x128xf32> -> vector<2x128xf32>
    %385 = arith.addf %384, %9 : vector<2x128xf32>
    %386 = arith.negf %385 : vector<2x128xf32>
    %387 = math.exp %386 : vector<2x128xf32>
    %cst_114 = arith.constant 1.000000e+00 : f32
    %388 = vector.broadcast %cst_114 : f32 to vector<2x128xf32>
    %389 = arith.addf %388, %387 : vector<2x128xf32>
    %390 = arith.divf %388, %389 : vector<2x128xf32>
    %391 = vector.extract_strided_slice %390 {offsets = [0, 0], sizes = [2, 32], strides = [1, 1]} : vector<2x128xf32> to vector<2x32xf32>
    %392 = vector.extract_strided_slice %390 {offsets = [0, 32], sizes = [2, 32], strides = [1, 1]} : vector<2x128xf32> to vector<2x32xf32>
    %393 = vector.extract_strided_slice %390 {offsets = [0, 96], sizes = [2, 32], strides = [1, 1]} : vector<2x128xf32> to vector<2x32xf32>
    %394 = vector.extract_strided_slice %385 {offsets = [0, 64], sizes = [2, 32], strides = [1, 1]} : vector<2x128xf32> to vector<2x32xf32>
    %395 = math.tanh %394 : vector<2x32xf32>
    %396 = arith.mulf %392, %332 : vector<2x32xf32>
    %397 = arith.mulf %391, %395 : vector<2x32xf32>
    %398 = arith.addf %396, %397 : vector<2x32xf32>
    %399 = math.tanh %398 : vector<2x32xf32>
    %400 = arith.mulf %393, %399 : vector<2x32xf32>
    %401 = tpu.concatenate %400, %355 in 1 : vector<2x32xf32>, vector<2x32xf32> -> vector<2x64xf32>
    %402 = arith.truncf %401 : vector<2x64xf32> to vector<2x64xbf16>
    %c1_115 = arith.constant 1 : index
    %c0_116 = arith.constant 0 : index
    %c0_117 = arith.constant 0 : index
    %403 = vector.load %arg3[%c1_115, %c0_116, %c0_117] : memref<2x64x128xbf16, #tpu.memory_space<vmem>>, vector<1x64x128xbf16>
    %404 = vector.shape_cast %403 : vector<1x64x128xbf16> to vector<64x128xbf16>
    %cst_118 = arith.constant dense<0.000000e+00> : vector<2x128xf32>
    %405 = tpu.matmul %402, %404, %cst_118 {dimension_numbers = #tpu.dot_dimension_numbers<[1], [0], [0], [1], [0, 0, 1, 1], [], []>} : vector<2x64xbf16>, vector<64x128xbf16>, vector<2x128xf32> -> vector<2x128xf32>
    %406 = arith.addf %405, %13 : vector<2x128xf32>
    %407 = arith.negf %406 : vector<2x128xf32>
    %408 = math.exp %407 : vector<2x128xf32>
    %cst_119 = arith.constant 1.000000e+00 : f32
    %409 = vector.broadcast %cst_119 : f32 to vector<2x128xf32>
    %410 = arith.addf %409, %408 : vector<2x128xf32>
    %411 = arith.divf %409, %410 : vector<2x128xf32>
    %412 = vector.extract_strided_slice %411 {offsets = [0, 0], sizes = [2, 32], strides = [1, 1]} : vector<2x128xf32> to vector<2x32xf32>
    %413 = vector.extract_strided_slice %411 {offsets = [0, 32], sizes = [2, 32], strides = [1, 1]} : vector<2x128xf32> to vector<2x32xf32>
    %414 = vector.extract_strided_slice %411 {offsets = [0, 96], sizes = [2, 32], strides = [1, 1]} : vector<2x128xf32> to vector<2x32xf32>
    %415 = vector.extract_strided_slice %406 {offsets = [0, 64], sizes = [2, 32], strides = [1, 1]} : vector<2x128xf32> to vector<2x32xf32>
    %416 = math.tanh %415 : vector<2x32xf32>
    %417 = arith.mulf %413, %353 : vector<2x32xf32>
    %418 = arith.mulf %412, %416 : vector<2x32xf32>
    %419 = arith.addf %417, %418 : vector<2x32xf32>
    %420 = math.tanh %419 : vector<2x32xf32>
    %421 = arith.mulf %414, %420 : vector<2x32xf32>
    %c6_i32 = arith.constant 6 : i32
    %422 = arith.index_cast %c6_i32 : i32 to index
    %c0_120 = arith.constant 0 : index
    %c0_121 = arith.constant 0 : index
    %423 = vector.load %arg1[%422, %c0_120, %c0_121] : memref<8x2x128xbf16, #tpu.memory_space<vmem>>, vector<1x2x128xbf16>
    %424 = vector.shape_cast %423 : vector<1x2x128xbf16> to vector<2x128xbf16>
    %425 = arith.extf %424 : vector<2x128xbf16> to vector<2x128xf32>
    %426 = arith.addf %425, %5 : vector<2x128xf32>
    %427 = arith.truncf %379 : vector<2x32xf32> to vector<2x32xbf16>
    %c0_122 = arith.constant 0 : index
    %c0_123 = arith.constant 0 : index
    %428 = vector.load %arg4[%c0_122, %c0_123] : memref<32x128xbf16, #tpu.memory_space<vmem>>, vector<32x128xbf16>
    %cst_124 = arith.constant dense<0.000000e+00> : vector<2x128xf32>
    %429 = tpu.matmul %427, %428, %cst_124 {dimension_numbers = #tpu.dot_dimension_numbers<[1], [0], [0], [1], [0, 0, 1, 1], [], []>} : vector<2x32xbf16>, vector<32x128xbf16>, vector<2x128xf32> -> vector<2x128xf32>
    %430 = arith.addf %426, %429 : vector<2x128xf32>
    %431 = arith.negf %430 : vector<2x128xf32>
    %432 = math.exp %431 : vector<2x128xf32>
    %cst_125 = arith.constant 1.000000e+00 : f32
    %433 = vector.broadcast %cst_125 : f32 to vector<2x128xf32>
    %434 = arith.addf %433, %432 : vector<2x128xf32>
    %435 = arith.divf %433, %434 : vector<2x128xf32>
    %436 = vector.extract_strided_slice %435 {offsets = [0, 0], sizes = [2, 32], strides = [1, 1]} : vector<2x128xf32> to vector<2x32xf32>
    %437 = vector.extract_strided_slice %435 {offsets = [0, 32], sizes = [2, 32], strides = [1, 1]} : vector<2x128xf32> to vector<2x32xf32>
    %438 = vector.extract_strided_slice %435 {offsets = [0, 96], sizes = [2, 32], strides = [1, 1]} : vector<2x128xf32> to vector<2x32xf32>
    %439 = vector.extract_strided_slice %430 {offsets = [0, 64], sizes = [2, 32], strides = [1, 1]} : vector<2x128xf32> to vector<2x32xf32>
    %440 = math.tanh %439 : vector<2x32xf32>
    %441 = arith.mulf %437, %377 : vector<2x32xf32>
    %442 = arith.mulf %436, %440 : vector<2x32xf32>
    %443 = arith.addf %441, %442 : vector<2x32xf32>
    %444 = math.tanh %443 : vector<2x32xf32>
    %445 = arith.mulf %438, %444 : vector<2x32xf32>
    %446 = tpu.concatenate %445, %400 in 1 : vector<2x32xf32>, vector<2x32xf32> -> vector<2x64xf32>
    %447 = arith.truncf %446 : vector<2x64xf32> to vector<2x64xbf16>
    %c0_126 = arith.constant 0 : index
    %c0_127 = arith.constant 0 : index
    %c0_128 = arith.constant 0 : index
    %448 = vector.load %arg3[%c0_126, %c0_127, %c0_128] : memref<2x64x128xbf16, #tpu.memory_space<vmem>>, vector<1x64x128xbf16>
    %449 = vector.shape_cast %448 : vector<1x64x128xbf16> to vector<64x128xbf16>
    %cst_129 = arith.constant dense<0.000000e+00> : vector<2x128xf32>
    %450 = tpu.matmul %447, %449, %cst_129 {dimension_numbers = #tpu.dot_dimension_numbers<[1], [0], [0], [1], [0, 0, 1, 1], [], []>} : vector<2x64xbf16>, vector<64x128xbf16>, vector<2x128xf32> -> vector<2x128xf32>
    %451 = arith.addf %450, %9 : vector<2x128xf32>
    %452 = arith.negf %451 : vector<2x128xf32>
    %453 = math.exp %452 : vector<2x128xf32>
    %cst_130 = arith.constant 1.000000e+00 : f32
    %454 = vector.broadcast %cst_130 : f32 to vector<2x128xf32>
    %455 = arith.addf %454, %453 : vector<2x128xf32>
    %456 = arith.divf %454, %455 : vector<2x128xf32>
    %457 = vector.extract_strided_slice %456 {offsets = [0, 0], sizes = [2, 32], strides = [1, 1]} : vector<2x128xf32> to vector<2x32xf32>
    %458 = vector.extract_strided_slice %456 {offsets = [0, 32], sizes = [2, 32], strides = [1, 1]} : vector<2x128xf32> to vector<2x32xf32>
    %459 = vector.extract_strided_slice %456 {offsets = [0, 96], sizes = [2, 32], strides = [1, 1]} : vector<2x128xf32> to vector<2x32xf32>
    %460 = vector.extract_strided_slice %451 {offsets = [0, 64], sizes = [2, 32], strides = [1, 1]} : vector<2x128xf32> to vector<2x32xf32>
    %461 = math.tanh %460 : vector<2x32xf32>
    %462 = arith.mulf %458, %398 : vector<2x32xf32>
    %463 = arith.mulf %457, %461 : vector<2x32xf32>
    %464 = arith.addf %462, %463 : vector<2x32xf32>
    %465 = math.tanh %464 : vector<2x32xf32>
    %466 = arith.mulf %459, %465 : vector<2x32xf32>
    %467 = tpu.concatenate %466, %421 in 1 : vector<2x32xf32>, vector<2x32xf32> -> vector<2x64xf32>
    %468 = arith.truncf %467 : vector<2x64xf32> to vector<2x64xbf16>
    %c1_131 = arith.constant 1 : index
    %c0_132 = arith.constant 0 : index
    %c0_133 = arith.constant 0 : index
    %469 = vector.load %arg3[%c1_131, %c0_132, %c0_133] : memref<2x64x128xbf16, #tpu.memory_space<vmem>>, vector<1x64x128xbf16>
    %470 = vector.shape_cast %469 : vector<1x64x128xbf16> to vector<64x128xbf16>
    %cst_134 = arith.constant dense<0.000000e+00> : vector<2x128xf32>
    %471 = tpu.matmul %468, %470, %cst_134 {dimension_numbers = #tpu.dot_dimension_numbers<[1], [0], [0], [1], [0, 0, 1, 1], [], []>} : vector<2x64xbf16>, vector<64x128xbf16>, vector<2x128xf32> -> vector<2x128xf32>
    %472 = arith.addf %471, %13 : vector<2x128xf32>
    %473 = arith.negf %472 : vector<2x128xf32>
    %474 = math.exp %473 : vector<2x128xf32>
    %cst_135 = arith.constant 1.000000e+00 : f32
    %475 = vector.broadcast %cst_135 : f32 to vector<2x128xf32>
    %476 = arith.addf %475, %474 : vector<2x128xf32>
    %477 = arith.divf %475, %476 : vector<2x128xf32>
    %478 = vector.extract_strided_slice %477 {offsets = [0, 0], sizes = [2, 32], strides = [1, 1]} : vector<2x128xf32> to vector<2x32xf32>
    %479 = vector.extract_strided_slice %477 {offsets = [0, 32], sizes = [2, 32], strides = [1, 1]} : vector<2x128xf32> to vector<2x32xf32>
    %480 = vector.extract_strided_slice %477 {offsets = [0, 96], sizes = [2, 32], strides = [1, 1]} : vector<2x128xf32> to vector<2x32xf32>
    %481 = vector.extract_strided_slice %472 {offsets = [0, 64], sizes = [2, 32], strides = [1, 1]} : vector<2x128xf32> to vector<2x32xf32>
    %482 = math.tanh %481 : vector<2x32xf32>
    %483 = arith.mulf %479, %419 : vector<2x32xf32>
    %484 = arith.mulf %478, %482 : vector<2x32xf32>
    %485 = arith.addf %483, %484 : vector<2x32xf32>
    %486 = math.tanh %485 : vector<2x32xf32>
    %487 = arith.mulf %480, %486 : vector<2x32xf32>
    %c7_i32 = arith.constant 7 : i32
    %488 = arith.index_cast %c7_i32 : i32 to index
    %c0_136 = arith.constant 0 : index
    %c0_137 = arith.constant 0 : index
    %489 = vector.load %arg1[%488, %c0_136, %c0_137] : memref<8x2x128xbf16, #tpu.memory_space<vmem>>, vector<1x2x128xbf16>
    %490 = vector.shape_cast %489 : vector<1x2x128xbf16> to vector<2x128xbf16>
    %491 = arith.extf %490 : vector<2x128xbf16> to vector<2x128xf32>
    %492 = arith.addf %491, %5 : vector<2x128xf32>
    %493 = arith.truncf %445 : vector<2x32xf32> to vector<2x32xbf16>
    %c0_138 = arith.constant 0 : index
    %c0_139 = arith.constant 0 : index
    %494 = vector.load %arg4[%c0_138, %c0_139] : memref<32x128xbf16, #tpu.memory_space<vmem>>, vector<32x128xbf16>
    %cst_140 = arith.constant dense<0.000000e+00> : vector<2x128xf32>
    %495 = tpu.matmul %493, %494, %cst_140 {dimension_numbers = #tpu.dot_dimension_numbers<[1], [0], [0], [1], [0, 0, 1, 1], [], []>} : vector<2x32xbf16>, vector<32x128xbf16>, vector<2x128xf32> -> vector<2x128xf32>
    %496 = arith.addf %492, %495 : vector<2x128xf32>
    %497 = arith.negf %496 : vector<2x128xf32>
    %498 = math.exp %497 : vector<2x128xf32>
    %cst_141 = arith.constant 1.000000e+00 : f32
    %499 = vector.broadcast %cst_141 : f32 to vector<2x128xf32>
    %500 = arith.addf %499, %498 : vector<2x128xf32>
    %501 = arith.divf %499, %500 : vector<2x128xf32>
    %502 = vector.extract_strided_slice %501 {offsets = [0, 0], sizes = [2, 32], strides = [1, 1]} : vector<2x128xf32> to vector<2x32xf32>
    %503 = vector.extract_strided_slice %501 {offsets = [0, 32], sizes = [2, 32], strides = [1, 1]} : vector<2x128xf32> to vector<2x32xf32>
    %504 = vector.extract_strided_slice %501 {offsets = [0, 96], sizes = [2, 32], strides = [1, 1]} : vector<2x128xf32> to vector<2x32xf32>
    %505 = vector.extract_strided_slice %496 {offsets = [0, 64], sizes = [2, 32], strides = [1, 1]} : vector<2x128xf32> to vector<2x32xf32>
    %506 = math.tanh %505 : vector<2x32xf32>
    %507 = arith.mulf %503, %443 : vector<2x32xf32>
    %508 = arith.mulf %502, %506 : vector<2x32xf32>
    %509 = arith.addf %507, %508 : vector<2x32xf32>
    %510 = math.tanh %509 : vector<2x32xf32>
    %511 = arith.mulf %504, %510 : vector<2x32xf32>
    %512 = tpu.concatenate %511, %466 in 1 : vector<2x32xf32>, vector<2x32xf32> -> vector<2x64xf32>
    %513 = arith.truncf %512 : vector<2x64xf32> to vector<2x64xbf16>
    %c0_142 = arith.constant 0 : index
    %c0_143 = arith.constant 0 : index
    %c0_144 = arith.constant 0 : index
    %514 = vector.load %arg3[%c0_142, %c0_143, %c0_144] : memref<2x64x128xbf16, #tpu.memory_space<vmem>>, vector<1x64x128xbf16>
    %515 = vector.shape_cast %514 : vector<1x64x128xbf16> to vector<64x128xbf16>
    %cst_145 = arith.constant dense<0.000000e+00> : vector<2x128xf32>
    %516 = tpu.matmul %513, %515, %cst_145 {dimension_numbers = #tpu.dot_dimension_numbers<[1], [0], [0], [1], [0, 0, 1, 1], [], []>} : vector<2x64xbf16>, vector<64x128xbf16>, vector<2x128xf32> -> vector<2x128xf32>
    %517 = arith.addf %516, %9 : vector<2x128xf32>
    %518 = arith.negf %517 : vector<2x128xf32>
    %519 = math.exp %518 : vector<2x128xf32>
    %cst_146 = arith.constant 1.000000e+00 : f32
    %520 = vector.broadcast %cst_146 : f32 to vector<2x128xf32>
    %521 = arith.addf %520, %519 : vector<2x128xf32>
    %522 = arith.divf %520, %521 : vector<2x128xf32>
    %523 = vector.extract_strided_slice %522 {offsets = [0, 0], sizes = [2, 32], strides = [1, 1]} : vector<2x128xf32> to vector<2x32xf32>
    %524 = vector.extract_strided_slice %522 {offsets = [0, 32], sizes = [2, 32], strides = [1, 1]} : vector<2x128xf32> to vector<2x32xf32>
    %525 = vector.extract_strided_slice %522 {offsets = [0, 96], sizes = [2, 32], strides = [1, 1]} : vector<2x128xf32> to vector<2x32xf32>
    %526 = vector.extract_strided_slice %517 {offsets = [0, 64], sizes = [2, 32], strides = [1, 1]} : vector<2x128xf32> to vector<2x32xf32>
    %527 = math.tanh %526 : vector<2x32xf32>
    %528 = arith.mulf %524, %464 : vector<2x32xf32>
    %529 = arith.mulf %523, %527 : vector<2x32xf32>
    %530 = arith.addf %528, %529 : vector<2x32xf32>
    %531 = math.tanh %530 : vector<2x32xf32>
    %532 = arith.mulf %525, %531 : vector<2x32xf32>
    %533 = tpu.concatenate %532, %487 in 1 : vector<2x32xf32>, vector<2x32xf32> -> vector<2x64xf32>
    %534 = arith.truncf %533 : vector<2x64xf32> to vector<2x64xbf16>
    %c1_147 = arith.constant 1 : index
    %c0_148 = arith.constant 0 : index
    %c0_149 = arith.constant 0 : index
    %535 = vector.load %arg3[%c1_147, %c0_148, %c0_149] : memref<2x64x128xbf16, #tpu.memory_space<vmem>>, vector<1x64x128xbf16>
    %536 = vector.shape_cast %535 : vector<1x64x128xbf16> to vector<64x128xbf16>
    %cst_150 = arith.constant dense<0.000000e+00> : vector<2x128xf32>
    %537 = tpu.matmul %534, %536, %cst_150 {dimension_numbers = #tpu.dot_dimension_numbers<[1], [0], [0], [1], [0, 0, 1, 1], [], []>} : vector<2x64xbf16>, vector<64x128xbf16>, vector<2x128xf32> -> vector<2x128xf32>
    %538 = arith.addf %537, %13 : vector<2x128xf32>
    %539 = arith.negf %538 : vector<2x128xf32>
    %540 = math.exp %539 : vector<2x128xf32>
    %cst_151 = arith.constant 1.000000e+00 : f32
    %541 = vector.broadcast %cst_151 : f32 to vector<2x128xf32>
    %542 = arith.addf %541, %540 : vector<2x128xf32>
    %543 = arith.divf %541, %542 : vector<2x128xf32>
    %544 = vector.extract_strided_slice %543 {offsets = [0, 0], sizes = [2, 32], strides = [1, 1]} : vector<2x128xf32> to vector<2x32xf32>
    %545 = vector.extract_strided_slice %543 {offsets = [0, 32], sizes = [2, 32], strides = [1, 1]} : vector<2x128xf32> to vector<2x32xf32>
    %546 = vector.extract_strided_slice %543 {offsets = [0, 96], sizes = [2, 32], strides = [1, 1]} : vector<2x128xf32> to vector<2x32xf32>
    %547 = vector.extract_strided_slice %538 {offsets = [0, 64], sizes = [2, 32], strides = [1, 1]} : vector<2x128xf32> to vector<2x32xf32>
    %548 = math.tanh %547 : vector<2x32xf32>
    %549 = arith.mulf %545, %485 : vector<2x32xf32>
    %550 = arith.mulf %544, %548 : vector<2x32xf32>
    %551 = arith.addf %549, %550 : vector<2x32xf32>
    %552 = math.tanh %551 : vector<2x32xf32>
    %553 = arith.mulf %546, %552 : vector<2x32xf32>
    %c8_i32 = arith.constant 8 : i32
    %c0_152 = arith.constant 0 : index
    %c0_153 = arith.constant 0 : index
    %c0_154 = arith.constant 0 : index
    %554 = vector.load %arg11[%c0_152, %c0_153, %c0_154] : memref<3x2x32xf32, #tpu.memory_space<vmem>>, vector<1x2x32xf32>
    %555 = vector.shape_cast %554 : vector<1x2x32xf32> to vector<2x32xf32>
    %556 = vector.shape_cast %511 : vector<2x32xf32> to vector<1x2x32xf32>
    tpu.vector_store %arg11[%c0_152, %c0_153, %c0_154], %556 {strides = array<i32>} : memref<3x2x32xf32, #tpu.memory_space<vmem>>, vector<1x2x32xf32>,
    %c0_155 = arith.constant 0 : index
    %c0_156 = arith.constant 0 : index
    %c0_157 = arith.constant 0 : index
    %557 = vector.load %arg12[%c0_155, %c0_156, %c0_157] : memref<3x2x32xf32, #tpu.memory_space<vmem>>, vector<1x2x32xf32>
    %558 = vector.shape_cast %557 : vector<1x2x32xf32> to vector<2x32xf32>
    %559 = vector.shape_cast %509 : vector<2x32xf32> to vector<1x2x32xf32>
    tpu.vector_store %arg12[%c0_155, %c0_156, %c0_157], %559 {strides = array<i32>} : memref<3x2x32xf32, #tpu.memory_space<vmem>>, vector<1x2x32xf32>,
    %c1_158 = arith.constant 1 : index
    %c0_159 = arith.constant 0 : index
    %c0_160 = arith.constant 0 : index
    %560 = vector.load %arg11[%c1_158, %c0_159, %c0_160] : memref<3x2x32xf32, #tpu.memory_space<vmem>>, vector<1x2x32xf32>
    %561 = vector.shape_cast %560 : vector<1x2x32xf32> to vector<2x32xf32>
    %562 = vector.shape_cast %532 : vector<2x32xf32> to vector<1x2x32xf32>
    tpu.vector_store %arg11[%c1_158, %c0_159, %c0_160], %562 {strides = array<i32>} : memref<3x2x32xf32, #tpu.memory_space<vmem>>, vector<1x2x32xf32>,
    %c1_161 = arith.constant 1 : index
    %c0_162 = arith.constant 0 : index
    %c0_163 = arith.constant 0 : index
    %563 = vector.load %arg12[%c1_161, %c0_162, %c0_163] : memref<3x2x32xf32, #tpu.memory_space<vmem>>, vector<1x2x32xf32>
    %564 = vector.shape_cast %563 : vector<1x2x32xf32> to vector<2x32xf32>
    %565 = vector.shape_cast %530 : vector<2x32xf32> to vector<1x2x32xf32>
    tpu.vector_store %arg12[%c1_161, %c0_162, %c0_163], %565 {strides = array<i32>} : memref<3x2x32xf32, #tpu.memory_space<vmem>>, vector<1x2x32xf32>,
    %c2_164 = arith.constant 2 : index
    %c0_165 = arith.constant 0 : index
    %c0_166 = arith.constant 0 : index
    %566 = vector.load %arg11[%c2_164, %c0_165, %c0_166] : memref<3x2x32xf32, #tpu.memory_space<vmem>>, vector<1x2x32xf32>
    %567 = vector.shape_cast %566 : vector<1x2x32xf32> to vector<2x32xf32>
    %568 = vector.shape_cast %553 : vector<2x32xf32> to vector<1x2x32xf32>
    tpu.vector_store %arg11[%c2_164, %c0_165, %c0_166], %568 {strides = array<i32>} : memref<3x2x32xf32, #tpu.memory_space<vmem>>, vector<1x2x32xf32>,
    %c2_167 = arith.constant 2 : index
    %c0_168 = arith.constant 0 : index
    %c0_169 = arith.constant 0 : index
    %569 = vector.load %arg12[%c2_167, %c0_168, %c0_169] : memref<3x2x32xf32, #tpu.memory_space<vmem>>, vector<1x2x32xf32>
    %570 = vector.shape_cast %569 : vector<1x2x32xf32> to vector<2x32xf32>
    %571 = vector.shape_cast %551 : vector<2x32xf32> to vector<1x2x32xf32>
    tpu.vector_store %arg12[%c2_167, %c0_168, %c0_169], %571 {strides = array<i32>} : memref<3x2x32xf32, #tpu.memory_space<vmem>>, vector<1x2x32xf32>,
    %c0_i32_170 = arith.constant 0 : i32
    %572 = arith.cmpi eq, %arg0, %c0_i32_170 : i32
    %573 = arith.extui %572 : i1 to i32
    %c0_i32_171 = arith.constant 0 : i32
    %574 = arith.cmpi ne, %573, %c0_i32_171 : i32
    scf.if %574 {
      %575 = arith.truncf %553 : vector<2x32xf32> to vector<2x32xbf16>
      %c0_172 = arith.constant 0 : index
      %c0_173 = arith.constant 0 : index
      %576 = vector.load %arg6[%c0_172, %c0_173] : memref<32x128xbf16, #tpu.memory_space<vmem>>, vector<32x128xbf16>
      %cst_174 = arith.constant dense<0.000000e+00> : vector<2x128xf32>
      %577 = tpu.matmul %575, %576, %cst_174 {dimension_numbers = #tpu.dot_dimension_numbers<[1], [0], [0], [1], [0, 0, 1, 1], [], []>} : vector<2x32xbf16>, vector<32x128xbf16>, vector<2x128xf32> -> vector<2x128xf32>
      %c0_175 = arith.constant 0 : index
      %c0_176 = arith.constant 0 : index
      %578 = vector.load %arg7[%c0_175, %c0_176] : memref<1x128xf32, #tpu.memory_space<vmem>>, vector<1x128xf32>
      %579 = vector.broadcast %578 : vector<1x128xf32> to vector<2x128xf32>
      %580 = arith.addf %577, %579 : vector<2x128xf32>
      %cst_177 = arith.constant 0.000000e+00 : f32
      %581 = vector.broadcast %cst_177 : f32 to vector<2x128xf32>
      %582 = arith.maximumf %580, %581 : vector<2x128xf32>
      %583 = arith.truncf %582 : vector<2x128xf32> to vector<2x128xbf16>
      %c0_178 = arith.constant 0 : index
      %c0_179 = arith.constant 0 : index
      %584 = vector.load %arg8[%c0_178, %c0_179] : memref<128x8xbf16, #tpu.memory_space<vmem>>, vector<128x8xbf16>
      %cst_180 = arith.constant dense<0.000000e+00> : vector<2x8xf32>
      %585 = tpu.matmul %583, %584, %cst_180 {dimension_numbers = #tpu.dot_dimension_numbers<[1], [0], [0], [1], [0, 0, 1, 1], [], []>} : vector<2x128xbf16>, vector<128x8xbf16>, vector<2x8xf32> -> vector<2x8xf32>
      %c0_181 = arith.constant 0 : index
      %c0_182 = arith.constant 0 : index
      %586 = vector.load %arg9[%c0_181, %c0_182] : memref<1x8xf32, #tpu.memory_space<vmem>>, vector<1x8xf32>
      %587 = vector.broadcast %586 : vector<1x8xf32> to vector<2x8xf32>
      %588 = arith.addf %585, %587 : vector<2x8xf32>
      %cst_183 = arith.constant dense<0xFF800000> : vector<2xf32>
      %589 = vector.multi_reduction <maximumf>, %588, %cst_183 [1] : vector<2x8xf32> to vector<2xf32>
      %590 = vector.shape_cast %589 : vector<2xf32> to vector<2x1xf32>
      %591 = vector.broadcast %590 : vector<2x1xf32> to vector<2x8xf32>
      %592 = arith.subf %588, %591 : vector<2x8xf32>
      %593 = math.exp %592 : vector<2x8xf32>
      %cst_184 = arith.constant dense<0.000000e+00> : vector<2xf32>
      %594 = vector.multi_reduction <add>, %593, %cst_184 [1] : vector<2x8xf32> to vector<2xf32>
      %595 = vector.shape_cast %594 : vector<2xf32> to vector<2x1xf32>
      %596 = vector.broadcast %595 : vector<2x1xf32> to vector<2x8xf32>
      %597 = arith.divf %593, %596 : vector<2x8xf32>
      %c0_185 = arith.constant 0 : index
      %c0_186 = arith.constant 0 : index
      %598 = vector.load %arg10[%c0_185, %c0_186] : memref<2x8xf32, #tpu.memory_space<vmem>>, vector<2x8xf32>
      tpu.vector_store %arg10[%c0_185, %c0_186], %597 {strides = array<i32>} : memref<2x8xf32, #tpu.memory_space<vmem>>, vector<2x8xf32>,
    } else {
    }
    return
  }
  func.func @transform_0(%arg0: i32) -> (i32, i32, i32) {
    %c0_i32 = arith.constant 0 : i32
    %c0_i32_0 = arith.constant 0 : i32
    %c0_i32_1 = arith.constant 0 : i32
    return %arg0, %c0_i32, %c0_i32_0 : i32, i32, i32
  }
  func.func @transform_1(%arg0: i32) -> (i32, i32) {
    %c0_i32 = arith.constant 0 : i32
    %c0_i32_0 = arith.constant 0 : i32
    %c0_i32_1 = arith.constant 0 : i32
    return %c0_i32, %c0_i32_0 : i32, i32
  }
  func.func @transform_2(%arg0: i32) -> (i32, i32, i32) {
    %c0_i32 = arith.constant 0 : i32
    %c0_i32_0 = arith.constant 0 : i32
    %c0_i32_1 = arith.constant 0 : i32
    %c0_i32_2 = arith.constant 0 : i32
    return %c0_i32, %c0_i32_0, %c0_i32_1 : i32, i32, i32
  }
  func.func @transform_3(%arg0: i32) -> (i32, i32) {
    %c0_i32 = arith.constant 0 : i32
    %c0_i32_0 = arith.constant 0 : i32
    %c0_i32_1 = arith.constant 0 : i32
    return %c0_i32, %c0_i32_0 : i32, i32
  }
  func.func @transform_4(%arg0: i32) -> (i32, i32, i32) {
    %c0_i32 = arith.constant 0 : i32
    %c0_i32_0 = arith.constant 0 : i32
    %c0_i32_1 = arith.constant 0 : i32
    %c0_i32_2 = arith.constant 0 : i32
    return %c0_i32, %c0_i32_0, %c0_i32_1 : i32, i32, i32
  }
  func.func @transform_5(%arg0: i32) -> (i32, i32) {
    %c0_i32 = arith.constant 0 : i32
    %c0_i32_0 = arith.constant 0 : i32
    %c0_i32_1 = arith.constant 0 : i32
    return %c0_i32, %c0_i32_0 : i32, i32
  }
  func.func @transform_6(%arg0: i32) -> (i32, i32) {
    %c0_i32 = arith.constant 0 : i32
    %c0_i32_0 = arith.constant 0 : i32
    %c0_i32_1 = arith.constant 0 : i32
    return %c0_i32, %c0_i32_0 : i32, i32
  }
  func.func @transform_7(%arg0: i32) -> (i32, i32) {
    %c0_i32 = arith.constant 0 : i32
    %c0_i32_0 = arith.constant 0 : i32
    %c0_i32_1 = arith.constant 0 : i32
    return %c0_i32, %c0_i32_0 : i32, i32
  }
  func.func @transform_8(%arg0: i32) -> (i32, i32) {
    %c0_i32 = arith.constant 0 : i32
    %c0_i32_0 = arith.constant 0 : i32
    %c0_i32_1 = arith.constant 0 : i32
    return %c0_i32, %c0_i32_0 : i32, i32
  }
  func.func @transform_9(%arg0: i32) -> (i32, i32) {
    %c0_i32 = arith.constant 0 : i32
    %c0_i32_0 = arith.constant 0 : i32
    %c0_i32_1 = arith.constant 0 : i32
    return %c0_i32, %c0_i32_0 : i32, i32
  }
}

</mosaic_0001>

<llo_original>
// kernel: lstm_model_forward.1
$region0: #{lstm_model_forward.1}
  #allocation0 [shape = 'u32[]', space=smem, size = 0x4, offset = 0x4, fixed_abs, tag = 'smem constant byte address 0x4 - core index']
  #allocation1 [shape = 'u32[144,128]{1,0:T(1,128)}', space=vmem, size = 0x12000, scoped, tag = 'internal scratch']
  #allocation2 [shape = 'f32[3,2,32]{2,1,0:T(2,128)}', space=vmem, size = 0xc00, scoped, tag = 'scratch operand']
  #allocation3 [shape = 'f32[3,2,32]{2,1,0:T(2,128)}', space=vmem, size = 0xc00, scoped, tag = 'scratch operand']
  %s0 = inlined_call_operand.vmem [shape: bf16[8,2,128], index: 0, kind: input, shape index: {}]
  %s1 = inlined_call_operand.vmem [shape: f32[1,128], index: 1, kind: input, shape index: {}]
  %s2 = inlined_call_operand.vmem [shape: bf16[2,64,128], index: 2, kind: input, shape index: {}]
  %s3 = inlined_call_operand.vmem [shape: bf16[32,128], index: 3, kind: input, shape index: {}]
  %s4 = inlined_call_operand.vmem [shape: f32[2,1,128], index: 4, kind: input, shape index: {}]
  %s5 = inlined_call_operand.vmem [shape: bf16[32,128], index: 5, kind: input, shape index: {}]
  %s6 = inlined_call_operand.vmem [shape: f32[1,128], index: 6, kind: input, shape index: {}]
  %s7 = inlined_call_operand.vmem [shape: bf16[128,8], index: 7, kind: input, shape index: {}]
  %s8 = inlined_call_operand.vmem [shape: f32[1,8], index: 8, kind: input, shape index: {}]
  %s9 = inlined_call_operand.hbm [shape: f32[2,8], index: 9, kind: output, shape index: {}]
  %s10 = sld [smem:[#allocation0]]
  $region54: #{lstm_model_forward.1} parent=0
    _
  %s12 = ssub.s32 1, %s10
  %s13 = scalar_select 0, %s12, %s10
  $region1: #{lstm_model_forward.1} parent=0
    #allocation4 [shape = 'u8[1024]{0}', space=vmem, size = 0x400, scoped, tag = 'output window, operand 0, single buffered']
    #allocation5 [shape = 's32[1]{0}', space=sflag, size = 0x4, scoped, tag = 'scoped memory for lstm_model_forward.1']
    %14 = vsyncpa [#allocation5], 0
    // Predicated region
    $region2: #{lstm_model_forward.1} parent=1 // pred_check
      _
    $region3: #{lstm_model_forward.1} parent=1 // pred_check_branch
      %16 = sbr.rel (0) target = $region5
    $region4: #{lstm_model_forward.1} parent=1 // pred_region
      _
    $region5: #{lstm_model_forward.1} parent=1 // pred_fallthru
      _
    // Predicated region
    $region6: #{lstm_model_forward.1} parent=1 // pred_check
      _
    $region7: #{lstm_model_forward.1} parent=1 // pred_check_branch
      %18 = sbr.rel (0) target = $region9
    $region8: #{lstm_model_forward.1} parent=1 // pred_region
      _
    $region9: #{lstm_model_forward.1} parent=1 // pred_fallthru
      _
    // Predicated region
    $region10: #{lstm_model_forward.1} parent=1 // pred_check
      _
    $region11: #{lstm_model_forward.1} parent=1 // pred_check_branch
      %20 = sbr.rel (0) target = $region13
    $region12: #{lstm_model_forward.1} parent=1 // pred_region
      _
    $region13: #{lstm_model_forward.1} parent=1 // pred_fallthru
      _
    // Predicated region
    $region14: #{lstm_model_forward.1} parent=1 // pred_check
      _
    $region15: #{lstm_model_forward.1} parent=1 // pred_check_branch
      %22 = sbr.rel (0) target = $region17
    $region16: #{lstm_model_forward.1} parent=1 // pred_region
      _
    $region17: #{lstm_model_forward.1} parent=1 // pred_fallthru
      _
    // Predicated region
    $region18: #{lstm_model_forward.1} parent=1 // pred_check
      _
    $region19: #{lstm_model_forward.1} parent=1 // pred_check_branch
      %24 = sbr.rel (0) target = $region21
    $region20: #{lstm_model_forward.1} parent=1 // pred_region
      _
    $region21: #{lstm_model_forward.1} parent=1 // pred_fallthru
      _
    // Predicated region
    $region22: #{lstm_model_forward.1} parent=1 // pred_check
      _
    $region23: #{lstm_model_forward.1} parent=1 // pred_check_branch
      %26 = sbr.rel (0) target = $region25
    $region24: #{lstm_model_forward.1} parent=1 // pred_region
      _
    $region25: #{lstm_model_forward.1} parent=1 // pred_fallthru
      _
    // Predicated region
    $region26: #{lstm_model_forward.1} parent=1 // pred_check
      _
    $region27: #{lstm_model_forward.1} parent=1 // pred_check_branch
      %28 = sbr.rel (0) target = $region29
    $region28: #{lstm_model_forward.1} parent=1 // pred_region
      _
    $region29: #{lstm_model_forward.1} parent=1 // pred_fallthru
      _
    // Predicated region
    $region30: #{lstm_model_forward.1} parent=1 // pred_check
      _
    $region31: #{lstm_model_forward.1} parent=1 // pred_check_branch
      %30 = sbr.rel (0) target = $region33
    $region32: #{lstm_model_forward.1} parent=1 // pred_region
      _
    $region33: #{lstm_model_forward.1} parent=1 // pred_fallthru
      _
    // Predicated region
    $region34: #{lstm_model_forward.1} parent=1 // pred_check
      _
    $region35: #{lstm_model_forward.1} parent=1 // pred_check_branch
      %32 = sbr.rel (0) target = $region37
    $region36: #{lstm_model_forward.1} parent=1 // pred_region
      _
    $region37: #{lstm_model_forward.1} parent=1 // pred_fallthru
      _
    %p34 = scmp.eq.s32.totalorder 0, 0
    // Predicated region
    $region38: #{lstm_model_forward.1} parent=1 // pred_check
      %p35 = pneg %p34
    $region39: #{lstm_model_forward.1} parent=1 // pred_check_branch
      %37 = sbr.rel (%p35) target = $region41
    $region40: #{lstm_model_forward.1} parent=1 // pred_region
      %vm38 = vcmask 254976
      %39 = vst.msk [vmem:[#allocation2] sm:$0x3] %vm38, 0.0
      %40 = vst.msk [vmem:[#allocation2 + $0x2] sm:$0x3] %vm38, 0.0
      %41 = vst.msk [vmem:[#allocation2 + $0x4] sm:$0x3] %vm38, 0.0
      %42 = vst.msk [vmem:[#allocation3] sm:$0x3] %vm38, 0.0
      %43 = vst.msk [vmem:[#allocation3 + $0x2] sm:$0x3] %vm38, 0.0
      %44 = vst.msk [vmem:[#allocation3 + $0x4] sm:$0x3] %vm38, 0.0
    $region41: #{lstm_model_forward.1} parent=1 // pred_fallthru
      _
    %v45 = vld [vmem:[%s1] sm:$0x1]
    %v47 = vlaneseq
    %v48 = vshrl.u32 %v47, 7
    %v49 = vsub.s32 0, %v48
    %v50 = vrot.slane %v45, %v49
    %v52 = vld [vmem:[%s4] sm:$0x1]
    %v54 = vlaneseq
    %v55 = vshrl.u32 %v54, 7
    %v56 = vsub.s32 0, %v55
    %v57 = vrot.slane %v52, %v56
    %s59 = scalar_lea.vmem %s4, 1
    %v60 = vld [vmem:[%s59] sm:$0x1]
    %v62 = vlaneseq
    %v63 = vshrl.u32 %v62, 7
    %v64 = vsub.s32 0, %v63
    %v65 = vrot.slane %v60, %v64
    %v67 = vld [vmem:[#allocation2] sm:$0x3]
    %s68 = scalar_lea.vmem [#allocation2], 2
    %v69 = vld [vmem:[%s68] sm:$0x3]
    %s70 = scalar_lea.vmem [#allocation2], 4
    %v71 = vld [vmem:[%s70] sm:$0x3]
    %v72 = vld [vmem:[#allocation3] sm:$0x3]
    %s73 = scalar_lea.vmem [#allocation3], 2
    %v74 = vld [vmem:[%s73] sm:$0x3]
    %s75 = scalar_lea.vmem [#allocation3], 4
    %v76 = vld [vmem:[%s75] sm:$0x3]
    %v77 = vld [vmem:[%s0] sm:$0x1]
    %v78 = vunpack.c.l.bf16 %v77
    %v79 = vadd.f32 %v78, %v50
    %v80 = vpack.c.bf16 %v67, %v67
    %v81 = vld [vmem:[%s3] sm:$0xf]
    %v82 = vld [vmem:[%s3 + $0x4] sm:$0xf]
    %v83 = vld [vmem:[%s3 + $0x8] sm:$0xf]
    %v84 = vld [vmem:[%s3 + $0xc] sm:$0xf]
    %v89 = vunpack.c.l.b16 %v81
    %v90 = vunpack.c.l.b16 %v82
    %v91 = vunpack.c.l.b16 %v83
    %v92 = vunpack.c.l.b16 %v84
    %v93 = vpack.c.b16 %v90, %v89
    %v94 = vpack.c.b16 %v92, %v91
    %vm97 = vcmask 261120
    %v99 = vsel %vm97, %v80, 0
    %101 = vmatprep.subr.bf16.mxu0 0
    %102 = vmatpush1.bf16.msra.mxu0 0
    %103 = vmatprep.subr.bf16.mxu0 0
    %104 = vmatpush1.bf16.msra.mxu0 0
    %105 = vmatprep.subr.bf16.mxu0 0
    %106 = vmatpush1.bf16.msra.mxu0 0
    %107 = vmatprep.subr.bf16.mxu0 0
    %108 = vmatpush1.bf16.msra.mxu0 0
    %109 = vmatprep.subr.bf16.mxu0 0
    %110 = vmatpush1.bf16.msra.mxu0 0
    %111 = vmatprep.subr.bf16.mxu0 0
    %112 = vmatpush1.bf16.msra.mxu0 0
    %113 = vmatprep.subr.bf16.mxu0 0
    %114 = vmatpush1.bf16.msra.mxu0 %v94
    %115 = vmatprep.subr.bf16.mxu0 0
    %116 = vmatpush1.bf16.msra.mxu0 %v93
    %117 = vmatprep.subr.bf16.mxu0 0
    %118 = vmatpush2.bf16.msra.mxu0 0
    %119 = vmatprep.subr.bf16.mxu0 0
    %120 = vmatpush2.bf16.msra.mxu0 0
    %121 = vmatprep.subr.bf16.mxu0 0
    %122 = vmatpush2.bf16.msra.mxu0 0
    %123 = vmatprep.subr.bf16.mxu0 0
    %124 = vmatpush2.bf16.msra.mxu0 0
    %125 = vmatprep.subr.bf16.mxu0 0
    %126 = vmatpush2.bf16.msra.mxu0 0
    %127 = vmatprep.subr.bf16.mxu0 0
    %128 = vmatpush2.bf16.msra.mxu0 0
    %129 = vmatprep.subr.bf16.mxu0 0
    %130 = vmatpush2.bf16.msra.mxu0 0
    %131 = vmatprep.subr.bf16.mxu0 0
    %132 = vmatpush2.bf16.msra.mxu0 0
    %133 = vmatprep.mubr.bf16.mxu0 0
    %134 = vmatmul.mubr.bf16.gmra.mxu0 %v99
    %v135 = vpop.f32.mrf.mxu0
    %v136 = vadd.f32 0.0, %v135
    %v137 = vpop.f32.mrf.mxu0
    %v138 = vpop.f32.mrf.mxu0
    %v139 = vpop.f32.mrf.mxu0
    %140 = vdwg.mxu0
    %v141 = vadd.f32 %v79, %v136
    %v142 = vxor.u32 %v141, 2147483648
    %v143 = vmul.f32 %v142, 1.442695
    %v144 = vpow.pop %v143
    %v145 = vadd.f32 %v144, 1.0
    %v146 = vrcp.pop %v145
    %v147 = vmul.f32 1.0, %v146
    %v148 = vtanh.pop %v141
    %v151 = vunpack.c.l.s4 1983009808
    %v152 = vunpack.c.0.s8 %v151
    %v153 = vlaneseq
    %v154 = vshrl.u32 %v153, 7
    %v155 = vsub.s32 %v152, %v154
    %v156 = vrot.slane %v72, %v155
    %157 = vrot.lane.b32.xlu0 %v156, 32
    %v158 = vpop.permute.xlu0 %157
    %v160 = vmul.f32 %v147, %v158
    %162 = vrot.lane.b32.xlu0 %v148, 64
    %v163 = vpop.permute.xlu0 %162
    %v165 = vmul.f32 %v147, %v163
    %167 = vrot.lane.b32.xlu0 %v165, 32
    %v168 = vpop.permute.xlu0 %167
    %v170 = vadd.f32 %v160, %v168
    %v171 = vtanh.pop %v170
    %173 = vrot.lane.b32.xlu0 %v171, 64
    %v174 = vpop.permute.xlu0 %173
    %v176 = vmul.f32 %v147, %v174
    %v179 = vunpack.c.l.s4 1983009808
    %v180 = vunpack.c.0.s8 %v179
    %v181 = vlaneseq
    %v182 = vshrl.u32 %v181, 7
    %v183 = vsub.s32 %v180, %v182
    %v184 = vrot.slane %v176, %v183
    %185 = vrot.lane.b32.xlu0 %v184, 32
    %v186 = vpop.permute.xlu0 %185
    %189 = vrot.lane.b32.xlu0 %v69, 32
    %v190 = vpop.permute.xlu0 %189
    %v192 = vsel %vm97, %v186, %v190
    %v193 = vpack.c.bf16 %v192, %v192
    %v194 = vld [vmem:[%s2] sm:$0xf]
    %v195 = vld [vmem:[%s2 + $0x4] sm:$0xf]
    %v196 = vld [vmem:[%s2 + $0x8] sm:$0xf]
    %v197 = vld [vmem:[%s2 + $0xc] sm:$0xf]
    %v198 = vld [vmem:[%s2 + $0x10] sm:$0xf]
    %v199 = vld [vmem:[%s2 + $0x14] sm:$0xf]
    %v200 = vld [vmem:[%s2 + $0x18] sm:$0xf]
    %v201 = vld [vmem:[%s2 + $0x1c] sm:$0xf]
    %v210 = vunpack.c.l.b16 %v194
    %v211 = vunpack.c.l.b16 %v195
    %v212 = vunpack.c.l.b16 %v196
    %v213 = vunpack.c.l.b16 %v197
    %v214 = vunpack.c.l.b16 %v198
    %v215 = vunpack.c.l.b16 %v199
    %v216 = vunpack.c.l.b16 %v200
    %v217 = vunpack.c.l.b16 %v201
    %v218 = vpack.c.b16 %v211, %v210
    %v219 = vpack.c.b16 %v213, %v212
    %v220 = vpack.c.b16 %v215, %v214
    %v221 = vpack.c.b16 %v217, %v216
    %vm226 = vcmask 523264
    %v228 = vsel %vm226, %v193, 0
    %230 = vmatprep.subr.bf16.mxu0 0
    %231 = vmatpush1.bf16.msra.mxu0 0
    %232 = vmatprep.subr.bf16.mxu0 0
    %233 = vmatpush1.bf16.msra.mxu0 0
    %234 = vmatprep.subr.bf16.mxu0 0
    %235 = vmatpush1.bf16.msra.mxu0 0
    %236 = vmatprep.subr.bf16.mxu0 0
    %237 = vmatpush1.bf16.msra.mxu0 0
    %238 = vmatprep.subr.bf16.mxu0 0
    %239 = vmatpush1.bf16.msra.mxu0 %v221
    %240 = vmatprep.subr.bf16.mxu0 0
    %241 = vmatpush1.bf16.msra.mxu0 %v220
    %242 = vmatprep.subr.bf16.mxu0 0
    %243 = vmatpush1.bf16.msra.mxu0 %v219
    %244 = vmatprep.subr.bf16.mxu0 0
    %245 = vmatpush1.bf16.msra.mxu0 %v218
    %246 = vmatprep.subr.bf16.mxu0 0
    %247 = vmatpush2.bf16.msra.mxu0 0
    %248 = vmatprep.subr.bf16.mxu0 0
    %249 = vmatpush2.bf16.msra.mxu0 0
    %250 = vmatprep.subr.bf16.mxu0 0
    %251 = vmatpush2.bf16.msra.mxu0 0
    %252 = vmatprep.subr.bf16.mxu0 0
    %253 = vmatpush2.bf16.msra.mxu0 0
    %254 = vmatprep.subr.bf16.mxu0 0
    %255 = vmatpush2.bf16.msra.mxu0 0
    %256 = vmatprep.subr.bf16.mxu0 0
    %257 = vmatpush2.bf16.msra.mxu0 0
    %258 = vmatprep.subr.bf16.mxu0 0
    %259 = vmatpush2.bf16.msra.mxu0 0
    %260 = vmatprep.subr.bf16.mxu0 0
    %261 = vmatpush2.bf16.msra.mxu0 0
    %262 = vmatprep.mubr.bf16.mxu0 0
    %263 = vmatmul.mubr.bf16.gmra.mxu0 %v228
    %v264 = vpop.f32.mrf.mxu0
    %v265 = vadd.f32 %v57, %v264
    %v266 = vpop.f32.mrf.mxu0
    %v267 = vpop.f32.mrf.mxu0
    %v268 = vpop.f32.mrf.mxu0
    %269 = vdwg.mxu0
    %v270 = vxor.u32 %v265, 2147483648
    %v271 = vmul.f32 %v270, 1.442695
    %v272 = vpow.pop %v271
    %v273 = vadd.f32 %v272, 1.0
    %v274 = vrcp.pop %v273
    %v275 = vmul.f32 1.0, %v274
    %v276 = vtanh.pop %v265
    %278 = vrot.lane.b32.xlu0 %v74, 32
    %v279 = vpop.permute.xlu0 %278
    %v281 = vmul.f32 %v275, %v279
    %283 = vrot.lane.b32.xlu0 %v276, 64
    %v284 = vpop.permute.xlu0 %283
    %v286 = vmul.f32 %v275, %v284
    %288 = vrot.lane.b32.xlu0 %v286, 32
    %v289 = vpop.permute.xlu0 %288
    %v291 = vadd.f32 %v281, %v289
    %v292 = vtanh.pop %v291
    %294 = vrot.lane.b32.xlu0 %v292, 64
    %v295 = vpop.permute.xlu0 %294
    %v297 = vmul.f32 %v275, %v295
    %299 = vrot.lane.b32.xlu0 %v297, 32
    %v300 = vpop.permute.xlu0 %299
    %303 = vrot.lane.b32.xlu0 %v71, 32
    %v304 = vpop.permute.xlu0 %303
    %v306 = vsel %vm97, %v300, %v304
    %v307 = vpack.c.bf16 %v306, %v306
    %s308 = scalar_lea.vmem %s2, 32
    %v309 = vld [vmem:[%s308] sm:$0xf]
    %v310 = vld [vmem:[%s308 + $0x4] sm:$0xf]
    %v311 = vld [vmem:[%s308 + $0x8] sm:$0xf]
    %v312 = vld [vmem:[%s308 + $0xc] sm:$0xf]
    %v313 = vld [vmem:[%s308 + $0x10] sm:$0xf]
    %v314 = vld [vmem:[%s308 + $0x14] sm:$0xf]
    %v315 = vld [vmem:[%s308 + $0x18] sm:$0xf]
    %v316 = vld [vmem:[%s308 + $0x1c] sm:$0xf]
    %v325 = vunpack.c.l.b16 %v309
    %v326 = vunpack.c.l.b16 %v310
    %v327 = vunpack.c.l.b16 %v311
    %v328 = vunpack.c.l.b16 %v312
    %v329 = vunpack.c.l.b16 %v313
    %v330 = vunpack.c.l.b16 %v314
    %v331 = vunpack.c.l.b16 %v315
    %v332 = vunpack.c.l.b16 %v316
    %v333 = vpack.c.b16 %v326, %v325
    %v334 = vpack.c.b16 %v328, %v327
    %v335 = vpack.c.b16 %v330, %v329
    %v336 = vpack.c.b16 %v332, %v331
    %v342 = vsel %vm226, %v307, 0
    %344 = vmatprep.subr.bf16.mxu0 0
    %345 = vmatpush1.bf16.msra.mxu0 0
    %346 = vmatprep.subr.bf16.mxu0 0
    %347 = vmatpush1.bf16.msra.mxu0 0
    %348 = vmatprep.subr.bf16.mxu0 0
    %349 = vmatpush1.bf16.msra.mxu0 0
    %350 = vmatprep.subr.bf16.mxu0 0
    %351 = vmatpush1.bf16.msra.mxu0 0
    %352 = vmatprep.subr.bf16.mxu0 0
    %353 = vmatpush1.bf16.msra.mxu0 %v336
    %354 = vmatprep.subr.bf16.mxu0 0
    %355 = vmatpush1.bf16.msra.mxu0 %v335
    %356 = vmatprep.subr.bf16.mxu0 0
    %357 = vmatpush1.bf16.msra.mxu0 %v334
    %358 = vmatprep.subr.bf16.mxu0 0
    %359 = vmatpush1.bf16.msra.mxu0 %v333
    %360 = vmatprep.subr.bf16.mxu0 0
    %361 = vmatpush2.bf16.msra.mxu0 0
    %362 = vmatprep.subr.bf16.mxu0 0
    %363 = vmatpush2.bf16.msra.mxu0 0
    %364 = vmatprep.subr.bf16.mxu0 0
    %365 = vmatpush2.bf16.msra.mxu0 0
    %366 = vmatprep.subr.bf16.mxu0 0
    %367 = vmatpush2.bf16.msra.mxu0 0
    %368 = vmatprep.subr.bf16.mxu0 0
    %369 = vmatpush2.bf16.msra.mxu0 0
    %370 = vmatprep.subr.bf16.mxu0 0
    %371 = vmatpush2.bf16.msra.mxu0 0
    %372 = vmatprep.subr.bf16.mxu0 0
    %373 = vmatpush2.bf16.msra.mxu0 0
    %374 = vmatprep.subr.bf16.mxu0 0
    %375 = vmatpush2.bf16.msra.mxu0 0
    %376 = vmatprep.mubr.bf16.mxu0 0
    %377 = vmatmul.mubr.bf16.gmra.mxu0 %v342
    %v378 = vpop.f32.mrf.mxu0
    %v379 = vadd.f32 %v65, %v378
    %v380 = vpop.f32.mrf.mxu0
    %v381 = vpop.f32.mrf.mxu0
    %v382 = vpop.f32.mrf.mxu0
    %383 = vdwg.mxu0
    %v384 = vxor.u32 %v379, 2147483648
    %v385 = vmul.f32 %v384, 1.442695
    %v386 = vpow.pop %v385
    %v387 = vadd.f32 %v386, 1.0
    %v388 = vrcp.pop %v387
    %v389 = vmul.f32 1.0, %v388
    %v390 = vtanh.pop %v379
    %392 = vrot.lane.b32.xlu0 %v76, 32
    %v393 = vpop.permute.xlu0 %392
    %v395 = vmul.f32 %v389, %v393
    %397 = vrot.lane.b32.xlu0 %v390, 64
    %v398 = vpop.permute.xlu0 %397
    %v400 = vmul.f32 %v389, %v398
    %402 = vrot.lane.b32.xlu0 %v400, 32
    %v403 = vpop.permute.xlu0 %402
    %v405 = vadd.f32 %v395, %v403
    %v406 = vtanh.pop %v405
    %408 = vrot.lane.b32.xlu0 %v406, 64
    %v409 = vpop.permute.xlu0 %408
    %v411 = vmul.f32 %v389, %v409
    %s412 = scalar_lea.vmem %s0, 1
    %v413 = vld [vmem:[%s412] sm:$0x1]
    %v414 = vunpack.c.l.bf16 %v413
    %v415 = vadd.f32 %v414, %v50
    %v416 = vpack.c.bf16 %v176, %v176
    %418 = vrot.lane.b32.xlu0 %v416, 32
    %v419 = vpop.permute.xlu0 %418
    %v421 = vsel %vm97, %v419, 0
    %423 = vmatprep.subr.bf16.mxu0 0
    %424 = vmatpush1.bf16.msra.mxu0 0
    %425 = vmatprep.subr.bf16.mxu0 0
    %426 = vmatpush1.bf16.msra.mxu0 0
    %427 = vmatprep.subr.bf16.mxu0 0
    %428 = vmatpush1.bf16.msra.mxu0 0
    %429 = vmatprep.subr.bf16.mxu0 0
    %430 = vmatpush1.bf16.msra.mxu0 0
    %431 = vmatprep.subr.bf16.mxu0 0
    %432 = vmatpush1.bf16.msra.mxu0 0
    %433 = vmatprep.subr.bf16.mxu0 0
    %434 = vmatpush1.bf16.msra.mxu0 0
    %435 = vmatprep.subr.bf16.mxu0 0
    %436 = vmatpush1.bf16.msra.mxu0 %v94
    %437 = vmatprep.subr.bf16.mxu0 0
    %438 = vmatpush1.bf16.msra.mxu0 %v93
    %439 = vmatprep.subr.bf16.mxu0 0
    %440 = vmatpush2.bf16.msra.mxu0 0
    %441 = vmatprep.subr.bf16.mxu0 0
    %442 = vmatpush2.bf16.msra.mxu0 0
    %443 = vmatprep.subr.bf16.mxu0 0
    %444 = vmatpush2.bf16.msra.mxu0 0
    %445 = vmatprep.subr.bf16.mxu0 0
    %446 = vmatpush2.bf16.msra.mxu0 0
    %447 = vmatprep.subr.bf16.mxu0 0
    %448 = vmatpush2.bf16.msra.mxu0 0
    %449 = vmatprep.subr.bf16.mxu0 0
    %450 = vmatpush2.bf16.msra.mxu0 0
    %451 = vmatprep.subr.bf16.mxu0 0
    %452 = vmatpush2.bf16.msra.mxu0 0
    %453 = vmatprep.subr.bf16.mxu0 0
    %454 = vmatpush2.bf16.msra.mxu0 0
    %455 = vmatprep.mubr.bf16.mxu0 0
    %456 = vmatmul.mubr.bf16.gmra.mxu0 %v421
    %v457 = vpop.f32.mrf.mxu0
    %v458 = vadd.f32 0.0, %v457
    %v459 = vpop.f32.mrf.mxu0
    %v460 = vpop.f32.mrf.mxu0
    %v461 = vpop.f32.mrf.mxu0
    %462 = vdwg.mxu0
    %v463 = vadd.f32 %v415, %v458
    %v464 = vxor.u32 %v463, 2147483648
    %v465 = vmul.f32 %v464, 1.442695
    %v466 = vpow.pop %v465
    %v467 = vadd.f32 %v466, 1.0
    %v468 = vrcp.pop %v467
    %v469 = vmul.f32 1.0, %v468
    %v470 = vtanh.pop %v463
    %v471 = vmul.f32 %v469, %v170
    %473 = vrot.lane.b32.xlu0 %v470, 64
    %v474 = vpop.permute.xlu0 %473
    %v476 = vmul.f32 %v469, %v474
    %478 = vrot.lane.b32.xlu0 %v476, 32
    %v479 = vpop.permute.xlu0 %478
    %v481 = vadd.f32 %v471, %v479
    %v482 = vtanh.pop %v481
    %484 = vrot.lane.b32.xlu0 %v482, 64
    %v485 = vpop.permute.xlu0 %484
    %v487 = vmul.f32 %v469, %v485
    %v490 = vunpack.c.l.s4 1983009808
    %v491 = vunpack.c.0.s8 %v490
    %v492 = vlaneseq
    %v493 = vshrl.u32 %v492, 7
    %v494 = vsub.s32 %v491, %v493
    %v495 = vrot.slane %v487, %v494
    %496 = vrot.lane.b32.xlu0 %v495, 32
    %v497 = vpop.permute.xlu0 %496
    %499 = vrot.lane.b32.xlu0 %v297, 64
    %v500 = vpop.permute.xlu0 %499
    %v502 = vsel %vm97, %v497, %v500
    %v503 = vpack.c.bf16 %v502, %v502
    %v505 = vsel %vm226, %v503, 0
    %507 = vmatprep.subr.bf16.mxu0 0
    %508 = vmatpush1.bf16.msra.mxu0 0
    %509 = vmatprep.subr.bf16.mxu0 0
    %510 = vmatpush1.bf16.msra.mxu0 0
    %511 = vmatprep.subr.bf16.mxu0 0
    %512 = vmatpush1.bf16.msra.mxu0 0
    %513 = vmatprep.subr.bf16.mxu0 0
    %514 = vmatpush1.bf16.msra.mxu0 0
    %515 = vmatprep.subr.bf16.mxu0 0
    %516 = vmatpush1.bf16.msra.mxu0 %v221
    %517 = vmatprep.subr.bf16.mxu0 0
    %518 = vmatpush1.bf16.msra.mxu0 %v220
    %519 = vmatprep.subr.bf16.mxu0 0
    %520 = vmatpush1.bf16.msra.mxu0 %v219
    %521 = vmatprep.subr.bf16.mxu0 0
    %522 = vmatpush1.bf16.msra.mxu0 %v218
    %523 = vmatprep.subr.bf16.mxu0 0
    %524 = vmatpush2.bf16.msra.mxu0 0
    %525 = vmatprep.subr.bf16.mxu0 0
    %526 = vmatpush2.bf16.msra.mxu0 0
    %527 = vmatprep.subr.bf16.mxu0 0
    %528 = vmatpush2.bf16.msra.mxu0 0
    %529 = vmatprep.subr.bf16.mxu0 0
    %530 = vmatpush2.bf16.msra.mxu0 0
    %531 = vmatprep.subr.bf16.mxu0 0
    %532 = vmatpush2.bf16.msra.mxu0 0
    %533 = vmatprep.subr.bf16.mxu0 0
    %534 = vmatpush2.bf16.msra.mxu0 0
    %535 = vmatprep.subr.bf16.mxu0 0
    %536 = vmatpush2.bf16.msra.mxu0 0
    %537 = vmatprep.subr.bf16.mxu0 0
    %538 = vmatpush2.bf16.msra.mxu0 0
    %539 = vmatprep.mubr.bf16.mxu0 0
    %540 = vmatmul.mubr.bf16.gmra.mxu0 %v505
    %v541 = vpop.f32.mrf.mxu0
    %v542 = vadd.f32 %v57, %v541
    %v543 = vpop.f32.mrf.mxu0
    %v544 = vpop.f32.mrf.mxu0
    %v545 = vpop.f32.mrf.mxu0
    %546 = vdwg.mxu0
    %v547 = vxor.u32 %v542, 2147483648
    %v548 = vmul.f32 %v547, 1.442695
    %v549 = vpow.pop %v548
    %v550 = vadd.f32 %v549, 1.0
    %v551 = vrcp.pop %v550
    %v552 = vmul.f32 1.0, %v551
    %v553 = vtanh.pop %v542
    %v554 = vmul.f32 %v552, %v291
    %556 = vrot.lane.b32.xlu0 %v553, 64
    %v557 = vpop.permute.xlu0 %556
    %v559 = vmul.f32 %v552, %v557
    %561 = vrot.lane.b32.xlu0 %v559, 32
    %v562 = vpop.permute.xlu0 %561
    %v564 = vadd.f32 %v554, %v562
    %v565 = vtanh.pop %v564
    %567 = vrot.lane.b32.xlu0 %v565, 64
    %v568 = vpop.permute.xlu0 %567
    %v570 = vmul.f32 %v552, %v568
    %572 = vrot.lane.b32.xlu0 %v570, 32
    %v573 = vpop.permute.xlu0 %572
    %576 = vrot.lane.b32.xlu0 %v411, 64
    %v577 = vpop.permute.xlu0 %576
    %v579 = vsel %vm97, %v573, %v577
    %v580 = vpack.c.bf16 %v579, %v579
    %v582 = vsel %vm226, %v580, 0
    %584 = vmatprep.subr.bf16.mxu0 0
    %585 = vmatpush1.bf16.msra.mxu0 0
    %586 = vmatprep.subr.bf16.mxu0 0
    %587 = vmatpush1.bf16.msra.mxu0 0
    %588 = vmatprep.subr.bf16.mxu0 0
    %589 = vmatpush1.bf16.msra.mxu0 0
    %590 = vmatprep.subr.bf16.mxu0 0
    %591 = vmatpush1.bf16.msra.mxu0 0
    %592 = vmatprep.subr.bf16.mxu0 0
    %593 = vmatpush1.bf16.msra.mxu0 %v336
    %594 = vmatprep.subr.bf16.mxu0 0
    %595 = vmatpush1.bf16.msra.mxu0 %v335
    %596 = vmatprep.subr.bf16.mxu0 0
    %597 = vmatpush1.bf16.msra.mxu0 %v334
    %598 = vmatprep.subr.bf16.mxu0 0
    %599 = vmatpush1.bf16.msra.mxu0 %v333
    %600 = vmatprep.subr.bf16.mxu0 0
    %601 = vmatpush2.bf16.msra.mxu0 0
    %602 = vmatprep.subr.bf16.mxu0 0
    %603 = vmatpush2.bf16.msra.mxu0 0
    %604 = vmatprep.subr.bf16.mxu0 0
    %605 = vmatpush2.bf16.msra.mxu0 0
    %606 = vmatprep.subr.bf16.mxu0 0
    %607 = vmatpush2.bf16.msra.mxu0 0
    %608 = vmatprep.subr.bf16.mxu0 0
    %609 = vmatpush2.bf16.msra.mxu0 0
    %610 = vmatprep.subr.bf16.mxu0 0
    %611 = vmatpush2.bf16.msra.mxu0 0
    %612 = vmatprep.subr.bf16.mxu0 0
    %613 = vmatpush2.bf16.msra.mxu0 0
    %614 = vmatprep.subr.bf16.mxu0 0
    %615 = vmatpush2.bf16.msra.mxu0 0
    %616 = vmatprep.mubr.bf16.mxu0 0
    %617 = vmatmul.mubr.bf16.gmra.mxu0 %v582
    %v618 = vpop.f32.mrf.mxu0
    %v619 = vadd.f32 %v65, %v618
    %v620 = vpop.f32.mrf.mxu0
    %v621 = vpop.f32.mrf.mxu0
    %v622 = vpop.f32.mrf.mxu0
    %623 = vdwg.mxu0
    %v624 = vxor.u32 %v619, 2147483648
    %v625 = vmul.f32 %v624, 1.442695
    %v626 = vpow.pop %v625
    %v627 = vadd.f32 %v626, 1.0
    %v628 = vrcp.pop %v627
    %v629 = vmul.f32 1.0, %v628
    %v630 = vtanh.pop %v619
    %v631 = vmul.f32 %v629, %v405
    %633 = vrot.lane.b32.xlu0 %v630, 64
    %v634 = vpop.permute.xlu0 %633
    %v636 = vmul.f32 %v629, %v634
    %638 = vrot.lane.b32.xlu0 %v636, 32
    %v639 = vpop.permute.xlu0 %638
    %v641 = vadd.f32 %v631, %v639
    %v642 = vtanh.pop %v641
    %644 = vrot.lane.b32.xlu0 %v642, 64
    %v645 = vpop.permute.xlu0 %644
    %v647 = vmul.f32 %v629, %v645
    %s648 = scalar_lea.vmem %s0, 2
    %v649 = vld [vmem:[%s648] sm:$0x1]
    %v650 = vunpack.c.l.bf16 %v649
    %v651 = vadd.f32 %v650, %v50
    %v652 = vpack.c.bf16 %v487, %v487
    %654 = vrot.lane.b32.xlu0 %v652, 32
    %v655 = vpop.permute.xlu0 %654
    %v657 = vsel %vm97, %v655, 0
    %659 = vmatprep.subr.bf16.mxu0 0
    %660 = vmatpush1.bf16.msra.mxu0 0
    %661 = vmatprep.subr.bf16.mxu0 0
    %662 = vmatpush1.bf16.msra.mxu0 0
    %663 = vmatprep.subr.bf16.mxu0 0
    %664 = vmatpush1.bf16.msra.mxu0 0
    %665 = vmatprep.subr.bf16.mxu0 0
    %666 = vmatpush1.bf16.msra.mxu0 0
    %667 = vmatprep.subr.bf16.mxu0 0
    %668 = vmatpush1.bf16.msra.mxu0 0
    %669 = vmatprep.subr.bf16.mxu0 0
    %670 = vmatpush1.bf16.msra.mxu0 0
    %671 = vmatprep.subr.bf16.mxu0 0
    %672 = vmatpush1.bf16.msra.mxu0 %v94
    %673 = vmatprep.subr.bf16.mxu0 0
    %674 = vmatpush1.bf16.msra.mxu0 %v93
    %675 = vmatprep.subr.bf16.mxu0 0
    %676 = vmatpush2.bf16.msra.mxu0 0
    %677 = vmatprep.subr.bf16.mxu0 0
    %678 = vmatpush2.bf16.msra.mxu0 0
    %679 = vmatprep.subr.bf16.mxu0 0
    %680 = vmatpush2.bf16.msra.mxu0 0
    %681 = vmatprep.subr.bf16.mxu0 0
    %682 = vmatpush2.bf16.msra.mxu0 0
    %683 = vmatprep.subr.bf16.mxu0 0
    %684 = vmatpush2.bf16.msra.mxu0 0
    %685 = vmatprep.subr.bf16.mxu0 0
    %686 = vmatpush2.bf16.msra.mxu0 0
    %687 = vmatprep.subr.bf16.mxu0 0
    %688 = vmatpush2.bf16.msra.mxu0 0
    %689 = vmatprep.subr.bf16.mxu0 0
    %690 = vmatpush2.bf16.msra.mxu0 0
    %691 = vmatprep.mubr.bf16.mxu0 0
    %692 = vmatmul.mubr.bf16.gmra.mxu0 %v657
    %v693 = vpop.f32.mrf.mxu0
    %v694 = vadd.f32 0.0, %v693
    %v695 = vpop.f32.mrf.mxu0
    %v696 = vpop.f32.mrf.mxu0
    %v697 = vpop.f32.mrf.mxu0
    %698 = vdwg.mxu0
    %v699 = vadd.f32 %v651, %v694
    %v700 = vxor.u32 %v699, 2147483648
    %v701 = vmul.f32 %v700, 1.442695
    %v702 = vpow.pop %v701
    %v703 = vadd.f32 %v702, 1.0
    %v704 = vrcp.pop %v703
    %v705 = vmul.f32 1.0, %v704
    %v706 = vtanh.pop %v699
    %v707 = vmul.f32 %v705, %v481
    %709 = vrot.lane.b32.xlu0 %v706, 64
    %v710 = vpop.permute.xlu0 %709
    %v712 = vmul.f32 %v705, %v710
    %714 = vrot.lane.b32.xlu0 %v712, 32
    %v715 = vpop.permute.xlu0 %714
    %v717 = vadd.f32 %v707, %v715
    %v718 = vtanh.pop %v717
    %720 = vrot.lane.b32.xlu0 %v718, 64
    %v721 = vpop.permute.xlu0 %720
    %v723 = vmul.f32 %v705, %v721
    %v726 = vunpack.c.l.s4 1983009808
    %v727 = vunpack.c.0.s8 %v726
    %v728 = vlaneseq
    %v729 = vshrl.u32 %v728, 7
    %v730 = vsub.s32 %v727, %v729
    %v731 = vrot.slane %v723, %v730
    %732 = vrot.lane.b32.xlu0 %v731, 32
    %v733 = vpop.permute.xlu0 %732
    %735 = vrot.lane.b32.xlu0 %v570, 64
    %v736 = vpop.permute.xlu0 %735
    %v738 = vsel %vm97, %v733, %v736
    %v739 = vpack.c.bf16 %v738, %v738
    %v741 = vsel %vm226, %v739, 0
    %743 = vmatprep.subr.bf16.mxu0 0
    %744 = vmatpush1.bf16.msra.mxu0 0
    %745 = vmatprep.subr.bf16.mxu0 0
    %746 = vmatpush1.bf16.msra.mxu0 0
    %747 = vmatprep.subr.bf16.mxu0 0
    %748 = vmatpush1.bf16.msra.mxu0 0
    %749 = vmatprep.subr.bf16.mxu0 0
    %750 = vmatpush1.bf16.msra.mxu0 0
    %751 = vmatprep.subr.bf16.mxu0 0
    %752 = vmatpush1.bf16.msra.mxu0 %v221
    %753 = vmatprep.subr.bf16.mxu0 0
    %754 = vmatpush1.bf16.msra.mxu0 %v220
    %755 = vmatprep.subr.bf16.mxu0 0
    %756 = vmatpush1.bf16.msra.mxu0 %v219
    %757 = vmatprep.subr.bf16.mxu0 0
    %758 = vmatpush1.bf16.msra.mxu0 %v218
    %759 = vmatprep.subr.bf16.mxu0 0
    %760 = vmatpush2.bf16.msra.mxu0 0
    %761 = vmatprep.subr.bf16.mxu0 0
    %762 = vmatpush2.bf16.msra.mxu0 0
    %763 = vmatprep.subr.bf16.mxu0 0
    %764 = vmatpush2.bf16.msra.mxu0 0
    %765 = vmatprep.subr.bf16.mxu0 0
    %766 = vmatpush2.bf16.msra.mxu0 0
    %767 = vmatprep.subr.bf16.mxu0 0
    %768 = vmatpush2.bf16.msra.mxu0 0
    %769 = vmatprep.subr.bf16.mxu0 0
    %770 = vmatpush2.bf16.msra.mxu0 0
    %771 = vmatprep.subr.bf16.mxu0 0
    %772 = vmatpush2.bf16.msra.mxu0 0
    %773 = vmatprep.subr.bf16.mxu0 0
    %774 = vmatpush2.bf16.msra.mxu0 0
    %775 = vmatprep.mubr.bf16.mxu0 0
    %776 = vmatmul.mubr.bf16.gmra.mxu0 %v741
    %v777 = vpop.f32.mrf.mxu0
    %v778 = vadd.f32 %v57, %v777
    %v779 = vpop.f32.mrf.mxu0
    %v780 = vpop.f32.mrf.mxu0
    %v781 = vpop.f32.mrf.mxu0
    %782 = vdwg.mxu0
    %v783 = vxor.u32 %v778, 2147483648
    %v784 = vmul.f32 %v783, 1.442695
    %v785 = vpow.pop %v784
    %v786 = vadd.f32 %v785, 1.0
    %v787 = vrcp.pop %v786
    %v788 = vmul.f32 1.0, %v787
    %v789 = vtanh.pop %v778
    %v790 = vmul.f32 %v788, %v564
    %792 = vrot.lane.b32.xlu0 %v789, 64
    %v793 = vpop.permute.xlu0 %792
    %v795 = vmul.f32 %v788, %v793
    %797 = vrot.lane.b32.xlu0 %v795, 32
    %v798 = vpop.permute.xlu0 %797
    %v800 = vadd.f32 %v790, %v798
    %v801 = vtanh.pop %v800
    %803 = vrot.lane.b32.xlu0 %v801, 64
    %v804 = vpop.permute.xlu0 %803
    %v806 = vmul.f32 %v788, %v804
    %808 = vrot.lane.b32.xlu0 %v806, 32
    %v809 = vpop.permute.xlu0 %808
    %812 = vrot.lane.b32.xlu0 %v647, 64
    %v813 = vpop.permute.xlu0 %812
    %v815 = vsel %vm97, %v809, %v813
    %v816 = vpack.c.bf16 %v815, %v815
    %v818 = vsel %vm226, %v816, 0
    %820 = vmatprep.subr.bf16.mxu0 0
    %821 = vmatpush1.bf16.msra.mxu0 0
    %822 = vmatprep.subr.bf16.mxu0 0
    %823 = vmatpush1.bf16.msra.mxu0 0
    %824 = vmatprep.subr.bf16.mxu0 0
    %825 = vmatpush1.bf16.msra.mxu0 0
    %826 = vmatprep.subr.bf16.mxu0 0
    %827 = vmatpush1.bf16.msra.mxu0 0
    %828 = vmatprep.subr.bf16.mxu0 0
    %829 = vmatpush1.bf16.msra.mxu0 %v336
    %830 = vmatprep.subr.bf16.mxu0 0
    %831 = vmatpush1.bf16.msra.mxu0 %v335
    %832 = vmatprep.subr.bf16.mxu0 0
    %833 = vmatpush1.bf16.msra.mxu0 %v334
    %834 = vmatprep.subr.bf16.mxu0 0
    %835 = vmatpush1.bf16.msra.mxu0 %v333
    %836 = vmatprep.subr.bf16.mxu0 0
    %837 = vmatpush2.bf16.msra.mxu0 0
    %838 = vmatprep.subr.bf16.mxu0 0
    %839 = vmatpush2.bf16.msra.mxu0 0
    %840 = vmatprep.subr.bf16.mxu0 0
    %841 = vmatpush2.bf16.msra.mxu0 0
    %842 = vmatprep.subr.bf16.mxu0 0
    %843 = vmatpush2.bf16.msra.mxu0 0
    %844 = vmatprep.subr.bf16.mxu0 0
    %845 = vmatpush2.bf16.msra.mxu0 0
    %846 = vmatprep.subr.bf16.mxu0 0
    %847 = vmatpush2.bf16.msra.mxu0 0
    %848 = vmatprep.subr.bf16.mxu0 0
    %849 = vmatpush2.bf16.msra.mxu0 0
    %850 = vmatprep.subr.bf16.mxu0 0
    %851 = vmatpush2.bf16.msra.mxu0 0
    %852 = vmatprep.mubr.bf16.mxu0 0
    %853 = vmatmul.mubr.bf16.gmra.mxu0 %v818
    %v854 = vpop.f32.mrf.mxu0
    %v855 = vadd.f32 %v65, %v854
    %v856 = vpop.f32.mrf.mxu0
    %v857 = vpop.f32.mrf.mxu0
    %v858 = vpop.f32.mrf.mxu0
    %859 = vdwg.mxu0
    %v860 = vxor.u32 %v855, 2147483648
    %v861 = vmul.f32 %v860, 1.442695
    %v862 = vpow.pop %v861
    %v863 = vadd.f32 %v862, 1.0
    %v864 = vrcp.pop %v863
    %v865 = vmul.f32 1.0, %v864
    %v866 = vtanh.pop %v855
    %v867 = vmul.f32 %v865, %v641
    %869 = vrot.lane.b32.xlu0 %v866, 64
    %v870 = vpop.permute.xlu0 %869
    %v872 = vmul.f32 %v865, %v870
    %874 = vrot.lane.b32.xlu0 %v872, 32
    %v875 = vpop.permute.xlu0 %874
    %v877 = vadd.f32 %v867, %v875
    %v878 = vtanh.pop %v877
    %880 = vrot.lane.b32.xlu0 %v878, 64
    %v881 = vpop.permute.xlu0 %880
    %v883 = vmul.f32 %v865, %v881
    %s884 = scalar_lea.vmem %s0, 3
    %v885 = vld [vmem:[%s884] sm:$0x1]
    %v886 = vunpack.c.l.bf16 %v885
    %v887 = vadd.f32 %v886, %v50
    %v888 = vpack.c.bf16 %v723, %v723
    %890 = vrot.lane.b32.xlu0 %v888, 32
    %v891 = vpop.permute.xlu0 %890
    %v893 = vsel %vm97, %v891, 0
    %895 = vmatprep.subr.bf16.mxu0 0
    %896 = vmatpush1.bf16.msra.mxu0 0
    %897 = vmatprep.subr.bf16.mxu0 0
    %898 = vmatpush1.bf16.msra.mxu0 0
    %899 = vmatprep.subr.bf16.mxu0 0
    %900 = vmatpush1.bf16.msra.mxu0 0
    %901 = vmatprep.subr.bf16.mxu0 0
    %902 = vmatpush1.bf16.msra.mxu0 0
    %903 = vmatprep.subr.bf16.mxu0 0
    %904 = vmatpush1.bf16.msra.mxu0 0
    %905 = vmatprep.subr.bf16.mxu0 0
    %906 = vmatpush1.bf16.msra.mxu0 0
    %907 = vmatprep.subr.bf16.mxu0 0
    %908 = vmatpush1.bf16.msra.mxu0 %v94
    %909 = vmatprep.subr.bf16.mxu0 0
    %910 = vmatpush1.bf16.msra.mxu0 %v93
    %911 = vmatprep.subr.bf16.mxu0 0
    %912 = vmatpush2.bf16.msra.mxu0 0
    %913 = vmatprep.subr.bf16.mxu0 0
    %914 = vmatpush2.bf16.msra.mxu0 0
    %915 = vmatprep.subr.bf16.mxu0 0
    %916 = vmatpush2.bf16.msra.mxu0 0
    %917 = vmatprep.subr.bf16.mxu0 0
    %918 = vmatpush2.bf16.msra.mxu0 0
    %919 = vmatprep.subr.bf16.mxu0 0
    %920 = vmatpush2.bf16.msra.mxu0 0
    %921 = vmatprep.subr.bf16.mxu0 0
    %922 = vmatpush2.bf16.msra.mxu0 0
    %923 = vmatprep.subr.bf16.mxu0 0
    %924 = vmatpush2.bf16.msra.mxu0 0
    %925 = vmatprep.subr.bf16.mxu0 0
    %926 = vmatpush2.bf16.msra.mxu0 0
    %927 = vmatprep.mubr.bf16.mxu0 0
    %928 = vmatmul.mubr.bf16.gmra.mxu0 %v893
    %v929 = vpop.f32.mrf.mxu0
    %v930 = vadd.f32 0.0, %v929
    %v931 = vpop.f32.mrf.mxu0
    %v932 = vpop.f32.mrf.mxu0
    %v933 = vpop.f32.mrf.mxu0
    %934 = vdwg.mxu0
    %v935 = vadd.f32 %v887, %v930
    %v936 = vxor.u32 %v935, 2147483648
    %v937 = vmul.f32 %v936, 1.442695
    %v938 = vpow.pop %v937
    %v939 = vadd.f32 %v938, 1.0
    %v940 = vrcp.pop %v939
    %v941 = vmul.f32 1.0, %v940
    %v942 = vtanh.pop %v935
    %v943 = vmul.f32 %v941, %v717
    %945 = vrot.lane.b32.xlu0 %v942, 64
    %v946 = vpop.permute.xlu0 %945
    %v948 = vmul.f32 %v941, %v946
    %950 = vrot.lane.b32.xlu0 %v948, 32
    %v951 = vpop.permute.xlu0 %950
    %v953 = vadd.f32 %v943, %v951
    %v954 = vtanh.pop %v953
    %956 = vrot.lane.b32.xlu0 %v954, 64
    %v957 = vpop.permute.xlu0 %956
    %v959 = vmul.f32 %v941, %v957
    %v962 = vunpack.c.l.s4 1983009808
    %v963 = vunpack.c.0.s8 %v962
    %v964 = vlaneseq
    %v965 = vshrl.u32 %v964, 7
    %v966 = vsub.s32 %v963, %v965
    %v967 = vrot.slane %v959, %v966
    %968 = vrot.lane.b32.xlu0 %v967, 32
    %v969 = vpop.permute.xlu0 %968
    %971 = vrot.lane.b32.xlu0 %v806, 64
    %v972 = vpop.permute.xlu0 %971
    %v974 = vsel %vm97, %v969, %v972
    %v975 = vpack.c.bf16 %v974, %v974
    %v977 = vsel %vm226, %v975, 0
    %979 = vmatprep.subr.bf16.mxu0 0
    %980 = vmatpush1.bf16.msra.mxu0 0
    %981 = vmatprep.subr.bf16.mxu0 0
    %982 = vmatpush1.bf16.msra.mxu0 0
    %983 = vmatprep.subr.bf16.mxu0 0
    %984 = vmatpush1.bf16.msra.mxu0 0
    %985 = vmatprep.subr.bf16.mxu0 0
    %986 = vmatpush1.bf16.msra.mxu0 0
    %987 = vmatprep.subr.bf16.mxu0 0
    %988 = vmatpush1.bf16.msra.mxu0 %v221
    %989 = vmatprep.subr.bf16.mxu0 0
    %990 = vmatpush1.bf16.msra.mxu0 %v220
    %991 = vmatprep.subr.bf16.mxu0 0
    %992 = vmatpush1.bf16.msra.mxu0 %v219
    %993 = vmatprep.subr.bf16.mxu0 0
    %994 = vmatpush1.bf16.msra.mxu0 %v218
    %995 = vmatprep.subr.bf16.mxu0 0
    %996 = vmatpush2.bf16.msra.mxu0 0
    %997 = vmatprep.subr.bf16.mxu0 0
    %998 = vmatpush2.bf16.msra.mxu0 0
    %999 = vmatprep.subr.bf16.mxu0 0
    %1000 = vmatpush2.bf16.msra.mxu0 0
    %1001 = vmatprep.subr.bf16.mxu0 0
    %1002 = vmatpush2.bf16.msra.mxu0 0
    %1003 = vmatprep.subr.bf16.mxu0 0
    %1004 = vmatpush2.bf16.msra.mxu0 0
    %1005 = vmatprep.subr.bf16.mxu0 0
    %1006 = vmatpush2.bf16.msra.mxu0 0
    %1007 = vmatprep.subr.bf16.mxu0 0
    %1008 = vmatpush2.bf16.msra.mxu0 0
    %1009 = vmatprep.subr.bf16.mxu0 0
    %1010 = vmatpush2.bf16.msra.mxu0 0
    %1011 = vmatprep.mubr.bf16.mxu0 0
    %1012 = vmatmul.mubr.bf16.gmra.mxu0 %v977
    %v1013 = vpop.f32.mrf.mxu0
    %v1014 = vadd.f32 %v57, %v1013
    %v1015 = vpop.f32.mrf.mxu0
    %v1016 = vpop.f32.mrf.mxu0
    %v1017 = vpop.f32.mrf.mxu0
    %1018 = vdwg.mxu0
    %v1019 = vxor.u32 %v1014, 2147483648
    %v1020 = vmul.f32 %v1019, 1.442695
    %v1021 = vpow.pop %v1020
    %v1022 = vadd.f32 %v1021, 1.0
    %v1023 = vrcp.pop %v1022
    %v1024 = vmul.f32 1.0, %v1023
    %v1025 = vtanh.pop %v1014
    %v1026 = vmul.f32 %v1024, %v800
    %1028 = vrot.lane.b32.xlu0 %v1025, 64
    %v1029 = vpop.permute.xlu0 %1028
    %v1031 = vmul.f32 %v1024, %v1029
    %1033 = vrot.lane.b32.xlu0 %v1031, 32
    %v1034 = vpop.permute.xlu0 %1033
    %v1036 = vadd.f32 %v1026, %v1034
    %v1037 = vtanh.pop %v1036
    %1039 = vrot.lane.b32.xlu0 %v1037, 64
    %v1040 = vpop.permute.xlu0 %1039
    %v1042 = vmul.f32 %v1024, %v1040
    %1044 = vrot.lane.b32.xlu0 %v1042, 32
    %v1045 = vpop.permute.xlu0 %1044
    %1048 = vrot.lane.b32.xlu0 %v883, 64
    %v1049 = vpop.permute.xlu0 %1048
    %v1051 = vsel %vm97, %v1045, %v1049
    %v1052 = vpack.c.bf16 %v1051, %v1051
    %v1054 = vsel %vm226, %v1052, 0
    %1056 = vmatprep.subr.bf16.mxu0 0
    %1057 = vmatpush1.bf16.msra.mxu0 0
    %1058 = vmatprep.subr.bf16.mxu0 0
    %1059 = vmatpush1.bf16.msra.mxu0 0
    %1060 = vmatprep.subr.bf16.mxu0 0
    %1061 = vmatpush1.bf16.msra.mxu0 0
    %1062 = vmatprep.subr.bf16.mxu0 0
    %1063 = vmatpush1.bf16.msra.mxu0 0
    %1064 = vmatprep.subr.bf16.mxu0 0
    %1065 = vmatpush1.bf16.msra.mxu0 %v336
    %1066 = vmatprep.subr.bf16.mxu0 0
    %1067 = vmatpush1.bf16.msra.mxu0 %v335
    %1068 = vmatprep.subr.bf16.mxu0 0
    %1069 = vmatpush1.bf16.msra.mxu0 %v334
    %1070 = vmatprep.subr.bf16.mxu0 0
    %1071 = vmatpush1.bf16.msra.mxu0 %v333
    %1072 = vmatprep.subr.bf16.mxu0 0
    %1073 = vmatpush2.bf16.msra.mxu0 0
    %1074 = vmatprep.subr.bf16.mxu0 0
    %1075 = vmatpush2.bf16.msra.mxu0 0
    %1076 = vmatprep.subr.bf16.mxu0 0
    %1077 = vmatpush2.bf16.msra.mxu0 0
    %1078 = vmatprep.subr.bf16.mxu0 0
    %1079 = vmatpush2.bf16.msra.mxu0 0
    %1080 = vmatprep.subr.bf16.mxu0 0
    %1081 = vmatpush2.bf16.msra.mxu0 0
    %1082 = vmatprep.subr.bf16.mxu0 0
    %1083 = vmatpush2.bf16.msra.mxu0 0
    %1084 = vmatprep.subr.bf16.mxu0 0
    %1085 = vmatpush2.bf16.msra.mxu0 0
    %1086 = vmatprep.subr.bf16.mxu0 0
    %1087 = vmatpush2.bf16.msra.mxu0 0
    %1088 = vmatprep.mubr.bf16.mxu0 0
    %1089 = vmatmul.mubr.bf16.gmra.mxu0 %v1054
    %v1090 = vpop.f32.mrf.mxu0
    %v1091 = vadd.f32 %v65, %v1090
    %v1092 = vpop.f32.mrf.mxu0
    %v1093 = vpop.f32.mrf.mxu0
    %v1094 = vpop.f32.mrf.mxu0
    %1095 = vdwg.mxu0
    %v1096 = vxor.u32 %v1091, 2147483648
    %v1097 = vmul.f32 %v1096, 1.442695
    %v1098 = vpow.pop %v1097
    %v1099 = vadd.f32 %v1098, 1.0
    %v1100 = vrcp.pop %v1099
    %v1101 = vmul.f32 1.0, %v1100
    %v1102 = vtanh.pop %v1091
    %v1103 = vmul.f32 %v1101, %v877
    %1105 = vrot.lane.b32.xlu0 %v1102, 64
    %v1106 = vpop.permute.xlu0 %1105
    %v1108 = vmul.f32 %v1101, %v1106
    %1110 = vrot.lane.b32.xlu0 %v1108, 32
    %v1111 = vpop.permute.xlu0 %1110
    %v1113 = vadd.f32 %v1103, %v1111
    %v1114 = vtanh.pop %v1113
    %1116 = vrot.lane.b32.xlu0 %v1114, 64
    %v1117 = vpop.permute.xlu0 %1116
    %v1119 = vmul.f32 %v1101, %v1117
    %s1120 = scalar_lea.vmem %s0, 4
    %v1121 = vld [vmem:[%s1120] sm:$0x1]
    %v1122 = vunpack.c.l.bf16 %v1121
    %v1123 = vadd.f32 %v1122, %v50
    %v1124 = vpack.c.bf16 %v959, %v959
    %1126 = vrot.lane.b32.xlu0 %v1124, 32
    %v1127 = vpop.permute.xlu0 %1126
    %v1129 = vsel %vm97, %v1127, 0
    %1131 = vmatprep.subr.bf16.mxu0 0
    %1132 = vmatpush1.bf16.msra.mxu0 0
    %1133 = vmatprep.subr.bf16.mxu0 0
    %1134 = vmatpush1.bf16.msra.mxu0 0
    %1135 = vmatprep.subr.bf16.mxu0 0
    %1136 = vmatpush1.bf16.msra.mxu0 0
    %1137 = vmatprep.subr.bf16.mxu0 0
    %1138 = vmatpush1.bf16.msra.mxu0 0
    %1139 = vmatprep.subr.bf16.mxu0 0
    %1140 = vmatpush1.bf16.msra.mxu0 0
    %1141 = vmatprep.subr.bf16.mxu0 0
    %1142 = vmatpush1.bf16.msra.mxu0 0
    %1143 = vmatprep.subr.bf16.mxu0 0
    %1144 = vmatpush1.bf16.msra.mxu0 %v94
    %1145 = vmatprep.subr.bf16.mxu0 0
    %1146 = vmatpush1.bf16.msra.mxu0 %v93
    %1147 = vmatprep.subr.bf16.mxu0 0
    %1148 = vmatpush2.bf16.msra.mxu0 0
    %1149 = vmatprep.subr.bf16.mxu0 0
    %1150 = vmatpush2.bf16.msra.mxu0 0
    %1151 = vmatprep.subr.bf16.mxu0 0
    %1152 = vmatpush2.bf16.msra.mxu0 0
    %1153 = vmatprep.subr.bf16.mxu0 0
    %1154 = vmatpush2.bf16.msra.mxu0 0
    %1155 = vmatprep.subr.bf16.mxu0 0
    %1156 = vmatpush2.bf16.msra.mxu0 0
    %1157 = vmatprep.subr.bf16.mxu0 0
    %1158 = vmatpush2.bf16.msra.mxu0 0
    %1159 = vmatprep.subr.bf16.mxu0 0
    %1160 = vmatpush2.bf16.msra.mxu0 0
    %1161 = vmatprep.subr.bf16.mxu0 0
    %1162 = vmatpush2.bf16.msra.mxu0 0
    %1163 = vmatprep.mubr.bf16.mxu0 0
    %1164 = vmatmul.mubr.bf16.gmra.mxu0 %v1129
    %v1165 = vpop.f32.mrf.mxu0
    %v1166 = vadd.f32 0.0, %v1165
    %v1167 = vpop.f32.mrf.mxu0
    %v1168 = vpop.f32.mrf.mxu0
    %v1169 = vpop.f32.mrf.mxu0
    %1170 = vdwg.mxu0
    %v1171 = vadd.f32 %v1123, %v1166
    %v1172 = vxor.u32 %v1171, 2147483648
    %v1173 = vmul.f32 %v1172, 1.442695
    %v1174 = vpow.pop %v1173
    %v1175 = vadd.f32 %v1174, 1.0
    %v1176 = vrcp.pop %v1175
    %v1177 = vmul.f32 1.0, %v1176
    %v1178 = vtanh.pop %v1171
    %v1179 = vmul.f32 %v1177, %v953
    %1181 = vrot.lane.b32.xlu0 %v1178, 64
    %v1182 = vpop.permute.xlu0 %1181
    %v1184 = vmul.f32 %v1177, %v1182
    %1186 = vrot.lane.b32.xlu0 %v1184, 32
    %v1187 = vpop.permute.xlu0 %1186
    %v1189 = vadd.f32 %v1179, %v1187
    %v1190 = vtanh.pop %v1189
    %1192 = vrot.lane.b32.xlu0 %v1190, 64
    %v1193 = vpop.permute.xlu0 %1192
    %v1195 = vmul.f32 %v1177, %v1193
    %v1198 = vunpack.c.l.s4 1983009808
    %v1199 = vunpack.c.0.s8 %v1198
    %v1200 = vlaneseq
    %v1201 = vshrl.u32 %v1200, 7
    %v1202 = vsub.s32 %v1199, %v1201
    %v1203 = vrot.slane %v1195, %v1202
    %1204 = vrot.lane.b32.xlu0 %v1203, 32
    %v1205 = vpop.permute.xlu0 %1204
    %1207 = vrot.lane.b32.xlu0 %v1042, 64
    %v1208 = vpop.permute.xlu0 %1207
    %v1210 = vsel %vm97, %v1205, %v1208
    %v1211 = vpack.c.bf16 %v1210, %v1210
    %v1213 = vsel %vm226, %v1211, 0
    %1215 = vmatprep.subr.bf16.mxu0 0
    %1216 = vmatpush1.bf16.msra.mxu0 0
    %1217 = vmatprep.subr.bf16.mxu0 0
    %1218 = vmatpush1.bf16.msra.mxu0 0
    %1219 = vmatprep.subr.bf16.mxu0 0
    %1220 = vmatpush1.bf16.msra.mxu0 0
    %1221 = vmatprep.subr.bf16.mxu0 0
    %1222 = vmatpush1.bf16.msra.mxu0 0
    %1223 = vmatprep.subr.bf16.mxu0 0
    %1224 = vmatpush1.bf16.msra.mxu0 %v221
    %1225 = vmatprep.subr.bf16.mxu0 0
    %1226 = vmatpush1.bf16.msra.mxu0 %v220
    %1227 = vmatprep.subr.bf16.mxu0 0
    %1228 = vmatpush1.bf16.msra.mxu0 %v219
    %1229 = vmatprep.subr.bf16.mxu0 0
    %1230 = vmatpush1.bf16.msra.mxu0 %v218
    %1231 = vmatprep.subr.bf16.mxu0 0
    %1232 = vmatpush2.bf16.msra.mxu0 0
    %1233 = vmatprep.subr.bf16.mxu0 0
    %1234 = vmatpush2.bf16.msra.mxu0 0
    %1235 = vmatprep.subr.bf16.mxu0 0
    %1236 = vmatpush2.bf16.msra.mxu0 0
    %1237 = vmatprep.subr.bf16.mxu0 0
    %1238 = vmatpush2.bf16.msra.mxu0 0
    %1239 = vmatprep.subr.bf16.mxu0 0
    %1240 = vmatpush2.bf16.msra.mxu0 0
    %1241 = vmatprep.subr.bf16.mxu0 0
    %1242 = vmatpush2.bf16.msra.mxu0 0
    %1243 = vmatprep.subr.bf16.mxu0 0
    %1244 = vmatpush2.bf16.msra.mxu0 0
    %1245 = vmatprep.subr.bf16.mxu0 0
    %1246 = vmatpush2.bf16.msra.mxu0 0
    %1247 = vmatprep.mubr.bf16.mxu0 0
    %1248 = vmatmul.mubr.bf16.gmra.mxu0 %v1213
    %v1249 = vpop.f32.mrf.mxu0
    %v1250 = vadd.f32 %v57, %v1249
    %v1251 = vpop.f32.mrf.mxu0
    %v1252 = vpop.f32.mrf.mxu0
    %v1253 = vpop.f32.mrf.mxu0
    %1254 = vdwg.mxu0
    %v1255 = vxor.u32 %v1250, 2147483648
    %v1256 = vmul.f32 %v1255, 1.442695
    %v1257 = vpow.pop %v1256
    %v1258 = vadd.f32 %v1257, 1.0
    %v1259 = vrcp.pop %v1258
    %v1260 = vmul.f32 1.0, %v1259
    %v1261 = vtanh.pop %v1250
    %v1262 = vmul.f32 %v1260, %v1036
    %1264 = vrot.lane.b32.xlu0 %v1261, 64
    %v1265 = vpop.permute.xlu0 %1264
    %v1267 = vmul.f32 %v1260, %v1265
    %1269 = vrot.lane.b32.xlu0 %v1267, 32
    %v1270 = vpop.permute.xlu0 %1269
    %v1272 = vadd.f32 %v1262, %v1270
    %v1273 = vtanh.pop %v1272
    %1275 = vrot.lane.b32.xlu0 %v1273, 64
    %v1276 = vpop.permute.xlu0 %1275
    %v1278 = vmul.f32 %v1260, %v1276
    %1280 = vrot.lane.b32.xlu0 %v1278, 32
    %v1281 = vpop.permute.xlu0 %1280
    %1284 = vrot.lane.b32.xlu0 %v1119, 64
    %v1285 = vpop.permute.xlu0 %1284
    %v1287 = vsel %vm97, %v1281, %v1285
    %v1288 = vpack.c.bf16 %v1287, %v1287
    %v1290 = vsel %vm226, %v1288, 0
    %1292 = vmatprep.subr.bf16.mxu0 0
    %1293 = vmatpush1.bf16.msra.mxu0 0
    %1294 = vmatprep.subr.bf16.mxu0 0
    %1295 = vmatpush1.bf16.msra.mxu0 0
    %1296 = vmatprep.subr.bf16.mxu0 0
    %1297 = vmatpush1.bf16.msra.mxu0 0
    %1298 = vmatprep.subr.bf16.mxu0 0
    %1299 = vmatpush1.bf16.msra.mxu0 0
    %1300 = vmatprep.subr.bf16.mxu0 0
    %1301 = vmatpush1.bf16.msra.mxu0 %v336
    %1302 = vmatprep.subr.bf16.mxu0 0
    %1303 = vmatpush1.bf16.msra.mxu0 %v335
    %1304 = vmatprep.subr.bf16.mxu0 0
    %1305 = vmatpush1.bf16.msra.mxu0 %v334
    %1306 = vmatprep.subr.bf16.mxu0 0
    %1307 = vmatpush1.bf16.msra.mxu0 %v333
    %1308 = vmatprep.subr.bf16.mxu0 0
    %1309 = vmatpush2.bf16.msra.mxu0 0
    %1310 = vmatprep.subr.bf16.mxu0 0
    %1311 = vmatpush2.bf16.msra.mxu0 0
    %1312 = vmatprep.subr.bf16.mxu0 0
    %1313 = vmatpush2.bf16.msra.mxu0 0
    %1314 = vmatprep.subr.bf16.mxu0 0
    %1315 = vmatpush2.bf16.msra.mxu0 0
    %1316 = vmatprep.subr.bf16.mxu0 0
    %1317 = vmatpush2.bf16.msra.mxu0 0
    %1318 = vmatprep.subr.bf16.mxu0 0
    %1319 = vmatpush2.bf16.msra.mxu0 0
    %1320 = vmatprep.subr.bf16.mxu0 0
    %1321 = vmatpush2.bf16.msra.mxu0 0
    %1322 = vmatprep.subr.bf16.mxu0 0
    %1323 = vmatpush2.bf16.msra.mxu0 0
    %1324 = vmatprep.mubr.bf16.mxu0 0
    %1325 = vmatmul.mubr.bf16.gmra.mxu0 %v1290
    %v1326 = vpop.f32.mrf.mxu0
    %v1327 = vadd.f32 %v65, %v1326
    %v1328 = vpop.f32.mrf.mxu0
    %v1329 = vpop.f32.mrf.mxu0
    %v1330 = vpop.f32.mrf.mxu0
    %1331 = vdwg.mxu0
    %v1332 = vxor.u32 %v1327, 2147483648
    %v1333 = vmul.f32 %v1332, 1.442695
    %v1334 = vpow.pop %v1333
    %v1335 = vadd.f32 %v1334, 1.0
    %v1336 = vrcp.pop %v1335
    %v1337 = vmul.f32 1.0, %v1336
    %v1338 = vtanh.pop %v1327
    %v1339 = vmul.f32 %v1337, %v1113
    %1341 = vrot.lane.b32.xlu0 %v1338, 64
    %v1342 = vpop.permute.xlu0 %1341
    %v1344 = vmul.f32 %v1337, %v1342
    %1346 = vrot.lane.b32.xlu0 %v1344, 32
    %v1347 = vpop.permute.xlu0 %1346
    %v1349 = vadd.f32 %v1339, %v1347
    %v1350 = vtanh.pop %v1349
    %1352 = vrot.lane.b32.xlu0 %v1350, 64
    %v1353 = vpop.permute.xlu0 %1352
    %v1355 = vmul.f32 %v1337, %v1353
    %s1356 = scalar_lea.vmem %s0, 5
    %v1357 = vld [vmem:[%s1356] sm:$0x1]
    %v1358 = vunpack.c.l.bf16 %v1357
    %v1359 = vadd.f32 %v1358, %v50
    %v1360 = vpack.c.bf16 %v1195, %v1195
    %1362 = vrot.lane.b32.xlu0 %v1360, 32
    %v1363 = vpop.permute.xlu0 %1362
    %v1365 = vsel %vm97, %v1363, 0
    %1367 = vmatprep.subr.bf16.mxu0 0
    %1368 = vmatpush1.bf16.msra.mxu0 0
    %1369 = vmatprep.subr.bf16.mxu0 0
    %1370 = vmatpush1.bf16.msra.mxu0 0
    %1371 = vmatprep.subr.bf16.mxu0 0
    %1372 = vmatpush1.bf16.msra.mxu0 0
    %1373 = vmatprep.subr.bf16.mxu0 0
    %1374 = vmatpush1.bf16.msra.mxu0 0
    %1375 = vmatprep.subr.bf16.mxu0 0
    %1376 = vmatpush1.bf16.msra.mxu0 0
    %1377 = vmatprep.subr.bf16.mxu0 0
    %1378 = vmatpush1.bf16.msra.mxu0 0
    %1379 = vmatprep.subr.bf16.mxu0 0
    %1380 = vmatpush1.bf16.msra.mxu0 %v94
    %1381 = vmatprep.subr.bf16.mxu0 0
    %1382 = vmatpush1.bf16.msra.mxu0 %v93
    %1383 = vmatprep.subr.bf16.mxu0 0
    %1384 = vmatpush2.bf16.msra.mxu0 0
    %1385 = vmatprep.subr.bf16.mxu0 0
    %1386 = vmatpush2.bf16.msra.mxu0 0
    %1387 = vmatprep.subr.bf16.mxu0 0
    %1388 = vmatpush2.bf16.msra.mxu0 0
    %1389 = vmatprep.subr.bf16.mxu0 0
    %1390 = vmatpush2.bf16.msra.mxu0 0
    %1391 = vmatprep.subr.bf16.mxu0 0
    %1392 = vmatpush2.bf16.msra.mxu0 0
    %1393 = vmatprep.subr.bf16.mxu0 0
    %1394 = vmatpush2.bf16.msra.mxu0 0
    %1395 = vmatprep.subr.bf16.mxu0 0
    %1396 = vmatpush2.bf16.msra.mxu0 0
    %1397 = vmatprep.subr.bf16.mxu0 0
    %1398 = vmatpush2.bf16.msra.mxu0 0
    %1399 = vmatprep.mubr.bf16.mxu0 0
    %1400 = vmatmul.mubr.bf16.gmra.mxu0 %v1365
    %v1401 = vpop.f32.mrf.mxu0
    %v1402 = vadd.f32 0.0, %v1401
    %v1403 = vpop.f32.mrf.mxu0
    %v1404 = vpop.f32.mrf.mxu0
    %v1405 = vpop.f32.mrf.mxu0
    %1406 = vdwg.mxu0
    %v1407 = vadd.f32 %v1359, %v1402
    %v1408 = vxor.u32 %v1407, 2147483648
    %v1409 = vmul.f32 %v1408, 1.442695
    %v1410 = vpow.pop %v1409
    %v1411 = vadd.f32 %v1410, 1.0
    %v1412 = vrcp.pop %v1411
    %v1413 = vmul.f32 1.0, %v1412
    %v1414 = vtanh.pop %v1407
    %v1415 = vmul.f32 %v1413, %v1189
    %1417 = vrot.lane.b32.xlu0 %v1414, 64
    %v1418 = vpop.permute.xlu0 %1417
    %v1420 = vmul.f32 %v1413, %v1418
    %1422 = vrot.lane.b32.xlu0 %v1420, 32
    %v1423 = vpop.permute.xlu0 %1422
    %v1425 = vadd.f32 %v1415, %v1423
    %v1426 = vtanh.pop %v1425
    %1428 = vrot.lane.b32.xlu0 %v1426, 64
    %v1429 = vpop.permute.xlu0 %1428
    %v1431 = vmul.f32 %v1413, %v1429
    %v1434 = vunpack.c.l.s4 1983009808
    %v1435 = vunpack.c.0.s8 %v1434
    %v1436 = vlaneseq
    %v1437 = vshrl.u32 %v1436, 7
    %v1438 = vsub.s32 %v1435, %v1437
    %v1439 = vrot.slane %v1431, %v1438
    %1440 = vrot.lane.b32.xlu0 %v1439, 32
    %v1441 = vpop.permute.xlu0 %1440
    %1443 = vrot.lane.b32.xlu0 %v1278, 64
    %v1444 = vpop.permute.xlu0 %1443
    %v1446 = vsel %vm97, %v1441, %v1444
    %v1447 = vpack.c.bf16 %v1446, %v1446
    %v1449 = vsel %vm226, %v1447, 0
    %1451 = vmatprep.subr.bf16.mxu0 0
    %1452 = vmatpush1.bf16.msra.mxu0 0
    %1453 = vmatprep.subr.bf16.mxu0 0
    %1454 = vmatpush1.bf16.msra.mxu0 0
    %1455 = vmatprep.subr.bf16.mxu0 0
    %1456 = vmatpush1.bf16.msra.mxu0 0
    %1457 = vmatprep.subr.bf16.mxu0 0
    %1458 = vmatpush1.bf16.msra.mxu0 0
    %1459 = vmatprep.subr.bf16.mxu0 0
    %1460 = vmatpush1.bf16.msra.mxu0 %v221
    %1461 = vmatprep.subr.bf16.mxu0 0
    %1462 = vmatpush1.bf16.msra.mxu0 %v220
    %1463 = vmatprep.subr.bf16.mxu0 0
    %1464 = vmatpush1.bf16.msra.mxu0 %v219
    %1465 = vmatprep.subr.bf16.mxu0 0
    %1466 = vmatpush1.bf16.msra.mxu0 %v218
    %1467 = vmatprep.subr.bf16.mxu0 0
    %1468 = vmatpush2.bf16.msra.mxu0 0
    %1469 = vmatprep.subr.bf16.mxu0 0
    %1470 = vmatpush2.bf16.msra.mxu0 0
    %1471 = vmatprep.subr.bf16.mxu0 0
    %1472 = vmatpush2.bf16.msra.mxu0 0
    %1473 = vmatprep.subr.bf16.mxu0 0
    %1474 = vmatpush2.bf16.msra.mxu0 0
    %1475 = vmatprep.subr.bf16.mxu0 0
    %1476 = vmatpush2.bf16.msra.mxu0 0
    %1477 = vmatprep.subr.bf16.mxu0 0
    %1478 = vmatpush2.bf16.msra.mxu0 0
    %1479 = vmatprep.subr.bf16.mxu0 0
    %1480 = vmatpush2.bf16.msra.mxu0 0
    %1481 = vmatprep.subr.bf16.mxu0 0
    %1482 = vmatpush2.bf16.msra.mxu0 0
    %1483 = vmatprep.mubr.bf16.mxu0 0
    %1484 = vmatmul.mubr.bf16.gmra.mxu0 %v1449
    %v1485 = vpop.f32.mrf.mxu0
    %v1486 = vadd.f32 %v57, %v1485
    %v1487 = vpop.f32.mrf.mxu0
    %v1488 = vpop.f32.mrf.mxu0
    %v1489 = vpop.f32.mrf.mxu0
    %1490 = vdwg.mxu0
    %v1491 = vxor.u32 %v1486, 2147483648
    %v1492 = vmul.f32 %v1491, 1.442695
    %v1493 = vpow.pop %v1492
    %v1494 = vadd.f32 %v1493, 1.0
    %v1495 = vrcp.pop %v1494
    %v1496 = vmul.f32 1.0, %v1495
    %v1497 = vtanh.pop %v1486
    %v1498 = vmul.f32 %v1496, %v1272
    %1500 = vrot.lane.b32.xlu0 %v1497, 64
    %v1501 = vpop.permute.xlu0 %1500
    %v1503 = vmul.f32 %v1496, %v1501
    %1505 = vrot.lane.b32.xlu0 %v1503, 32
    %v1506 = vpop.permute.xlu0 %1505
    %v1508 = vadd.f32 %v1498, %v1506
    %v1509 = vtanh.pop %v1508
    %1511 = vrot.lane.b32.xlu0 %v1509, 64
    %v1512 = vpop.permute.xlu0 %1511
    %v1514 = vmul.f32 %v1496, %v1512
    %1516 = vrot.lane.b32.xlu0 %v1514, 32
    %v1517 = vpop.permute.xlu0 %1516
    %1520 = vrot.lane.b32.xlu0 %v1355, 64
    %v1521 = vpop.permute.xlu0 %1520
    %v1523 = vsel %vm97, %v1517, %v1521
    %v1524 = vpack.c.bf16 %v1523, %v1523
    %v1526 = vsel %vm226, %v1524, 0
    %1528 = vmatprep.subr.bf16.mxu0 0
    %1529 = vmatpush1.bf16.msra.mxu0 0
    %1530 = vmatprep.subr.bf16.mxu0 0
    %1531 = vmatpush1.bf16.msra.mxu0 0
    %1532 = vmatprep.subr.bf16.mxu0 0
    %1533 = vmatpush1.bf16.msra.mxu0 0
    %1534 = vmatprep.subr.bf16.mxu0 0
    %1535 = vmatpush1.bf16.msra.mxu0 0
    %1536 = vmatprep.subr.bf16.mxu0 0
    %1537 = vmatpush1.bf16.msra.mxu0 %v336
    %1538 = vmatprep.subr.bf16.mxu0 0
    %1539 = vmatpush1.bf16.msra.mxu0 %v335
    %1540 = vmatprep.subr.bf16.mxu0 0
    %1541 = vmatpush1.bf16.msra.mxu0 %v334
    %1542 = vmatprep.subr.bf16.mxu0 0
    %1543 = vmatpush1.bf16.msra.mxu0 %v333
    %1544 = vmatprep.subr.bf16.mxu0 0
    %1545 = vmatpush2.bf16.msra.mxu0 0
    %1546 = vmatprep.subr.bf16.mxu0 0
    %1547 = vmatpush2.bf16.msra.mxu0 0
    %1548 = vmatprep.subr.bf16.mxu0 0
    %1549 = vmatpush2.bf16.msra.mxu0 0
    %1550 = vmatprep.subr.bf16.mxu0 0
    %1551 = vmatpush2.bf16.msra.mxu0 0
    %1552 = vmatprep.subr.bf16.mxu0 0
    %1553 = vmatpush2.bf16.msra.mxu0 0
    %1554 = vmatprep.subr.bf16.mxu0 0
    %1555 = vmatpush2.bf16.msra.mxu0 0
    %1556 = vmatprep.subr.bf16.mxu0 0
    %1557 = vmatpush2.bf16.msra.mxu0 0
    %1558 = vmatprep.subr.bf16.mxu0 0
    %1559 = vmatpush2.bf16.msra.mxu0 0
    %1560 = vmatprep.mubr.bf16.mxu0 0
    %1561 = vmatmul.mubr.bf16.gmra.mxu0 %v1526
    %v1562 = vpop.f32.mrf.mxu0
    %v1563 = vadd.f32 %v65, %v1562
    %v1564 = vpop.f32.mrf.mxu0
    %v1565 = vpop.f32.mrf.mxu0
    %v1566 = vpop.f32.mrf.mxu0
    %1567 = vdwg.mxu0
    %v1568 = vxor.u32 %v1563, 2147483648
    %v1569 = vmul.f32 %v1568, 1.442695
    %v1570 = vpow.pop %v1569
    %v1571 = vadd.f32 %v1570, 1.0
    %v1572 = vrcp.pop %v1571
    %v1573 = vmul.f32 1.0, %v1572
    %v1574 = vtanh.pop %v1563
    %v1575 = vmul.f32 %v1573, %v1349
    %1577 = vrot.lane.b32.xlu0 %v1574, 64
    %v1578 = vpop.permute.xlu0 %1577
    %v1580 = vmul.f32 %v1573, %v1578
    %1582 = vrot.lane.b32.xlu0 %v1580, 32
    %v1583 = vpop.permute.xlu0 %1582
    %v1585 = vadd.f32 %v1575, %v1583
    %v1586 = vtanh.pop %v1585
    %1588 = vrot.lane.b32.xlu0 %v1586, 64
    %v1589 = vpop.permute.xlu0 %1588
    %v1591 = vmul.f32 %v1573, %v1589
    %s1592 = scalar_lea.vmem %s0, 6
    %v1593 = vld [vmem:[%s1592] sm:$0x1]
    %v1594 = vunpack.c.l.bf16 %v1593
    %v1595 = vadd.f32 %v1594, %v50
    %v1596 = vpack.c.bf16 %v1431, %v1431
    %1598 = vrot.lane.b32.xlu0 %v1596, 32
    %v1599 = vpop.permute.xlu0 %1598
    %v1601 = vsel %vm97, %v1599, 0
    %1603 = vmatprep.subr.bf16.mxu0 0
    %1604 = vmatpush1.bf16.msra.mxu0 0
    %1605 = vmatprep.subr.bf16.mxu0 0
    %1606 = vmatpush1.bf16.msra.mxu0 0
    %1607 = vmatprep.subr.bf16.mxu0 0
    %1608 = vmatpush1.bf16.msra.mxu0 0
    %1609 = vmatprep.subr.bf16.mxu0 0
    %1610 = vmatpush1.bf16.msra.mxu0 0
    %1611 = vmatprep.subr.bf16.mxu0 0
    %1612 = vmatpush1.bf16.msra.mxu0 0
    %1613 = vmatprep.subr.bf16.mxu0 0
    %1614 = vmatpush1.bf16.msra.mxu0 0
    %1615 = vmatprep.subr.bf16.mxu0 0
    %1616 = vmatpush1.bf16.msra.mxu0 %v94
    %1617 = vmatprep.subr.bf16.mxu0 0
    %1618 = vmatpush1.bf16.msra.mxu0 %v93
    %1619 = vmatprep.subr.bf16.mxu0 0
    %1620 = vmatpush2.bf16.msra.mxu0 0
    %1621 = vmatprep.subr.bf16.mxu0 0
    %1622 = vmatpush2.bf16.msra.mxu0 0
    %1623 = vmatprep.subr.bf16.mxu0 0
    %1624 = vmatpush2.bf16.msra.mxu0 0
    %1625 = vmatprep.subr.bf16.mxu0 0
    %1626 = vmatpush2.bf16.msra.mxu0 0
    %1627 = vmatprep.subr.bf16.mxu0 0
    %1628 = vmatpush2.bf16.msra.mxu0 0
    %1629 = vmatprep.subr.bf16.mxu0 0
    %1630 = vmatpush2.bf16.msra.mxu0 0
    %1631 = vmatprep.subr.bf16.mxu0 0
    %1632 = vmatpush2.bf16.msra.mxu0 0
    %1633 = vmatprep.subr.bf16.mxu0 0
    %1634 = vmatpush2.bf16.msra.mxu0 0
    %1635 = vmatprep.mubr.bf16.mxu0 0
    %1636 = vmatmul.mubr.bf16.gmra.mxu0 %v1601
    %v1637 = vpop.f32.mrf.mxu0
    %v1638 = vadd.f32 0.0, %v1637
    %v1639 = vpop.f32.mrf.mxu0
    %v1640 = vpop.f32.mrf.mxu0
    %v1641 = vpop.f32.mrf.mxu0
    %1642 = vdwg.mxu0
    %v1643 = vadd.f32 %v1595, %v1638
    %v1644 = vxor.u32 %v1643, 2147483648
    %v1645 = vmul.f32 %v1644, 1.442695
    %v1646 = vpow.pop %v1645
    %v1647 = vadd.f32 %v1646, 1.0
    %v1648 = vrcp.pop %v1647
    %v1649 = vmul.f32 1.0, %v1648
    %v1650 = vtanh.pop %v1643
    %v1651 = vmul.f32 %v1649, %v1425
    %1653 = vrot.lane.b32.xlu0 %v1650, 64
    %v1654 = vpop.permute.xlu0 %1653
    %v1656 = vmul.f32 %v1649, %v1654
    %1658 = vrot.lane.b32.xlu0 %v1656, 32
    %v1659 = vpop.permute.xlu0 %1658
    %v1661 = vadd.f32 %v1651, %v1659
    %v1662 = vtanh.pop %v1661
    %1664 = vrot.lane.b32.xlu0 %v1662, 64
    %v1665 = vpop.permute.xlu0 %1664
    %v1667 = vmul.f32 %v1649, %v1665
    %v1670 = vunpack.c.l.s4 1983009808
    %v1671 = vunpack.c.0.s8 %v1670
    %v1672 = vlaneseq
    %v1673 = vshrl.u32 %v1672, 7
    %v1674 = vsub.s32 %v1671, %v1673
    %v1675 = vrot.slane %v1667, %v1674
    %1676 = vrot.lane.b32.xlu0 %v1675, 32
    %v1677 = vpop.permute.xlu0 %1676
    %1679 = vrot.lane.b32.xlu0 %v1514, 64
    %v1680 = vpop.permute.xlu0 %1679
    %v1682 = vsel %vm97, %v1677, %v1680
    %v1683 = vpack.c.bf16 %v1682, %v1682
    %v1685 = vsel %vm226, %v1683, 0
    %1687 = vmatprep.subr.bf16.mxu0 0
    %1688 = vmatpush1.bf16.msra.mxu0 0
    %1689 = vmatprep.subr.bf16.mxu0 0
    %1690 = vmatpush1.bf16.msra.mxu0 0
    %1691 = vmatprep.subr.bf16.mxu0 0
    %1692 = vmatpush1.bf16.msra.mxu0 0
    %1693 = vmatprep.subr.bf16.mxu0 0
    %1694 = vmatpush1.bf16.msra.mxu0 0
    %1695 = vmatprep.subr.bf16.mxu0 0
    %1696 = vmatpush1.bf16.msra.mxu0 %v221
    %1697 = vmatprep.subr.bf16.mxu0 0
    %1698 = vmatpush1.bf16.msra.mxu0 %v220
    %1699 = vmatprep.subr.bf16.mxu0 0
    %1700 = vmatpush1.bf16.msra.mxu0 %v219
    %1701 = vmatprep.subr.bf16.mxu0 0
    %1702 = vmatpush1.bf16.msra.mxu0 %v218
    %1703 = vmatprep.subr.bf16.mxu0 0
    %1704 = vmatpush2.bf16.msra.mxu0 0
    %1705 = vmatprep.subr.bf16.mxu0 0
    %1706 = vmatpush2.bf16.msra.mxu0 0
    %1707 = vmatprep.subr.bf16.mxu0 0
    %1708 = vmatpush2.bf16.msra.mxu0 0
    %1709 = vmatprep.subr.bf16.mxu0 0
    %1710 = vmatpush2.bf16.msra.mxu0 0
    %1711 = vmatprep.subr.bf16.mxu0 0
    %1712 = vmatpush2.bf16.msra.mxu0 0
    %1713 = vmatprep.subr.bf16.mxu0 0
    %1714 = vmatpush2.bf16.msra.mxu0 0
    %1715 = vmatprep.subr.bf16.mxu0 0
    %1716 = vmatpush2.bf16.msra.mxu0 0
    %1717 = vmatprep.subr.bf16.mxu0 0
    %1718 = vmatpush2.bf16.msra.mxu0 0
    %1719 = vmatprep.mubr.bf16.mxu0 0
    %1720 = vmatmul.mubr.bf16.gmra.mxu0 %v1685
    %v1721 = vpop.f32.mrf.mxu0
    %v1722 = vadd.f32 %v57, %v1721
    %v1723 = vpop.f32.mrf.mxu0
    %v1724 = vpop.f32.mrf.mxu0
    %v1725 = vpop.f32.mrf.mxu0
    %1726 = vdwg.mxu0
    %v1727 = vxor.u32 %v1722, 2147483648
    %v1728 = vmul.f32 %v1727, 1.442695
    %v1729 = vpow.pop %v1728
    %v1730 = vadd.f32 %v1729, 1.0
    %v1731 = vrcp.pop %v1730
    %v1732 = vmul.f32 1.0, %v1731
    %v1733 = vtanh.pop %v1722
    %v1734 = vmul.f32 %v1732, %v1508
    %1736 = vrot.lane.b32.xlu0 %v1733, 64
    %v1737 = vpop.permute.xlu0 %1736
    %v1739 = vmul.f32 %v1732, %v1737
    %1741 = vrot.lane.b32.xlu0 %v1739, 32
    %v1742 = vpop.permute.xlu0 %1741
    %v1744 = vadd.f32 %v1734, %v1742
    %v1745 = vtanh.pop %v1744
    %1747 = vrot.lane.b32.xlu0 %v1745, 64
    %v1748 = vpop.permute.xlu0 %1747
    %v1750 = vmul.f32 %v1732, %v1748
    %1752 = vrot.lane.b32.xlu0 %v1750, 32
    %v1753 = vpop.permute.xlu0 %1752
    %1756 = vrot.lane.b32.xlu0 %v1591, 64
    %v1757 = vpop.permute.xlu0 %1756
    %v1759 = vsel %vm97, %v1753, %v1757
    %v1760 = vpack.c.bf16 %v1759, %v1759
    %v1762 = vsel %vm226, %v1760, 0
    %1764 = vmatprep.subr.bf16.mxu0 0
    %1765 = vmatpush1.bf16.msra.mxu0 0
    %1766 = vmatprep.subr.bf16.mxu0 0
    %1767 = vmatpush1.bf16.msra.mxu0 0
    %1768 = vmatprep.subr.bf16.mxu0 0
    %1769 = vmatpush1.bf16.msra.mxu0 0
    %1770 = vmatprep.subr.bf16.mxu0 0
    %1771 = vmatpush1.bf16.msra.mxu0 0
    %1772 = vmatprep.subr.bf16.mxu0 0
    %1773 = vmatpush1.bf16.msra.mxu0 %v336
    %1774 = vmatprep.subr.bf16.mxu0 0
    %1775 = vmatpush1.bf16.msra.mxu0 %v335
    %1776 = vmatprep.subr.bf16.mxu0 0
    %1777 = vmatpush1.bf16.msra.mxu0 %v334
    %1778 = vmatprep.subr.bf16.mxu0 0
    %1779 = vmatpush1.bf16.msra.mxu0 %v333
    %1780 = vmatprep.subr.bf16.mxu0 0
    %1781 = vmatpush2.bf16.msra.mxu0 0
    %1782 = vmatprep.subr.bf16.mxu0 0
    %1783 = vmatpush2.bf16.msra.mxu0 0
    %1784 = vmatprep.subr.bf16.mxu0 0
    %1785 = vmatpush2.bf16.msra.mxu0 0
    %1786 = vmatprep.subr.bf16.mxu0 0
    %1787 = vmatpush2.bf16.msra.mxu0 0
    %1788 = vmatprep.subr.bf16.mxu0 0
    %1789 = vmatpush2.bf16.msra.mxu0 0
    %1790 = vmatprep.subr.bf16.mxu0 0
    %1791 = vmatpush2.bf16.msra.mxu0 0
    %1792 = vmatprep.subr.bf16.mxu0 0
    %1793 = vmatpush2.bf16.msra.mxu0 0
    %1794 = vmatprep.subr.bf16.mxu0 0
    %1795 = vmatpush2.bf16.msra.mxu0 0
    %1796 = vmatprep.mubr.bf16.mxu0 0
    %1797 = vmatmul.mubr.bf16.gmra.mxu0 %v1762
    %v1798 = vpop.f32.mrf.mxu0
    %v1799 = vadd.f32 %v65, %v1798
    %v1800 = vpop.f32.mrf.mxu0
    %v1801 = vpop.f32.mrf.mxu0
    %v1802 = vpop.f32.mrf.mxu0
    %1803 = vdwg.mxu0
    %v1804 = vxor.u32 %v1799, 2147483648
    %v1805 = vmul.f32 %v1804, 1.442695
    %v1806 = vpow.pop %v1805
    %v1807 = vadd.f32 %v1806, 1.0
    %v1808 = vrcp.pop %v1807
    %v1809 = vmul.f32 1.0, %v1808
    %v1810 = vtanh.pop %v1799
    %v1811 = vmul.f32 %v1809, %v1585
    %1813 = vrot.lane.b32.xlu0 %v1810, 64
    %v1814 = vpop.permute.xlu0 %1813
    %v1816 = vmul.f32 %v1809, %v1814
    %1818 = vrot.lane.b32.xlu0 %v1816, 32
    %v1819 = vpop.permute.xlu0 %1818
    %v1821 = vadd.f32 %v1811, %v1819
    %v1822 = vtanh.pop %v1821
    %1824 = vrot.lane.b32.xlu0 %v1822, 64
    %v1825 = vpop.permute.xlu0 %1824
    %v1827 = vmul.f32 %v1809, %v1825
    %s1828 = scalar_lea.vmem %s0, 7
    %v1829 = vld [vmem:[%s1828] sm:$0x1]
    %v1830 = vunpack.c.l.bf16 %v1829
    %v1831 = vadd.f32 %v1830, %v50
    %v1832 = vpack.c.bf16 %v1667, %v1667
    %1834 = vrot.lane.b32.xlu0 %v1832, 32
    %v1835 = vpop.permute.xlu0 %1834
    %v1837 = vsel %vm97, %v1835, 0
    %1839 = vmatprep.subr.bf16.mxu0 0
    %1840 = vmatpush1.bf16.msra.mxu0 0
    %1841 = vmatprep.subr.bf16.mxu0 0
    %1842 = vmatpush1.bf16.msra.mxu0 0
    %1843 = vmatprep.subr.bf16.mxu0 0
    %1844 = vmatpush1.bf16.msra.mxu0 0
    %1845 = vmatprep.subr.bf16.mxu0 0
    %1846 = vmatpush1.bf16.msra.mxu0 0
    %1847 = vmatprep.subr.bf16.mxu0 0
    %1848 = vmatpush1.bf16.msra.mxu0 0
    %1849 = vmatprep.subr.bf16.mxu0 0
    %1850 = vmatpush1.bf16.msra.mxu0 0
    %1851 = vmatprep.subr.bf16.mxu0 0
    %1852 = vmatpush1.bf16.msra.mxu0 %v94
    %1853 = vmatprep.subr.bf16.mxu0 0
    %1854 = vmatpush1.bf16.msra.mxu0 %v93
    %1855 = vmatprep.subr.bf16.mxu0 0
    %1856 = vmatpush2.bf16.msra.mxu0 0
    %1857 = vmatprep.subr.bf16.mxu0 0
    %1858 = vmatpush2.bf16.msra.mxu0 0
    %1859 = vmatprep.subr.bf16.mxu0 0
    %1860 = vmatpush2.bf16.msra.mxu0 0
    %1861 = vmatprep.subr.bf16.mxu0 0
    %1862 = vmatpush2.bf16.msra.mxu0 0
    %1863 = vmatprep.subr.bf16.mxu0 0
    %1864 = vmatpush2.bf16.msra.mxu0 0
    %1865 = vmatprep.subr.bf16.mxu0 0
    %1866 = vmatpush2.bf16.msra.mxu0 0
    %1867 = vmatprep.subr.bf16.mxu0 0
    %1868 = vmatpush2.bf16.msra.mxu0 0
    %1869 = vmatprep.subr.bf16.mxu0 0
    %1870 = vmatpush2.bf16.msra.mxu0 0
    %1871 = vmatprep.mubr.bf16.mxu0 0
    %1872 = vmatmul.mubr.bf16.gmra.mxu0 %v1837
    %v1873 = vpop.f32.mrf.mxu0
    %v1874 = vadd.f32 0.0, %v1873
    %v1875 = vpop.f32.mrf.mxu0
    %v1876 = vpop.f32.mrf.mxu0
    %v1877 = vpop.f32.mrf.mxu0
    %1878 = vdwg.mxu0
    %v1879 = vadd.f32 %v1831, %v1874
    %v1880 = vxor.u32 %v1879, 2147483648
    %v1881 = vmul.f32 %v1880, 1.442695
    %v1882 = vpow.pop %v1881
    %v1883 = vadd.f32 %v1882, 1.0
    %v1884 = vrcp.pop %v1883
    %v1885 = vmul.f32 1.0, %v1884
    %v1886 = vtanh.pop %v1879
    %v1887 = vmul.f32 %v1885, %v1661
    %1889 = vrot.lane.b32.xlu0 %v1886, 64
    %v1890 = vpop.permute.xlu0 %1889
    %v1892 = vmul.f32 %v1885, %v1890
    %1894 = vrot.lane.b32.xlu0 %v1892, 32
    %v1895 = vpop.permute.xlu0 %1894
    %v1897 = vadd.f32 %v1887, %v1895
    %v1898 = vtanh.pop %v1897
    %1900 = vrot.lane.b32.xlu0 %v1898, 64
    %v1901 = vpop.permute.xlu0 %1900
    %v1903 = vmul.f32 %v1885, %v1901
    %v1906 = vunpack.c.l.s4 1983009808
    %v1907 = vunpack.c.0.s8 %v1906
    %v1908 = vlaneseq
    %v1909 = vshrl.u32 %v1908, 7
    %v1910 = vsub.s32 %v1907, %v1909
    %v1911 = vrot.slane %v1903, %v1910
    %1912 = vrot.lane.b32.xlu0 %v1911, 32
    %v1913 = vpop.permute.xlu0 %1912
    %1915 = vrot.lane.b32.xlu0 %v1750, 64
    %v1916 = vpop.permute.xlu0 %1915
    %v1918 = vsel %vm97, %v1913, %v1916
    %v1919 = vpack.c.bf16 %v1918, %v1918
    %v1921 = vsel %vm226, %v1919, 0
    %1923 = vmatprep.subr.bf16.mxu0 0
    %1924 = vmatpush1.bf16.msra.mxu0 0
    %1925 = vmatprep.subr.bf16.mxu0 0
    %1926 = vmatpush1.bf16.msra.mxu0 0
    %1927 = vmatprep.subr.bf16.mxu0 0
    %1928 = vmatpush1.bf16.msra.mxu0 0
    %1929 = vmatprep.subr.bf16.mxu0 0
    %1930 = vmatpush1.bf16.msra.mxu0 0
    %1931 = vmatprep.subr.bf16.mxu0 0
    %1932 = vmatpush1.bf16.msra.mxu0 %v221
    %1933 = vmatprep.subr.bf16.mxu0 0
    %1934 = vmatpush1.bf16.msra.mxu0 %v220
    %1935 = vmatprep.subr.bf16.mxu0 0
    %1936 = vmatpush1.bf16.msra.mxu0 %v219
    %1937 = vmatprep.subr.bf16.mxu0 0
    %1938 = vmatpush1.bf16.msra.mxu0 %v218
    %1939 = vmatprep.subr.bf16.mxu0 0
    %1940 = vmatpush2.bf16.msra.mxu0 0
    %1941 = vmatprep.subr.bf16.mxu0 0
    %1942 = vmatpush2.bf16.msra.mxu0 0
    %1943 = vmatprep.subr.bf16.mxu0 0
    %1944 = vmatpush2.bf16.msra.mxu0 0
    %1945 = vmatprep.subr.bf16.mxu0 0
    %1946 = vmatpush2.bf16.msra.mxu0 0
    %1947 = vmatprep.subr.bf16.mxu0 0
    %1948 = vmatpush2.bf16.msra.mxu0 0
    %1949 = vmatprep.subr.bf16.mxu0 0
    %1950 = vmatpush2.bf16.msra.mxu0 0
    %1951 = vmatprep.subr.bf16.mxu0 0
    %1952 = vmatpush2.bf16.msra.mxu0 0
    %1953 = vmatprep.subr.bf16.mxu0 0
    %1954 = vmatpush2.bf16.msra.mxu0 0
    %1955 = vmatprep.mubr.bf16.mxu0 0
    %1956 = vmatmul.mubr.bf16.gmra.mxu0 %v1921
    %v1957 = vpop.f32.mrf.mxu0
    %v1958 = vadd.f32 %v57, %v1957
    %v1959 = vpop.f32.mrf.mxu0
    %v1960 = vpop.f32.mrf.mxu0
    %v1961 = vpop.f32.mrf.mxu0
    %1962 = vdwg.mxu0
    %v1963 = vxor.u32 %v1958, 2147483648
    %v1964 = vmul.f32 %v1963, 1.442695
    %v1965 = vpow.pop %v1964
    %v1966 = vadd.f32 %v1965, 1.0
    %v1967 = vrcp.pop %v1966
    %v1968 = vmul.f32 1.0, %v1967
    %v1969 = vtanh.pop %v1958
    %v1970 = vmul.f32 %v1968, %v1744
    %1972 = vrot.lane.b32.xlu0 %v1969, 64
    %v1973 = vpop.permute.xlu0 %1972
    %v1975 = vmul.f32 %v1968, %v1973
    %1977 = vrot.lane.b32.xlu0 %v1975, 32
    %v1978 = vpop.permute.xlu0 %1977
    %v1980 = vadd.f32 %v1970, %v1978
    %v1981 = vtanh.pop %v1980
    %1983 = vrot.lane.b32.xlu0 %v1981, 64
    %v1984 = vpop.permute.xlu0 %1983
    %v1986 = vmul.f32 %v1968, %v1984
    %1988 = vrot.lane.b32.xlu0 %v1986, 32
    %v1989 = vpop.permute.xlu0 %1988
    %1992 = vrot.lane.b32.xlu0 %v1827, 64
    %v1993 = vpop.permute.xlu0 %1992
    %v1995 = vsel %vm97, %v1989, %v1993
    %v1996 = vpack.c.bf16 %v1995, %v1995
    %v1998 = vsel %vm226, %v1996, 0
    %2000 = vmatprep.subr.bf16.mxu0 0
    %2001 = vmatpush1.bf16.msra.mxu0 0
    %2002 = vmatprep.subr.bf16.mxu0 0
    %2003 = vmatpush1.bf16.msra.mxu0 0
    %2004 = vmatprep.subr.bf16.mxu0 0
    %2005 = vmatpush1.bf16.msra.mxu0 0
    %2006 = vmatprep.subr.bf16.mxu0 0
    %2007 = vmatpush1.bf16.msra.mxu0 0
    %2008 = vmatprep.subr.bf16.mxu0 0
    %2009 = vmatpush1.bf16.msra.mxu0 %v336
    %2010 = vmatprep.subr.bf16.mxu0 0
    %2011 = vmatpush1.bf16.msra.mxu0 %v335
    %2012 = vmatprep.subr.bf16.mxu0 0
    %2013 = vmatpush1.bf16.msra.mxu0 %v334
    %2014 = vmatprep.subr.bf16.mxu0 0
    %2015 = vmatpush1.bf16.msra.mxu0 %v333
    %2016 = vmatprep.subr.bf16.mxu0 0
    %2017 = vmatpush2.bf16.msra.mxu0 0
    %2018 = vmatprep.subr.bf16.mxu0 0
    %2019 = vmatpush2.bf16.msra.mxu0 0
    %2020 = vmatprep.subr.bf16.mxu0 0
    %2021 = vmatpush2.bf16.msra.mxu0 0
    %2022 = vmatprep.subr.bf16.mxu0 0
    %2023 = vmatpush2.bf16.msra.mxu0 0
    %2024 = vmatprep.subr.bf16.mxu0 0
    %2025 = vmatpush2.bf16.msra.mxu0 0
    %2026 = vmatprep.subr.bf16.mxu0 0
    %2027 = vmatpush2.bf16.msra.mxu0 0
    %2028 = vmatprep.subr.bf16.mxu0 0
    %2029 = vmatpush2.bf16.msra.mxu0 0
    %2030 = vmatprep.subr.bf16.mxu0 0
    %2031 = vmatpush2.bf16.msra.mxu0 0
    %2032 = vmatprep.mubr.bf16.mxu0 0
    %2033 = vmatmul.mubr.bf16.gmra.mxu0 %v1998
    %v2034 = vpop.f32.mrf.mxu0
    %v2035 = vadd.f32 %v65, %v2034
    %v2036 = vpop.f32.mrf.mxu0
    %v2037 = vpop.f32.mrf.mxu0
    %v2038 = vpop.f32.mrf.mxu0
    %2039 = vdwg.mxu0
    %v2040 = vxor.u32 %v2035, 2147483648
    %v2041 = vmul.f32 %v2040, 1.442695
    %v2042 = vpow.pop %v2041
    %v2043 = vadd.f32 %v2042, 1.0
    %v2044 = vrcp.pop %v2043
    %v2045 = vmul.f32 1.0, %v2044
    %v2046 = vtanh.pop %v2035
    %v2047 = vmul.f32 %v2045, %v1821
    %2049 = vrot.lane.b32.xlu0 %v2046, 64
    %v2050 = vpop.permute.xlu0 %2049
    %v2052 = vmul.f32 %v2045, %v2050
    %2054 = vrot.lane.b32.xlu0 %v2052, 32
    %v2055 = vpop.permute.xlu0 %2054
    %v2057 = vadd.f32 %v2047, %v2055
    %v2058 = vtanh.pop %v2057
    %2060 = vrot.lane.b32.xlu0 %v2058, 64
    %v2061 = vpop.permute.xlu0 %2060
    %v2063 = vmul.f32 %v2045, %v2061
    %vm2064 = vcmask 254976
    %2065 = vst.msk [vmem:[#allocation2] sm:$0x3] %vm2064, %v1913
    %v2068 = vunpack.c.l.s4 1983009808
    %v2069 = vunpack.c.0.s8 %v2068
    %v2070 = vlaneseq
    %v2071 = vshrl.u32 %v2070, 7
    %v2072 = vsub.s32 %v2069, %v2071
    %v2073 = vrot.slane %v1897, %v2072
    %2074 = vrot.lane.b32.xlu0 %v2073, 96
    %v2075 = vpop.permute.xlu0 %2074
    %2077 = vst.msk [vmem:[#allocation3] sm:$0x3] %vm2064, %v2075
    %2078 = vst.msk [vmem:[%s68] sm:$0x3] %vm2064, %v1989
    %2080 = vrot.lane.b32.xlu0 %v1980, 96
    %v2081 = vpop.permute.xlu0 %2080
    %2083 = vst.msk [vmem:[%s73] sm:$0x3] %vm2064, %v2081
    %2085 = vrot.lane.b32.xlu0 %v2063, 32
    %v2086 = vpop.permute.xlu0 %2085
    %2088 = vst.msk [vmem:[%s70] sm:$0x3] %vm2064, %v2086
    %2090 = vrot.lane.b32.xlu0 %v2057, 96
    %v2091 = vpop.permute.xlu0 %2090
    %2093 = vst.msk [vmem:[%s75] sm:$0x3] %vm2064, %v2091
    // Predicated region
    $region42: #{lstm_model_forward.1} parent=1 // pred_check
      %p2094 = pneg %p34
    $region43: #{lstm_model_forward.1} parent=1 // pred_check_branch
      %2096 = sbr.rel (%p2094) target = $region45
    $region44: #{lstm_model_forward.1} parent=1 // pred_region
      %v2097 = vpack.c.bf16 %v2063, %v2063
      %v2098 = vld [vmem:[%s5] sm:$0xf]
      %v2099 = vld [vmem:[%s5 + $0x4] sm:$0xf]
      %v2100 = vld [vmem:[%s5 + $0x8] sm:$0xf]
      %v2101 = vld [vmem:[%s5 + $0xc] sm:$0xf]
      %v2102 = vld [vmem:[%s6] sm:$0x1]
      %v2104 = vlaneseq
      %v2105 = vshrl.u32 %v2104, 7
      %v2106 = vsub.s32 0, %v2105
      %v2107 = vrot.slane %v2102, %v2106
      %2110 = vrot.lane.b32.xlu0 %v2097, 32
      %v2111 = vpop.permute.xlu0 %2110
      %v2116 = vunpack.c.l.b16 %v2098
      %v2117 = vunpack.c.l.b16 %v2099
      %v2118 = vunpack.c.l.b16 %v2100
      %v2119 = vunpack.c.l.b16 %v2101
      %v2120 = vpack.c.b16 %v2117, %v2116
      %v2121 = vpack.c.b16 %v2119, %v2118
      %v2125 = vsel %vm97, %v2111, 0
      %2127 = vmatprep.subr.bf16.mxu0 0
      %2128 = vmatpush1.bf16.msra.mxu0 0
      %2129 = vmatprep.subr.bf16.mxu0 0
      %2130 = vmatpush1.bf16.msra.mxu0 0
      %2131 = vmatprep.subr.bf16.mxu0 0
      %2132 = vmatpush1.bf16.msra.mxu0 0
      %2133 = vmatprep.subr.bf16.mxu0 0
      %2134 = vmatpush1.bf16.msra.mxu0 0
      %2135 = vmatprep.subr.bf16.mxu0 0
      %2136 = vmatpush1.bf16.msra.mxu0 0
      %2137 = vmatprep.subr.bf16.mxu0 0
      %2138 = vmatpush1.bf16.msra.mxu0 0
      %2139 = vmatprep.subr.bf16.mxu0 0
      %2140 = vmatpush1.bf16.msra.mxu0 %v2121
      %2141 = vmatprep.subr.bf16.mxu0 0
      %2142 = vmatpush1.bf16.msra.mxu0 %v2120
      %2143 = vmatprep.subr.bf16.mxu0 0
      %2144 = vmatpush2.bf16.msra.mxu0 0
      %2145 = vmatprep.subr.bf16.mxu0 0
      %2146 = vmatpush2.bf16.msra.mxu0 0
      %2147 = vmatprep.subr.bf16.mxu0 0
      %2148 = vmatpush2.bf16.msra.mxu0 0
      %2149 = vmatprep.subr.bf16.mxu0 0
      %2150 = vmatpush2.bf16.msra.mxu0 0
      %2151 = vmatprep.subr.bf16.mxu0 0
      %2152 = vmatpush2.bf16.msra.mxu0 0
      %2153 = vmatprep.subr.bf16.mxu0 0
      %2154 = vmatpush2.bf16.msra.mxu0 0
      %2155 = vmatprep.subr.bf16.mxu0 0
      %2156 = vmatpush2.bf16.msra.mxu0 0
      %2157 = vmatprep.subr.bf16.mxu0 0
      %2158 = vmatpush2.bf16.msra.mxu0 0
      %2159 = vmatprep.mubr.bf16.mxu0 0
      %2160 = vmatmul.mubr.bf16.gmra.mxu0 %v2125
      %v2161 = vpop.f32.mrf.mxu0
      %v2162 = vadd.f32 %v2107, %v2161
      %v2163 = vpop.f32.mrf.mxu0
      %v2164 = vpop.f32.mrf.mxu0
      %v2165 = vpop.f32.mrf.mxu0
      %2166 = vdwg.mxu0
      %v2167 = vmax.f32 %v2162, 0.0
      %v2168 = vpack.c.bf16 %v2167, %v2167
      %v2169 = vld [vmem:[%s7] sm:$0xf]
      %v2170 = vld [vmem:[%s7 + $0x4] sm:$0xf]
      %v2171 = vld [vmem:[%s7 + $0x8] sm:$0xf]
      %v2172 = vld [vmem:[%s7 + $0xc] sm:$0xf]
      %v2173 = vld [vmem:[%s7 + $0x10] sm:$0xf]
      %v2174 = vld [vmem:[%s7 + $0x14] sm:$0xf]
      %v2175 = vld [vmem:[%s7 + $0x18] sm:$0xf]
      %v2176 = vld [vmem:[%s7 + $0x1c] sm:$0xf]
      %v2177 = vld [vmem:[%s7 + $0x20] sm:$0xf]
      %v2178 = vld [vmem:[%s7 + $0x24] sm:$0xf]
      %v2179 = vld [vmem:[%s7 + $0x28] sm:$0xf]
      %v2180 = vld [vmem:[%s7 + $0x2c] sm:$0xf]
      %v2181 = vld [vmem:[%s7 + $0x30] sm:$0xf]
      %v2182 = vld [vmem:[%s7 + $0x34] sm:$0xf]
      %v2183 = vld [vmem:[%s7 + $0x38] sm:$0xf]
      %v2184 = vld [vmem:[%s7 + $0x3c] sm:$0xf]
      %v2185 = vld [vmem:[%s8] sm:$0x1]
      %v2187 = vlaneseq
      %v2188 = vshrl.u32 %v2187, 7
      %v2189 = vsub.s32 0, %v2188
      %v2190 = vrot.slane %v2185, %v2189
      %v2208 = vunpack.c.l.b16 %v2169
      %v2209 = vunpack.c.l.b16 %v2170
      %v2210 = vunpack.c.l.b16 %v2171
      %v2211 = vunpack.c.l.b16 %v2172
      %v2212 = vunpack.c.l.b16 %v2173
      %v2213 = vunpack.c.l.b16 %v2174
      %v2214 = vunpack.c.l.b16 %v2175
      %v2215 = vunpack.c.l.b16 %v2176
      %v2216 = vunpack.c.l.b16 %v2177
      %v2217 = vunpack.c.l.b16 %v2178
      %v2218 = vunpack.c.l.b16 %v2179
      %v2219 = vunpack.c.l.b16 %v2180
      %v2220 = vunpack.c.l.b16 %v2181
      %v2221 = vunpack.c.l.b16 %v2182
      %v2222 = vunpack.c.l.b16 %v2183
      %v2223 = vunpack.c.l.b16 %v2184
      %v2224 = vpack.c.b16 %v2209, %v2208
      %v2225 = vpack.c.b16 %v2211, %v2210
      %v2226 = vpack.c.b16 %v2213, %v2212
      %v2227 = vpack.c.b16 %v2215, %v2214
      %v2228 = vpack.c.b16 %v2217, %v2216
      %v2229 = vpack.c.b16 %v2219, %v2218
      %v2230 = vpack.c.b16 %v2221, %v2220
      %v2231 = vpack.c.b16 %v2223, %v2222
      %2240 = vmatprep.subr.bf16.mxu0 0
      %2241 = vmatpush1.bf16.msra.mxu0 %v2231
      %2242 = vmatprep.subr.bf16.mxu0 0
      %2243 = vmatpush1.bf16.msra.mxu0 %v2230
      %2244 = vmatprep.subr.bf16.mxu0 0
      %2245 = vmatpush1.bf16.msra.mxu0 %v2229
      %2246 = vmatprep.subr.bf16.mxu0 0
      %2247 = vmatpush1.bf16.msra.mxu0 %v2228
      %2248 = vmatprep.subr.bf16.mxu0 0
      %2249 = vmatpush1.bf16.msra.mxu0 %v2227
      %2250 = vmatprep.subr.bf16.mxu0 0
      %2251 = vmatpush1.bf16.msra.mxu0 %v2226
      %2252 = vmatprep.subr.bf16.mxu0 0
      %2253 = vmatpush1.bf16.msra.mxu0 %v2225
      %2254 = vmatprep.subr.bf16.mxu0 0
      %2255 = vmatpush1.bf16.msra.mxu0 %v2224
      %2256 = vmatprep.subr.bf16.mxu0 0
      %2257 = vmatpush2.bf16.msra.mxu0 0
      %2258 = vmatprep.subr.bf16.mxu0 0
      %2259 = vmatpush2.bf16.msra.mxu0 0
      %2260 = vmatprep.subr.bf16.mxu0 0
      %2261 = vmatpush2.bf16.msra.mxu0 0
      %2262 = vmatprep.subr.bf16.mxu0 0
      %2263 = vmatpush2.bf16.msra.mxu0 0
      %2264 = vmatprep.subr.bf16.mxu0 0
      %2265 = vmatpush2.bf16.msra.mxu0 0
      %2266 = vmatprep.subr.bf16.mxu0 0
      %2267 = vmatpush2.bf16.msra.mxu0 0
      %2268 = vmatprep.subr.bf16.mxu0 0
      %2269 = vmatpush2.bf16.msra.mxu0 0
      %2270 = vmatprep.subr.bf16.mxu0 0
      %2271 = vmatpush2.bf16.msra.mxu0 0
      %2272 = vmatprep.mubr.bf16.mxu0 0
      %2273 = vmatmul.mubr.bf16.gmra.mxu0 %v2168
      %v2274 = vpop.f32.mrf.mxu0
      %v2275 = vadd.f32 %v2190, %v2274
      %v2276 = vpop.f32.mrf.mxu0
      %v2277 = vpop.f32.mrf.mxu0
      %v2278 = vpop.f32.mrf.mxu0
      %2279 = vdwg.mxu0
      %vm2280 = vcmask 58368
      %v2281 = vsel %vm2280, %v2275, -inf
      %2282 = vmax.xlane.f32.xlu0 %v2281
      %v2283 = vpop.xlane.xlu0 %2282
      %v2284 = vsub.f32 %v2275, %v2283
      %v2285 = vmul.f32 %v2284, 1.442695
      %v2286 = vpow.pop %v2285
      %v2287 = vsel %vm2280, %v2286, 0.0
      %2288 = vadd.xlane.f32.xlu0 %v2287
      %v2289 = vpop.xlane.xlu0 %2288
      %v2290 = vrcp.pop %v2289
      %v2291 = vmul.f32 %v2286, %v2290
      %2292 = vst.msk [vmem:[#allocation4] sm:$0x3] %vm2280, %v2291
    $region45: #{lstm_model_forward.1} parent=1 // pred_fallthru
      _
    // Predicated region
    $region46: #{lstm_model_forward.1} parent=1 // pred_check
      _
    $region47: #{lstm_model_forward.1} parent=1 // pred_check_branch
      %2294 = sbr.rel (0) target = $region49
    $region48: #{lstm_model_forward.1} parent=1 // pred_region
      %s2296 = ssub.s32 32, 32
      %2297 = vsyncadd [#allocation5], %s2296
      %s2299 = sshll.u32 [#allocation4], 4
      %s2300 = int_to_ptr.vmem [resolvable:$true] %s2299
      %2302 = dma.vmem_to_hbm [thread:$0]  %s2300, 32, %s9, [#allocation5]
    $region49: #{lstm_model_forward.1} parent=1 // pred_fallthru
      _
    // Predicated region
    $region50: #{lstm_model_forward.1} parent=1 // pred_check
      _
    $region51: #{lstm_model_forward.1} parent=1 // pred_check_branch
      %2304 = sbr.rel (0) target = $region53
    $region52: #{lstm_model_forward.1} parent=1 // pred_region
      %2305 = dma.done [#allocation5], 32
    $region53: #{lstm_model_forward.1} parent=1 // pred_fallthru
      _
    %2306 = vsyncpa [#allocation5], 1

</llo_original>
